<compile_context>
chip_gen: v7x
topology: tpu7x:2x2x1
jax: 0.10.0
libtpu: 0.0.40
codegen_flags: <defaults>
</compile_context>

<pallas_src>
import math

import numpy as np
import jax
import jax.numpy as jnp
from jax.experimental import pallas as pl
from jax.experimental.pallas import tpu as pltpu

# --------------------------- model configuration (small demo shapes) ---------------------------
NUM_SPINS = 12                                   # Kagome 12-site cluster
NUM_CHANNELS = 8
NUM_BLOCKS = 2
SUBLATTICES = 3
KERNEL_SIZE = 15
FEAT = NUM_CHANNELS * NUM_SPINS                  # 96
FEAT_PAD = ((FEAT + 127) // 128) * 128           # 128  (lane-dense hidden width; lane 96 = bias)
NS_PAD = max(8, ((NUM_SPINS + 1 + 7) // 8) * 8)  # 16   (bits + constant-one column, mult. of 8)

KAGOME_12_ADJ = [
    (0, [6, 5, 9, 10, 7, 8, 11, 0, 11, 1, 2, 3, 4, 5, 6]),
    (2, [8, 9, 10, 11, 0, 3, 4, 1, 2, 3, 6, 5, 10, 7, 8]),
    (1, [9, 10, 7, 11, 0, 4, 1, 2, 3, 4, 5, 6, 7, 8, 9]),
    (2, [10, 7, 8, 0, 11, 1, 2, 3, 4, 1, 5, 6, 8, 9, 10]),
    (1, [7, 8, 9, 0, 11, 2, 3, 4, 1, 2, 6, 5, 9, 10, 7]),
    (0, [11, 0, 4, 1, 2, 3, 6, 5, 6, 10, 7, 8, 9, 0, 11]),
    (0, [0, 11, 2, 3, 4, 1, 5, 6, 5, 8, 9, 10, 7, 11, 0]),
    (1, [4, 1, 2, 6, 5, 9, 10, 7, 8, 9, 0, 11, 2, 3, 4]),
    (2, [1, 2, 3, 5, 6, 10, 7, 8, 9, 10, 0, 11, 3, 4, 1]),
    (1, [2, 3, 4, 5, 6, 7, 8, 9, 10, 7, 11, 0, 4, 1, 2]),
    (2, [3, 4, 1, 6, 5, 8, 9, 10, 7, 8, 11, 0, 1, 2, 3]),
    (0, [5, 6, 7, 8, 9, 10, 0, 11, 0, 3, 4, 1, 2, 6, 5]),
]
SUB = np.array([s for s, _ in KAGOME_12_ADJ], dtype=np.int32)         # (NS,) sublattice per site
IDX = np.array([n for _, n in KAGOME_12_ADJ], dtype=np.int32)         # (NS, 15) gather indices
REDUCTION = [np.where(SUB == t)[0] for t in range(SUBLATTICES)]
SUB_COUNT = np.array([len(r) for r in REDUCTION], dtype=np.float32)


def _round_up(x, m):
    return (x + m - 1) // m * m


# ----------------------------------------- kernel ----------------------------------------------
def _make_kernel(num_blocks, num_spins, ns_pad):
    def kernel(x_ref, *refs):
        # refs = [w0, (aw, cw) * num_blocks, w_tail, out]
        out_ref = refs[-1]
        w0_ref = refs[0]
        blk = refs[1:1 + 2 * num_blocks]
        wt_ref = refs[1 + 2 * num_blocks]

        tb = x_ref.shape[0]

        # ---- unpack packed bits -> {0,1}; logical shift + masking of columns >= NUM_SPINS ----
        words = jnp.broadcast_to(x_ref[...], (tb, ns_pad))                       # int32
        col = jax.lax.broadcasted_iota(jnp.int32, (tb, ns_pad), 1)
        bits = jnp.bitwise_and(jax.lax.shift_right_logical(words, col), 1)
        bits = jnp.where(col < num_spins, bits, 0)       # clear any stray high bits
        bits = jnp.where(col == num_spins, 1, bits)      # constant-one column -> bias lane
        feat0 = bits.astype(jnp.float32).astype(jnp.bfloat16)                    # (tb, ns_pad)

        # ---- layer 0: folded LatticeConvolution(1->C); bias + +-1 map folded into w0 ----
        h = jnp.dot(feat0, w0_ref[...], preferred_element_type=jnp.float32)
        h = jnp.maximum(h, 0.0)                          # (tb, FEAT_PAD) f32, lane FEAT == 1.0

        # ---- residual blocks (conv -> ReLU -> conv, add identity, ReLU); biases via lane FEAT ----
        for k in range(num_blocks):
            aw_ref, cw_ref = blk[2 * k], blk[2 * k + 1]
            t = jnp.dot(h.astype(jnp.bfloat16), aw_ref[...],
                        preferred_element_type=jnp.float32)
            t = jnp.maximum(t, 0.0)                      # lane FEAT stays 1.0
            u = jnp.dot(t.astype(jnp.bfloat16), cw_ref[...],
                        preferred_element_type=jnp.float32)   # lane FEAT contribution is 0
            h = jnp.maximum(h + u, 0.0)                  # residual keeps lane FEAT == 1.0

        # ---- folded (sublattice mean + flatten + tail Linear + tail bias) ----
        out_ref[...] = jnp.dot(h.astype(jnp.bfloat16), wt_ref[...],
                               preferred_element_type=jnp.float32)

    return kernel


# ----------------------------------------- wrapper ---------------------------------------------
def kagome_forward(x_packed, params, *, tile_b=512):
    """x_packed: (B,) or (B, 1) integer packed spin configurations -> (B, 2) logits."""
    if x_packed.ndim == 2:
        x_packed = x_packed[:, 0]
    B = x_packed.shape[0]
    tb = min(_round_up(tile_b, 8), _round_up(B, 8))
    Bp = _round_up(B, tb)
    x = x_packed.astype(jnp.int32)
    if Bp != B:
        x = jnp.pad(x, (0, Bp - B))
    x = x[:, None]                                                               # (Bp, 1)

    def _resident_spec(p):
        nd = p.ndim
        return pl.BlockSpec(p.shape, lambda i, _nd=nd: (0,) * _nd)               # weights stay put

    in_specs = [pl.BlockSpec((tb, 1), lambda i: (i, 0))] + [_resident_spec(p) for p in params]
    out_spec = pl.BlockSpec((tb, 2), lambda i: (i, 0))

    out = pl.pallas_call(
        _make_kernel(NUM_BLOCKS, NUM_SPINS, NS_PAD),
        out_shape=jax.ShapeDtypeStruct((Bp, 2), jnp.float32),
        grid_spec=pltpu.PrefetchScalarGridSpec(
            num_scalar_prefetch=0,
            grid=(Bp // tb,),
            in_specs=in_specs,
            out_specs=out_spec,
        ),
        compiler_params=pltpu.CompilerParams(
            dimension_semantics=("parallel",),          # batch tiles are independent (megacore)
            vmem_limit_bytes=32 * 1024 * 1024,          # per-tile footprint ~1.3 MiB << limit
        ),
    )(x, *params)
    return out[:B]


# -------------------------------- raw parameters (PyTorch-like init) ---------------------------
def init_raw_params(key):
    n_keys = 2 + 4 * NUM_BLOCKS + 2
    kit = iter(jax.random.split(key, n_keys))

    def u(shape, bound):
        return jax.random.uniform(next(kit), shape, jnp.float32, -bound, bound)

    b0 = 1.0 / math.sqrt(1 * KERNEL_SIZE)
    conv0 = (u((SUBLATTICES, NUM_CHANNELS, 1, KERNEL_SIZE), b0),
             u((SUBLATTICES, NUM_CHANNELS), b0))
    bb = 1.0 / math.sqrt(NUM_CHANNELS * KERNEL_SIZE)
    blocks = []
    for _ in range(NUM_BLOCKS):
        blocks.append((u((SUBLATTICES, NUM_CHANNELS, NUM_CHANNELS, KERNEL_SIZE), bb),
                       u((SUBLATTICES, NUM_CHANNELS), bb),
                       u((SUBLATTICES, NUM_CHANNELS, NUM_CHANNELS, KERNEL_SIZE), bb),
                       u((SUBLATTICES, NUM_CHANNELS), bb)))
    bt = 1.0 / math.sqrt(SUBLATTICES * NUM_CHANNELS)
    tail = (u((2, SUBLATTICES * NUM_CHANNELS), bt), u((2,), bt))
    return {"conv0": conv0, "blocks": blocks, "tail": tail}


# ----------------------------------- host-side exact folding -----------------------------------
def _conv_to_dense(W, b):
    """LatticeConvolution -> dense (C_in*NS, C_out*NS) matrix + (C_out*NS,) bias (exact)."""
    W = np.asarray(W, dtype=np.float32)                                  # (3, Cout, Cin, K)
    b = np.asarray(b, dtype=np.float32)                                  # (3, Cout)
    c_out, c_in = W.shape[1], W.shape[2]
    scatter = (IDX[:, :, None] == np.arange(NUM_SPINS)[None, None, :]).astype(np.float32)
    w_site = W[SUB]                                                      # (NS, Cout, Cin, K)
    dense = np.einsum("iock,ikj->cjoi", w_site, scatter)                 # (Cin, NSin, Cout, NSout)
    dense = dense.reshape(c_in * NUM_SPINS, c_out * NUM_SPINS)
    bias = b[SUB].T.reshape(-1)                                          # feature index o*NS + i
    return dense, bias


def _tail_to_dense(w_tail):
    """Sublattice mean + flatten (c*3+t layout) + Linear(3C,2) -> one (C*NS, 2) matrix."""
    w_tail = np.asarray(w_tail, dtype=np.float32).reshape(2, NUM_CHANNELS, SUBLATTICES)
    t = np.transpose(w_tail[:, :, SUB], (1, 2, 0))                       # (C, NS, 2)
    t = t / SUB_COUNT[SUB][None, :, None]
    return t.reshape(NUM_CHANNELS * NUM_SPINS, 2)


def fold_params(raw):
    """Fold gathers, +-1 map, reduction, flatten, tail and ALL biases into padded bf16 matmuls.

    Lane FEAT (=96) of the hidden width carries a constant 1.0, so each matrix stores its bias
    in row FEAT; column FEAT of the 'a' convs regenerates the 1.0, column FEAT of the 'c' convs
    is zero so the residual add preserves it.
    """
    params = []

    w0, b0 = raw["conv0"]
    d0, v0 = _conv_to_dense(w0, b0)                                      # (NS, FEAT), (FEAT,)
    d0_bits = 2.0 * d0                                                   # spins = 2*bits - 1
    v0_bits = v0 - d0.sum(axis=0)
    m0 = np.zeros((NS_PAD, FEAT_PAD), np.float32)
    m0[:NUM_SPINS, :FEAT] = d0_bits
    m0[NUM_SPINS, :FEAT] = v0_bits                                       # bias row (constant-one bit)
    m0[NUM_SPINS, FEAT] = 1.0                                            # generates the bias lane
    params.append(jnp.asarray(m0, jnp.bfloat16))

    for wa, ba, wc, bc in raw["blocks"]:
        da, va = _conv_to_dense(wa, ba)
        dc, vc = _conv_to_dense(wc, bc)
        ma = np.zeros((FEAT_PAD, FEAT_PAD), np.float32)
        ma[:FEAT, :FEAT] = da
        ma[FEAT, :FEAT] = va
        ma[FEAT, FEAT] = 1.0                                             # keep bias lane alive
        mc = np.zeros((FEAT_PAD, FEAT_PAD), np.float32)
        mc[:FEAT, :FEAT] = dc
        mc[FEAT, :FEAT] = vc                                             # mc[FEAT, FEAT] == 0
        params.append(jnp.asarray(ma, jnp.bfloat16))
        params.append(jnp.asarray(mc, jnp.bfloat16))

    w_tail, b_tail = raw["tail"]
    mt = np.zeros((FEAT_PAD, 2), np.float32)
    mt[:FEAT, :] = _tail_to_dense(w_tail)
    mt[FEAT, :] = np.asarray(b_tail, np.float32)                         # tail bias via bias lane
    params.append(jnp.asarray(mt, jnp.bfloat16))
    return params


# --------------------------- gather-based pure-JAX reference (f32) -----------------------------
def reference_forward(x_packed, raw):
    if x_packed.ndim == 2:
        x_packed = x_packed[:, 0]
    B = x_packed.shape[0]
    shifts = jnp.arange(NUM_SPINS, dtype=jnp.int32)
    bits = jnp.bitwise_and(jnp.right_shift(x_packed.astype(jnp.int32)[:, None], shifts[None, :]), 1)
    h = (2.0 * bits - 1.0).astype(jnp.float32)[:, None, :]               # (B, 1, NS)

    def lattice_conv(x, W, b):
        patches = x[:, :, IDX]                                           # (B, Cin, NS, K)
        w_site = jnp.asarray(W)[SUB]                                     # (NS, Cout, Cin, K)
        return jnp.einsum("bcik,iock->boi", patches, w_site) + jnp.asarray(b)[SUB].T[None, :, :]

    w0, b0 = raw["conv0"]
    h = jax.nn.relu(lattice_conv(h, w0, b0))
    for wa, ba, wc, bc in raw["blocks"]:
        t = jax.nn.relu(lattice_conv(h, wa, ba))
        u = lattice_conv(t, wc, bc)
        h = jax.nn.relu(h + u)
    z = jnp.stack([h[:, :, idx].mean(axis=2) for idx in REDUCTION], axis=2)   # (B, C, 3)
    z = z.reshape(B, -1)
    w_tail, b_tail = raw["tail"]
    return z @ w_tail.T + b_tail[None, :]


# -------------------------------------------- main ---------------------------------------------
if __name__ == "__main__":
    key = jax.random.PRNGKey(0)
    key, kx = jax.random.split(key)

    batch = 1024                                                          # 2 x 512-row tiles
    x_packed = jax.random.randint(kx, (batch,), 0, 2 ** NUM_SPINS, dtype=jnp.int32)

    raw = init_raw_params(key)
    params = fold_params(raw)

    out = jax.block_until_ready(kagome_forward(x_packed, params, tile_b=512))
    assert out.shape == (batch, 2) and out.dtype == jnp.float32

    # correctness vs. the gather-based f32 reference (loose tolerance: kernel matmuls use bf16)
    ref = jax.block_until_ready(reference_forward(x_packed, raw))
    np.testing.assert_allclose(np.asarray(out), np.asarray(ref), rtol=1e-1, atol=1e-1)

    print("KERNEL_OK")
</pallas_src>

<mosaic_0001>
module attributes {stable_mosaic.version = 11 : i64} {
  func.func @kernel(%arg0: i32, %arg1: memref<512x1xi32, #tpu.memory_space<vmem>>, %arg2: memref<16x128xbf16, #tpu.memory_space<vmem>>, %arg3: memref<128x128xbf16, #tpu.memory_space<vmem>>, %arg4: memref<128x128xbf16, #tpu.memory_space<vmem>>, %arg5: memref<128x128xbf16, #tpu.memory_space<vmem>>, %arg6: memref<128x128xbf16, #tpu.memory_space<vmem>>, %arg7: memref<128x2xbf16, #tpu.memory_space<vmem>>, %arg8: memref<512x2xf32, #tpu.memory_space<vmem>>) attributes {dimension_semantics = [#tpu.dimension_semantics<parallel>], iteration_bounds = array<i64: 2>, scalar_prefetch = 0 : i64, scratch_operands = 0 : i64, tpu.core_type = #tpu.core_type<tc>, window_params = [{transform_indices = @transform_0, window_bounds = array<i64: 512, 1>}, {pipeline_mode = #tpu.pipeline_mode<synchronous>, transform_indices = @transform_1, window_bounds = array<i64: 16, 128>}, {pipeline_mode = #tpu.pipeline_mode<synchronous>, transform_indices = @transform_2, window_bounds = array<i64: 128, 128>}, {pipeline_mode = #tpu.pipeline_mode<synchronous>, transform_indices = @transform_3, window_bounds = array<i64: 128, 128>}, {pipeline_mode = #tpu.pipeline_mode<synchronous>, transform_indices = @transform_4, window_bounds = array<i64: 128, 128>}, {pipeline_mode = #tpu.pipeline_mode<synchronous>, transform_indices = @transform_5, window_bounds = array<i64: 128, 128>}, {pipeline_mode = #tpu.pipeline_mode<synchronous>, transform_indices = @transform_6, window_bounds = array<i64: 128, 2>}, {transform_indices = @transform_7, window_bounds = array<i64: 512, 2>}]} {
    %c0 = arith.constant 0 : index
    %c0_0 = arith.constant 0 : index
    %0 = vector.load %arg1[%c0, %c0_0] : memref<512x1xi32, #tpu.memory_space<vmem>>, vector<512x1xi32>
    %1 = vector.shape_cast %0 : vector<512x1xi32> to vector<512x1xi32>
    %2 = vector.broadcast %1 : vector<512x1xi32> to vector<512x16xi32>
    %3 = tpu.iota {dimensions = array<i32: 1>} : vector<512x16xi32>
    %4 = arith.shrui %2, %3 : vector<512x16xi32>
    %c1_i32 = arith.constant 1 : i32
    %5 = vector.broadcast %c1_i32 : i32 to vector<512x16xi32>
    %6 = arith.andi %4, %5 : vector<512x16xi32>
    %c12_i32 = arith.constant 12 : i32
    %7 = vector.broadcast %c12_i32 : i32 to vector<512x16xi32>
    %8 = arith.cmpi slt, %3, %7 : vector<512x16xi32>
    %c0_i32 = arith.constant 0 : i32
    %9 = vector.broadcast %c0_i32 : i32 to vector<512x16xi32>
    %10 = arith.select %8, %6, %9 : vector<512x16xi1>, vector<512x16xi32>
    %c12_i32_1 = arith.constant 12 : i32
    %11 = vector.broadcast %c12_i32_1 : i32 to vector<512x16xi32>
    %12 = arith.cmpi eq, %3, %11 : vector<512x16xi32>
    %c1_i32_2 = arith.constant 1 : i32
    %13 = vector.broadcast %c1_i32_2 : i32 to vector<512x16xi32>
    %14 = arith.select %12, %13, %10 : vector<512x16xi1>, vector<512x16xi32>
    %15 = arith.sitofp %14 : vector<512x16xi32> to vector<512x16xf32>
    %16 = arith.truncf %15 : vector<512x16xf32> to vector<512x16xbf16>
    %c0_3 = arith.constant 0 : index
    %c0_4 = arith.constant 0 : index
    %17 = vector.load %arg2[%c0_3, %c0_4] : memref<16x128xbf16, #tpu.memory_space<vmem>>, vector<16x128xbf16>
    %cst = arith.constant dense<0.000000e+00> : vector<512x128xf32>
    %18 = tpu.matmul %16, %17, %cst {dimension_numbers = #tpu.dot_dimension_numbers<[1], [0], [0], [1], [0, 0, 1, 1], [], []>} : vector<512x16xbf16>, vector<16x128xbf16>, vector<512x128xf32> -> vector<512x128xf32>
    %cst_5 = arith.constant 0.000000e+00 : f32
    %19 = vector.broadcast %cst_5 : f32 to vector<512x128xf32>
    %20 = arith.maximumf %18, %19 : vector<512x128xf32>
    %21 = arith.truncf %20 : vector<512x128xf32> to vector<512x128xbf16>
    %c0_6 = arith.constant 0 : index
    %c0_7 = arith.constant 0 : index
    %22 = vector.load %arg3[%c0_6, %c0_7] : memref<128x128xbf16, #tpu.memory_space<vmem>>, vector<128x128xbf16>
    %cst_8 = arith.constant dense<0.000000e+00> : vector<512x128xf32>
    %23 = tpu.matmul %21, %22, %cst_8 {dimension_numbers = #tpu.dot_dimension_numbers<[1], [0], [0], [1], [0, 0, 1, 1], [], []>} : vector<512x128xbf16>, vector<128x128xbf16>, vector<512x128xf32> -> vector<512x128xf32>
    %cst_9 = arith.constant 0.000000e+00 : f32
    %24 = vector.broadcast %cst_9 : f32 to vector<512x128xf32>
    %25 = arith.maximumf %23, %24 : vector<512x128xf32>
    %26 = arith.truncf %25 : vector<512x128xf32> to vector<512x128xbf16>
    %c0_10 = arith.constant 0 : index
    %c0_11 = arith.constant 0 : index
    %27 = vector.load %arg4[%c0_10, %c0_11] : memref<128x128xbf16, #tpu.memory_space<vmem>>, vector<128x128xbf16>
    %cst_12 = arith.constant dense<0.000000e+00> : vector<512x128xf32>
    %28 = tpu.matmul %26, %27, %cst_12 {dimension_numbers = #tpu.dot_dimension_numbers<[1], [0], [0], [1], [0, 0, 1, 1], [], []>} : vector<512x128xbf16>, vector<128x128xbf16>, vector<512x128xf32> -> vector<512x128xf32>
    %29 = arith.addf %20, %28 : vector<512x128xf32>
    %cst_13 = arith.constant 0.000000e+00 : f32
    %30 = vector.broadcast %cst_13 : f32 to vector<512x128xf32>
    %31 = arith.maximumf %29, %30 : vector<512x128xf32>
    %32 = arith.truncf %31 : vector<512x128xf32> to vector<512x128xbf16>
    %c0_14 = arith.constant 0 : index
    %c0_15 = arith.constant 0 : index
    %33 = vector.load %arg5[%c0_14, %c0_15] : memref<128x128xbf16, #tpu.memory_space<vmem>>, vector<128x128xbf16>
    %cst_16 = arith.constant dense<0.000000e+00> : vector<512x128xf32>
    %34 = tpu.matmul %32, %33, %cst_16 {dimension_numbers = #tpu.dot_dimension_numbers<[1], [0], [0], [1], [0, 0, 1, 1], [], []>} : vector<512x128xbf16>, vector<128x128xbf16>, vector<512x128xf32> -> vector<512x128xf32>
    %cst_17 = arith.constant 0.000000e+00 : f32
    %35 = vector.broadcast %cst_17 : f32 to vector<512x128xf32>
    %36 = arith.maximumf %34, %35 : vector<512x128xf32>
    %37 = arith.truncf %36 : vector<512x128xf32> to vector<512x128xbf16>
    %c0_18 = arith.constant 0 : index
    %c0_19 = arith.constant 0 : index
    %38 = vector.load %arg6[%c0_18, %c0_19] : memref<128x128xbf16, #tpu.memory_space<vmem>>, vector<128x128xbf16>
    %cst_20 = arith.constant dense<0.000000e+00> : vector<512x128xf32>
    %39 = tpu.matmul %37, %38, %cst_20 {dimension_numbers = #tpu.dot_dimension_numbers<[1], [0], [0], [1], [0, 0, 1, 1], [], []>} : vector<512x128xbf16>, vector<128x128xbf16>, vector<512x128xf32> -> vector<512x128xf32>
    %40 = arith.addf %31, %39 : vector<512x128xf32>
    %cst_21 = arith.constant 0.000000e+00 : f32
    %41 = vector.broadcast %cst_21 : f32 to vector<512x128xf32>
    %42 = arith.maximumf %40, %41 : vector<512x128xf32>
    %43 = arith.truncf %42 : vector<512x128xf32> to vector<512x128xbf16>
    %c0_22 = arith.constant 0 : index
    %c0_23 = arith.constant 0 : index
    %44 = vector.load %arg7[%c0_22, %c0_23] : memref<128x2xbf16, #tpu.memory_space<vmem>>, vector<128x2xbf16>
    %cst_24 = arith.constant dense<0.000000e+00> : vector<512x2xf32>
    %45 = tpu.matmul %43, %44, %cst_24 {dimension_numbers = #tpu.dot_dimension_numbers<[1], [0], [0], [1], [0, 0, 1, 1], [], []>} : vector<512x128xbf16>, vector<128x2xbf16>, vector<512x2xf32> -> vector<512x2xf32>
    %c0_25 = arith.constant 0 : index
    %c0_26 = arith.constant 0 : index
    %46 = vector.load %arg8[%c0_25, %c0_26] : memref<512x2xf32, #tpu.memory_space<vmem>>, vector<512x2xf32>
    tpu.vector_store %arg8[%c0_25, %c0_26], %45 {strides = array<i32>} : memref<512x2xf32, #tpu.memory_space<vmem>>, vector<512x2xf32>,
    return
  }
  func.func @transform_0(%arg0: i32) -> (i32, i32) {
    %c0_i32 = arith.constant 0 : i32
    %c0_i32_0 = arith.constant 0 : i32
    return %arg0, %c0_i32 : i32, i32
  }
  func.func @transform_1(%arg0: i32) -> (i32, i32) {
    %c0_i32 = arith.constant 0 : i32
    %c0_i32_0 = arith.constant 0 : i32
    %c0_i32_1 = arith.constant 0 : i32
    return %c0_i32, %c0_i32_0 : i32, i32
  }
  func.func @transform_2(%arg0: i32) -> (i32, i32) {
    %c0_i32 = arith.constant 0 : i32
    %c0_i32_0 = arith.constant 0 : i32
    %c0_i32_1 = arith.constant 0 : i32
    return %c0_i32, %c0_i32_0 : i32, i32
  }
  func.func @transform_3(%arg0: i32) -> (i32, i32) {
    %c0_i32 = arith.constant 0 : i32
    %c0_i32_0 = arith.constant 0 : i32
    %c0_i32_1 = arith.constant 0 : i32
    return %c0_i32, %c0_i32_0 : i32, i32
  }
  func.func @transform_4(%arg0: i32) -> (i32, i32) {
    %c0_i32 = arith.constant 0 : i32
    %c0_i32_0 = arith.constant 0 : i32
    %c0_i32_1 = arith.constant 0 : i32
    return %c0_i32, %c0_i32_0 : i32, i32
  }
  func.func @transform_5(%arg0: i32) -> (i32, i32) {
    %c0_i32 = arith.constant 0 : i32
    %c0_i32_0 = arith.constant 0 : i32
    %c0_i32_1 = arith.constant 0 : i32
    return %c0_i32, %c0_i32_0 : i32, i32
  }
  func.func @transform_6(%arg0: i32) -> (i32, i32) {
    %c0_i32 = arith.constant 0 : i32
    %c0_i32_0 = arith.constant 0 : i32
    %c0_i32_1 = arith.constant 0 : i32
    return %c0_i32, %c0_i32_0 : i32, i32
  }
  func.func @transform_7(%arg0: i32) -> (i32, i32) {
    %c0_i32 = arith.constant 0 : i32
    %c0_i32_0 = arith.constant 0 : i32
    return %arg0, %c0_i32 : i32, i32
  }
}

</mosaic_0001>

<llo_original>
// kernel: tpu_custom_call.1
$region0: #{tpu_custom_call.1}
  #allocation0 [shape = 'u32[]', space=smem, size = 0x4, offset = 0x4, fixed_abs, tag = 'smem constant byte address 0x4 - core index']
  #allocation1 [shape = 'u32[144,128]{1,0:T(1,128)}', space=vmem, size = 0x12000, scoped, tag = 'internal scratch']
  %s0 = inlined_call_operand.vmem [shape: s32[1024,1], index: 0, kind: input, shape index: {}]
  %s1 = inlined_call_operand.vmem [shape: bf16[16,128], index: 1, kind: input, shape index: {}]
  %s2 = inlined_call_operand.vmem [shape: bf16[128,128], index: 2, kind: input, shape index: {}]
  %s3 = inlined_call_operand.vmem [shape: bf16[128,128], index: 3, kind: input, shape index: {}]
  %s4 = inlined_call_operand.vmem [shape: bf16[128,128], index: 4, kind: input, shape index: {}]
  %s5 = inlined_call_operand.vmem [shape: bf16[128,128], index: 5, kind: input, shape index: {}]
  %s6 = inlined_call_operand.vmem [shape: bf16[128,2], index: 6, kind: input, shape index: {}]
  %s7 = inlined_call_operand.vmem [shape: f32[1024,2], index: 7, kind: output, shape index: {}]
  %s8 = sld [smem:[#allocation0]]
  $region61: #{tpu_custom_call.1} parent=0
    _
  %s10 = ssub.s32 1, %s8
  %s11 = scalar_select 0, %s10, %s8
  loop: start=0, step=1, limit=4
  $region2: #{tpu_custom_call.1} parent=0 // loop_pre_header
    _
  $region3: #{tpu_custom_call.1} parent=0 // loop_header
    %s13 = sphi 0, %s17
    %p14 = scmp.ge.s32.totalorder %s13, 4
    %s23 = sphi 0, %s25
    %s26 = sphi 0, %s23
    %s27 = sphi 0, %s26
    %s43 = sphi 0, %s27
    %s47 = sphi 0, %s47
    %s49 = sphi 0, %s47
    %s50 = sphi 0, %s49
    %s64 = sphi 0, %s50
    %s68 = sphi 0, %s68
    %s70 = sphi 0, %s68
    %s71 = sphi 0, %s70
    %s85 = sphi 0, %s71
    %s89 = sphi 0, %s89
    %s91 = sphi 0, %s89
    %s92 = sphi 0, %s91
    %s106 = sphi 0, %s92
    %s110 = sphi 0, %s110
    %s112 = sphi 0, %s110
    %s113 = sphi 0, %s112
    %s127 = sphi 0, %s113
    %s131 = sphi 0, %s131
    %s133 = sphi 0, %s131
    %s134 = sphi 0, %s133
    %s148 = sphi 0, %s134
    %s152 = sphi 0, %s152
    %s154 = sphi 0, %s152
    %s155 = sphi 0, %s154
    %s169 = sphi 0, %s155
    %s175 = sphi 0, %s177
    %s178 = sphi 0, %s175
    %s179 = sphi 0, %s178
    %s195 = sphi 0, %s179
  $region4: #{tpu_custom_call.1} parent=0 // loop_header_branch
    %16 = sbr.rel (%p14) target = $region8
  $region5: #{tpu_custom_call.1} parent=0 // loop_body
    %s18 = ssub.s32 %s13, 1
    %s19 = ssub.s32 %s13, 2
    %s20 = sadd.s32 %s13, 1
    %s21 = ssub.s32 %s13, %s20
    %p22 = scmp.eq.s32.totalorder %s21, 0
    %s24 = sadd.s32 %s23, 1
    %s25 = scalar_select %p22, %s23, %s24
    %p28 = pneg %p22
    %p29 = scmp.eq.s32.totalorder %s13, 1
    %p30 = por %p28, %p29
    %p31 = scmp.ne.s32.totalorder %s23, %s26
    %p32 = scmp.eq.s32.totalorder %s13, 0
    %p33 = por %p31, %p32
    %p34 = scmp.ne.s32.totalorder %s23, %s26
    %p35 = scmp.eq.s32.totalorder %s18, 1
    %p36 = por %p34, %p35
    %p37 = scmp.ne.s32.totalorder %s26, %s27
    %p38 = scmp.eq.s32.totalorder %s18, 0
    %p39 = por %p37, %p38
    %p40 = scmp.ne.s32.totalorder %s26, %s27
    %p41 = scmp.eq.s32.totalorder %s19, 1
    %p42 = por %p40, %p41
    %p44 = scmp.ne.s32.totalorder %s27, %s43
    %p45 = scmp.eq.s32.totalorder %s19, 0
    %p46 = por %p44, %p45
    %s48 = sadd.s32 %s47, 1
    %p51 = scmp.eq.s32.totalorder %s13, 1
    %p52 = scmp.ne.s32.totalorder %s47, %s49
    %p53 = scmp.eq.s32.totalorder %s13, 0
    %p54 = por %p52, %p53
    %p55 = scmp.ne.s32.totalorder %s47, %s49
    %p56 = scmp.eq.s32.totalorder %s18, 1
    %p57 = por %p55, %p56
    %p58 = scmp.ne.s32.totalorder %s49, %s50
    %p59 = scmp.eq.s32.totalorder %s18, 0
    %p60 = por %p58, %p59
    %p61 = scmp.ne.s32.totalorder %s49, %s50
    %p62 = scmp.eq.s32.totalorder %s19, 1
    %p63 = por %p61, %p62
    %p65 = scmp.ne.s32.totalorder %s50, %s64
    %p66 = scmp.eq.s32.totalorder %s19, 0
    %p67 = por %p65, %p66
    %s69 = sadd.s32 %s68, 1
    %p72 = scmp.eq.s32.totalorder %s13, 1
    %p73 = scmp.ne.s32.totalorder %s68, %s70
    %p74 = scmp.eq.s32.totalorder %s13, 0
    %p75 = por %p73, %p74
    %p76 = scmp.ne.s32.totalorder %s68, %s70
    %p77 = scmp.eq.s32.totalorder %s18, 1
    %p78 = por %p76, %p77
    %p79 = scmp.ne.s32.totalorder %s70, %s71
    %p80 = scmp.eq.s32.totalorder %s18, 0
    %p81 = por %p79, %p80
    %p82 = scmp.ne.s32.totalorder %s70, %s71
    %p83 = scmp.eq.s32.totalorder %s19, 1
    %p84 = por %p82, %p83
    %p86 = scmp.ne.s32.totalorder %s71, %s85
    %p87 = scmp.eq.s32.totalorder %s19, 0
    %p88 = por %p86, %p87
    %s90 = sadd.s32 %s89, 1
    %p93 = scmp.eq.s32.totalorder %s13, 1
    %p94 = scmp.ne.s32.totalorder %s89, %s91
    %p95 = scmp.eq.s32.totalorder %s13, 0
    %p96 = por %p94, %p95
    %p97 = scmp.ne.s32.totalorder %s89, %s91
    %p98 = scmp.eq.s32.totalorder %s18, 1
    %p99 = por %p97, %p98
    %p100 = scmp.ne.s32.totalorder %s91, %s92
    %p101 = scmp.eq.s32.totalorder %s18, 0
    %p102 = por %p100, %p101
    %p103 = scmp.ne.s32.totalorder %s91, %s92
    %p104 = scmp.eq.s32.totalorder %s19, 1
    %p105 = por %p103, %p104
    %p107 = scmp.ne.s32.totalorder %s92, %s106
    %p108 = scmp.eq.s32.totalorder %s19, 0
    %p109 = por %p107, %p108
    %s111 = sadd.s32 %s110, 1
    %p114 = scmp.eq.s32.totalorder %s13, 1
    %p115 = scmp.ne.s32.totalorder %s110, %s112
    %p116 = scmp.eq.s32.totalorder %s13, 0
    %p117 = por %p115, %p116
    %p118 = scmp.ne.s32.totalorder %s110, %s112
    %p119 = scmp.eq.s32.totalorder %s18, 1
    %p120 = por %p118, %p119
    %p121 = scmp.ne.s32.totalorder %s112, %s113
    %p122 = scmp.eq.s32.totalorder %s18, 0
    %p123 = por %p121, %p122
    %p124 = scmp.ne.s32.totalorder %s112, %s113
    %p125 = scmp.eq.s32.totalorder %s19, 1
    %p126 = por %p124, %p125
    %p128 = scmp.ne.s32.totalorder %s113, %s127
    %p129 = scmp.eq.s32.totalorder %s19, 0
    %p130 = por %p128, %p129
    %s132 = sadd.s32 %s131, 1
    %p135 = scmp.eq.s32.totalorder %s13, 1
    %p136 = scmp.ne.s32.totalorder %s131, %s133
    %p137 = scmp.eq.s32.totalorder %s13, 0
    %p138 = por %p136, %p137
    %p139 = scmp.ne.s32.totalorder %s131, %s133
    %p140 = scmp.eq.s32.totalorder %s18, 1
    %p141 = por %p139, %p140
    %p142 = scmp.ne.s32.totalorder %s133, %s134
    %p143 = scmp.eq.s32.totalorder %s18, 0
    %p144 = por %p142, %p143
    %p145 = scmp.ne.s32.totalorder %s133, %s134
    %p146 = scmp.eq.s32.totalorder %s19, 1
    %p147 = por %p145, %p146
    %p149 = scmp.ne.s32.totalorder %s134, %s148
    %p150 = scmp.eq.s32.totalorder %s19, 0
    %p151 = por %p149, %p150
    %s153 = sadd.s32 %s152, 1
    %p156 = scmp.eq.s32.totalorder %s13, 1
    %p157 = scmp.ne.s32.totalorder %s152, %s154
    %p158 = scmp.eq.s32.totalorder %s13, 0
    %p159 = por %p157, %p158
    %p160 = scmp.ne.s32.totalorder %s152, %s154
    %p161 = scmp.eq.s32.totalorder %s18, 1
    %p162 = por %p160, %p161
    %p163 = scmp.ne.s32.totalorder %s154, %s155
    %p164 = scmp.eq.s32.totalorder %s18, 0
    %p165 = por %p163, %p164
    %p166 = scmp.ne.s32.totalorder %s154, %s155
    %p167 = scmp.eq.s32.totalorder %s19, 1
    %p168 = por %p166, %p167
    %p170 = scmp.ne.s32.totalorder %s155, %s169
    %p171 = scmp.eq.s32.totalorder %s19, 0
    %p172 = por %p170, %p171
    %s173 = ssub.s32 %s13, %s20
    %p174 = scmp.eq.s32.totalorder %s173, 0
    %s176 = sadd.s32 %s175, 1
    %s177 = scalar_select %p174, %s175, %s176
    %p180 = pneg %p174
    %p181 = scmp.eq.s32.totalorder %s13, 1
    %p182 = por %p180, %p181
    %p183 = scmp.ne.s32.totalorder %s175, %s178
    %p184 = scmp.eq.s32.totalorder %s13, 0
    %p185 = por %p183, %p184
    %p186 = scmp.ne.s32.totalorder %s175, %s178
    %p187 = scmp.eq.s32.totalorder %s18, 1
    %p188 = por %p186, %p187
    %p189 = scmp.ne.s32.totalorder %s178, %s179
    %p190 = scmp.eq.s32.totalorder %s18, 0
    %p191 = por %p189, %p190
    %p192 = scmp.ne.s32.totalorder %s178, %s179
    %p193 = scmp.eq.s32.totalorder %s19, 1
    %p194 = por %p192, %p193
    %p196 = scmp.ne.s32.totalorder %s179, %s195
    %p197 = scmp.eq.s32.totalorder %s19, 0
    %p198 = por %p196, %p197
    %p199 = scmp.le.s32.totalorder 1, %s13
    %p200 = scmp.lt.s32.totalorder %s13, 3
    %p201 = pnand %p199, %p200
    %p202 = pneg %p201
    // Predicated region
    $region9: #{tpu_custom_call.1} parent=5 // pred_check
      _
    $region10: #{tpu_custom_call.1} parent=5 // pred_check_branch
      %204 = sbr.rel (%p201) target = $region12
    $region11: #{tpu_custom_call.1} parent=5 // pred_region
      %s205 = ssub.s32 %s13, 1
      // Predicated region
      $region13: #{tpu_custom_call.1} parent=11 // pred_check
        %p206 = pneg %p60
      $region14: #{tpu_custom_call.1} parent=11 // pred_check_branch
        %208 = sbr.rel (%p206) target = $region16
      $region15: #{tpu_custom_call.1} parent=11 // pred_region
        _
      $region16: #{tpu_custom_call.1} parent=11 // pred_fallthru
        _
      // Predicated region
      $region17: #{tpu_custom_call.1} parent=11 // pred_check
        %p209 = pneg %p81
      $region18: #{tpu_custom_call.1} parent=11 // pred_check_branch
        %211 = sbr.rel (%p209) target = $region20
      $region19: #{tpu_custom_call.1} parent=11 // pred_region
        _
      $region20: #{tpu_custom_call.1} parent=11 // pred_fallthru
        _
      // Predicated region
      $region21: #{tpu_custom_call.1} parent=11 // pred_check
        %p212 = pneg %p102
      $region22: #{tpu_custom_call.1} parent=11 // pred_check_branch
        %214 = sbr.rel (%p212) target = $region24
      $region23: #{tpu_custom_call.1} parent=11 // pred_region
        _
      $region24: #{tpu_custom_call.1} parent=11 // pred_fallthru
        _
      // Predicated region
      $region25: #{tpu_custom_call.1} parent=11 // pred_check
        %p215 = pneg %p123
      $region26: #{tpu_custom_call.1} parent=11 // pred_check_branch
        %217 = sbr.rel (%p215) target = $region28
      $region27: #{tpu_custom_call.1} parent=11 // pred_region
        _
      $region28: #{tpu_custom_call.1} parent=11 // pred_fallthru
        _
      // Predicated region
      $region29: #{tpu_custom_call.1} parent=11 // pred_check
        %p218 = pneg %p144
      $region30: #{tpu_custom_call.1} parent=11 // pred_check_branch
        %220 = sbr.rel (%p218) target = $region32
      $region31: #{tpu_custom_call.1} parent=11 // pred_region
        _
      $region32: #{tpu_custom_call.1} parent=11 // pred_fallthru
        _
      // Predicated region
      $region33: #{tpu_custom_call.1} parent=11 // pred_check
        %p221 = pneg %p165
      $region34: #{tpu_custom_call.1} parent=11 // pred_check_branch
        %223 = sbr.rel (%p221) target = $region36
      $region35: #{tpu_custom_call.1} parent=11 // pred_region
        _
      $region36: #{tpu_custom_call.1} parent=11 // pred_fallthru
        _
    $region12: #{tpu_custom_call.1} parent=5 // pred_fallthru
      _
    %p224 = scmp.lt.s32.totalorder %s13, 2
    // Predicated region
    $region37: #{tpu_custom_call.1} parent=5 // pred_check
      %p225 = pneg %p224
    $region38: #{tpu_custom_call.1} parent=5 // pred_check_branch
      %227 = sbr.rel (%p225) target = $region40
    $region39: #{tpu_custom_call.1} parent=5 // pred_region
      // Predicated region
      $region41: #{tpu_custom_call.1} parent=39 // pred_check
        %p228 = pneg %p33
      $region42: #{tpu_custom_call.1} parent=39 // pred_check_branch
        %230 = sbr.rel (%p228) target = $region44
      $region43: #{tpu_custom_call.1} parent=39 // pred_region
        %s231 = smul.u32 64, %s13
        %p232 = scmp.lt.s32.totalorder %s231, 127
        %s233 = scalar_select %p232, %s231, 127
        %s234 = smul.addr %s233, 8
        %s235 = scalar_lea.vmem %s0, %s234
        %s236 = smul.u32 64, %s13
      $region44: #{tpu_custom_call.1} parent=39 // pred_fallthru
        _
    $region40: #{tpu_custom_call.1} parent=5 // pred_fallthru
      _
    %p237 = scmp.le.s32.totalorder 1, %s13
    %p238 = scmp.lt.s32.totalorder %s13, 3
    %p239 = pnand %p237, %p238
    %p240 = pneg %p239
    // Predicated region
    $region45: #{tpu_custom_call.1} parent=5 // pred_check
      _
    $region46: #{tpu_custom_call.1} parent=5 // pred_check_branch
      %242 = sbr.rel (%p239) target = $region48
    $region47: #{tpu_custom_call.1} parent=5 // pred_region
      %s243 = ssub.s32 %s13, 1
      %s244 = smul.u32 64, %s18
      %p245 = scmp.lt.s32.totalorder %s244, 127
      %s246 = scalar_select %p245, %s244, 127
      %s247 = smul.addr %s246, 8
      %s248 = scalar_lea.vmem %s0, %s247
      %p249 = pneg %p39
      %p250 = pneg %p36
      %p251 = pneg %p60
      %p252 = pneg %p57
      %p253 = pneg %p81
      %p254 = pneg %p78
      %p255 = pneg %p102
      %p256 = pneg %p99
      %p257 = pneg %p123
      %p258 = pneg %p120
      %p259 = pneg %p144
      %p260 = pneg %p141
      %p261 = pneg %p165
      %p262 = pneg %p162
      %p263 = pneg %p191
      %p264 = pneg %p188
      %s265 = smul.u32 64, %s18
      %p266 = scmp.lt.s32.totalorder %s265, 127
      %s267 = scalar_select %p266, %s265, 127
      %s268 = smul.addr %s267, 8
      %s269 = scalar_lea.vmem %s7, %s268
      %s270 = smul.u32 64, %s18
      %p271 = scmp.lt.s32.totalorder %s270, 127
      %s272 = scalar_select %p271, %s270, 127
      %s273 = smul.addr %s272, 8
      %s274 = scalar_lea.vmem %s0, %s273
      %s275 = smul.u32 64, %s18
      %s276 = smul.u32 64, %s18
      %p277 = scmp.lt.s32.totalorder %s276, 127
      %s278 = scalar_select %p277, %s276, 127
      %s279 = smul.addr %s278, 8
      %s280 = scalar_lea.vmem %s7, %s279
      %s281 = smul.u32 64, %s18
      %v283 = vld [vmem:[%s274] sm:$0xff]
      %v284 = vld [vmem:[%s274 + $0x8] sm:$0xff]
      %v285 = vld [vmem:[%s274 + $0x10] sm:$0xff]
      %v286 = vld [vmem:[%s274 + $0x18] sm:$0xff]
      %v287 = vld [vmem:[%s274 + $0x20] sm:$0xff]
      %v288 = vld [vmem:[%s274 + $0x28] sm:$0xff]
      %v289 = vld [vmem:[%s274 + $0x30] sm:$0xff]
      %v290 = vld [vmem:[%s274 + $0x38] sm:$0xff]
      %v291 = vld [vmem:[%s274 + $0x40] sm:$0xff]
      %v292 = vld [vmem:[%s274 + $0x48] sm:$0xff]
      %v293 = vld [vmem:[%s274 + $0x50] sm:$0xff]
      %v294 = vld [vmem:[%s274 + $0x58] sm:$0xff]
      %v295 = vld [vmem:[%s274 + $0x60] sm:$0xff]
      %v296 = vld [vmem:[%s274 + $0x68] sm:$0xff]
      %v297 = vld [vmem:[%s274 + $0x70] sm:$0xff]
      %v298 = vld [vmem:[%s274 + $0x78] sm:$0xff]
      %v299 = vld [vmem:[%s274 + $0x80] sm:$0xff]
      %v300 = vld [vmem:[%s274 + $0x88] sm:$0xff]
      %v301 = vld [vmem:[%s274 + $0x90] sm:$0xff]
      %v302 = vld [vmem:[%s274 + $0x98] sm:$0xff]
      %v303 = vld [vmem:[%s274 + $0xa0] sm:$0xff]
      %v304 = vld [vmem:[%s274 + $0xa8] sm:$0xff]
      %v305 = vld [vmem:[%s274 + $0xb0] sm:$0xff]
      %v306 = vld [vmem:[%s274 + $0xb8] sm:$0xff]
      %v307 = vld [vmem:[%s274 + $0xc0] sm:$0xff]
      %v308 = vld [vmem:[%s274 + $0xc8] sm:$0xff]
      %v309 = vld [vmem:[%s274 + $0xd0] sm:$0xff]
      %v310 = vld [vmem:[%s274 + $0xd8] sm:$0xff]
      %v311 = vld [vmem:[%s274 + $0xe0] sm:$0xff]
      %v312 = vld [vmem:[%s274 + $0xe8] sm:$0xff]
      %v313 = vld [vmem:[%s274 + $0xf0] sm:$0xff]
      %v314 = vld [vmem:[%s274 + $0xf8] sm:$0xff]
      %v315 = vld [vmem:[%s274 + $0x100] sm:$0xff]
      %v316 = vld [vmem:[%s274 + $0x108] sm:$0xff]
      %v317 = vld [vmem:[%s274 + $0x110] sm:$0xff]
      %v318 = vld [vmem:[%s274 + $0x118] sm:$0xff]
      %v319 = vld [vmem:[%s274 + $0x120] sm:$0xff]
      %v320 = vld [vmem:[%s274 + $0x128] sm:$0xff]
      %v321 = vld [vmem:[%s274 + $0x130] sm:$0xff]
      %v322 = vld [vmem:[%s274 + $0x138] sm:$0xff]
      %v323 = vld [vmem:[%s274 + $0x140] sm:$0xff]
      %v324 = vld [vmem:[%s274 + $0x148] sm:$0xff]
      %v325 = vld [vmem:[%s274 + $0x150] sm:$0xff]
      %v326 = vld [vmem:[%s274 + $0x158] sm:$0xff]
      %v327 = vld [vmem:[%s274 + $0x160] sm:$0xff]
      %v328 = vld [vmem:[%s274 + $0x168] sm:$0xff]
      %v329 = vld [vmem:[%s274 + $0x170] sm:$0xff]
      %v330 = vld [vmem:[%s274 + $0x178] sm:$0xff]
      %v331 = vld [vmem:[%s274 + $0x180] sm:$0xff]
      %v332 = vld [vmem:[%s274 + $0x188] sm:$0xff]
      %v333 = vld [vmem:[%s274 + $0x190] sm:$0xff]
      %v334 = vld [vmem:[%s274 + $0x198] sm:$0xff]
      %v335 = vld [vmem:[%s274 + $0x1a0] sm:$0xff]
      %v336 = vld [vmem:[%s274 + $0x1a8] sm:$0xff]
      %v337 = vld [vmem:[%s274 + $0x1b0] sm:$0xff]
      %v338 = vld [vmem:[%s274 + $0x1b8] sm:$0xff]
      %v339 = vld [vmem:[%s274 + $0x1c0] sm:$0xff]
      %v340 = vld [vmem:[%s274 + $0x1c8] sm:$0xff]
      %v341 = vld [vmem:[%s274 + $0x1d0] sm:$0xff]
      %v342 = vld [vmem:[%s274 + $0x1d8] sm:$0xff]
      %v343 = vld [vmem:[%s274 + $0x1e0] sm:$0xff]
      %v344 = vld [vmem:[%s274 + $0x1e8] sm:$0xff]
      %v345 = vld [vmem:[%s274 + $0x1f0] sm:$0xff]
      %v346 = vld [vmem:[%s274 + $0x1f8] sm:$0xff]
      %347 = vset.pattern.permute.xlu0 0
      %348 = vperm.xlu0 %347, %v283
      %v349 = vpop.permute.xlu0 %348
      %350 = vset.pattern.permute.xlu0 0
      %351 = vperm.xlu0 %350, %v284
      %v352 = vpop.permute.xlu0 %351
      %353 = vset.pattern.permute.xlu0 0
      %354 = vperm.xlu0 %353, %v285
      %v355 = vpop.permute.xlu0 %354
      %356 = vset.pattern.permute.xlu0 0
      %357 = vperm.xlu0 %356, %v286
      %v358 = vpop.permute.xlu0 %357
      %359 = vset.pattern.permute.xlu0 0
      %360 = vperm.xlu0 %359, %v287
      %v361 = vpop.permute.xlu0 %360
      %362 = vset.pattern.permute.xlu0 0
      %363 = vperm.xlu0 %362, %v288
      %v364 = vpop.permute.xlu0 %363
      %365 = vset.pattern.permute.xlu0 0
      %366 = vperm.xlu0 %365, %v289
      %v367 = vpop.permute.xlu0 %366
      %368 = vset.pattern.permute.xlu0 0
      %369 = vperm.xlu0 %368, %v290
      %v370 = vpop.permute.xlu0 %369
      %371 = vset.pattern.permute.xlu0 0
      %372 = vperm.xlu0 %371, %v291
      %v373 = vpop.permute.xlu0 %372
      %374 = vset.pattern.permute.xlu0 0
      %375 = vperm.xlu0 %374, %v292
      %v376 = vpop.permute.xlu0 %375
      %377 = vset.pattern.permute.xlu0 0
      %378 = vperm.xlu0 %377, %v293
      %v379 = vpop.permute.xlu0 %378
      %380 = vset.pattern.permute.xlu0 0
      %381 = vperm.xlu0 %380, %v294
      %v382 = vpop.permute.xlu0 %381
      %383 = vset.pattern.permute.xlu0 0
      %384 = vperm.xlu0 %383, %v295
      %v385 = vpop.permute.xlu0 %384
      %386 = vset.pattern.permute.xlu0 0
      %387 = vperm.xlu0 %386, %v296
      %v388 = vpop.permute.xlu0 %387
      %389 = vset.pattern.permute.xlu0 0
      %390 = vperm.xlu0 %389, %v297
      %v391 = vpop.permute.xlu0 %390
      %392 = vset.pattern.permute.xlu0 0
      %393 = vperm.xlu0 %392, %v298
      %v394 = vpop.permute.xlu0 %393
      %395 = vset.pattern.permute.xlu0 0
      %396 = vperm.xlu0 %395, %v299
      %v397 = vpop.permute.xlu0 %396
      %398 = vset.pattern.permute.xlu0 0
      %399 = vperm.xlu0 %398, %v300
      %v400 = vpop.permute.xlu0 %399
      %401 = vset.pattern.permute.xlu0 0
      %402 = vperm.xlu0 %401, %v301
      %v403 = vpop.permute.xlu0 %402
      %404 = vset.pattern.permute.xlu0 0
      %405 = vperm.xlu0 %404, %v302
      %v406 = vpop.permute.xlu0 %405
      %407 = vset.pattern.permute.xlu0 0
      %408 = vperm.xlu0 %407, %v303
      %v409 = vpop.permute.xlu0 %408
      %410 = vset.pattern.permute.xlu0 0
      %411 = vperm.xlu0 %410, %v304
      %v412 = vpop.permute.xlu0 %411
      %413 = vset.pattern.permute.xlu0 0
      %414 = vperm.xlu0 %413, %v305
      %v415 = vpop.permute.xlu0 %414
      %416 = vset.pattern.permute.xlu0 0
      %417 = vperm.xlu0 %416, %v306
      %v418 = vpop.permute.xlu0 %417
      %419 = vset.pattern.permute.xlu0 0
      %420 = vperm.xlu0 %419, %v307
      %v421 = vpop.permute.xlu0 %420
      %422 = vset.pattern.permute.xlu0 0
      %423 = vperm.xlu0 %422, %v308
      %v424 = vpop.permute.xlu0 %423
      %425 = vset.pattern.permute.xlu0 0
      %426 = vperm.xlu0 %425, %v309
      %v427 = vpop.permute.xlu0 %426
      %428 = vset.pattern.permute.xlu0 0
      %429 = vperm.xlu0 %428, %v310
      %v430 = vpop.permute.xlu0 %429
      %431 = vset.pattern.permute.xlu0 0
      %432 = vperm.xlu0 %431, %v311
      %v433 = vpop.permute.xlu0 %432
      %434 = vset.pattern.permute.xlu0 0
      %435 = vperm.xlu0 %434, %v312
      %v436 = vpop.permute.xlu0 %435
      %437 = vset.pattern.permute.xlu0 0
      %438 = vperm.xlu0 %437, %v313
      %v439 = vpop.permute.xlu0 %438
      %440 = vset.pattern.permute.xlu0 0
      %441 = vperm.xlu0 %440, %v314
      %v442 = vpop.permute.xlu0 %441
      %443 = vset.pattern.permute.xlu0 0
      %444 = vperm.xlu0 %443, %v315
      %v445 = vpop.permute.xlu0 %444
      %446 = vset.pattern.permute.xlu0 0
      %447 = vperm.xlu0 %446, %v316
      %v448 = vpop.permute.xlu0 %447
      %449 = vset.pattern.permute.xlu0 0
      %450 = vperm.xlu0 %449, %v317
      %v451 = vpop.permute.xlu0 %450
      %452 = vset.pattern.permute.xlu0 0
      %453 = vperm.xlu0 %452, %v318
      %v454 = vpop.permute.xlu0 %453
      %455 = vset.pattern.permute.xlu0 0
      %456 = vperm.xlu0 %455, %v319
      %v457 = vpop.permute.xlu0 %456
      %458 = vset.pattern.permute.xlu0 0
      %459 = vperm.xlu0 %458, %v320
      %v460 = vpop.permute.xlu0 %459
      %461 = vset.pattern.permute.xlu0 0
      %462 = vperm.xlu0 %461, %v321
      %v463 = vpop.permute.xlu0 %462
      %464 = vset.pattern.permute.xlu0 0
      %465 = vperm.xlu0 %464, %v322
      %v466 = vpop.permute.xlu0 %465
      %467 = vset.pattern.permute.xlu0 0
      %468 = vperm.xlu0 %467, %v323
      %v469 = vpop.permute.xlu0 %468
      %470 = vset.pattern.permute.xlu0 0
      %471 = vperm.xlu0 %470, %v324
      %v472 = vpop.permute.xlu0 %471
      %473 = vset.pattern.permute.xlu0 0
      %474 = vperm.xlu0 %473, %v325
      %v475 = vpop.permute.xlu0 %474
      %476 = vset.pattern.permute.xlu0 0
      %477 = vperm.xlu0 %476, %v326
      %v478 = vpop.permute.xlu0 %477
      %479 = vset.pattern.permute.xlu0 0
      %480 = vperm.xlu0 %479, %v327
      %v481 = vpop.permute.xlu0 %480
      %482 = vset.pattern.permute.xlu0 0
      %483 = vperm.xlu0 %482, %v328
      %v484 = vpop.permute.xlu0 %483
      %485 = vset.pattern.permute.xlu0 0
      %486 = vperm.xlu0 %485, %v329
      %v487 = vpop.permute.xlu0 %486
      %488 = vset.pattern.permute.xlu0 0
      %489 = vperm.xlu0 %488, %v330
      %v490 = vpop.permute.xlu0 %489
      %491 = vset.pattern.permute.xlu0 0
      %492 = vperm.xlu0 %491, %v331
      %v493 = vpop.permute.xlu0 %492
      %494 = vset.pattern.permute.xlu0 0
      %495 = vperm.xlu0 %494, %v332
      %v496 = vpop.permute.xlu0 %495
      %497 = vset.pattern.permute.xlu0 0
      %498 = vperm.xlu0 %497, %v333
      %v499 = vpop.permute.xlu0 %498
      %500 = vset.pattern.permute.xlu0 0
      %501 = vperm.xlu0 %500, %v334
      %v502 = vpop.permute.xlu0 %501
      %503 = vset.pattern.permute.xlu0 0
      %504 = vperm.xlu0 %503, %v335
      %v505 = vpop.permute.xlu0 %504
      %506 = vset.pattern.permute.xlu0 0
      %507 = vperm.xlu0 %506, %v336
      %v508 = vpop.permute.xlu0 %507
      %509 = vset.pattern.permute.xlu0 0
      %510 = vperm.xlu0 %509, %v337
      %v511 = vpop.permute.xlu0 %510
      %512 = vset.pattern.permute.xlu0 0
      %513 = vperm.xlu0 %512, %v338
      %v514 = vpop.permute.xlu0 %513
      %515 = vset.pattern.permute.xlu0 0
      %516 = vperm.xlu0 %515, %v339
      %v517 = vpop.permute.xlu0 %516
      %518 = vset.pattern.permute.xlu0 0
      %519 = vperm.xlu0 %518, %v340
      %v520 = vpop.permute.xlu0 %519
      %521 = vset.pattern.permute.xlu0 0
      %522 = vperm.xlu0 %521, %v341
      %v523 = vpop.permute.xlu0 %522
      %524 = vset.pattern.permute.xlu0 0
      %525 = vperm.xlu0 %524, %v342
      %v526 = vpop.permute.xlu0 %525
      %527 = vset.pattern.permute.xlu0 0
      %528 = vperm.xlu0 %527, %v343
      %v529 = vpop.permute.xlu0 %528
      %530 = vset.pattern.permute.xlu0 0
      %531 = vperm.xlu0 %530, %v344
      %v532 = vpop.permute.xlu0 %531
      %533 = vset.pattern.permute.xlu0 0
      %534 = vperm.xlu0 %533, %v345
      %v535 = vpop.permute.xlu0 %534
      %536 = vset.pattern.permute.xlu0 0
      %537 = vperm.xlu0 %536, %v346
      %v538 = vpop.permute.xlu0 %537
      %v539 = vlaneseq
      %v540 = vand.u32 %v539, 127
      %v541 = vshrl.u32 %v349, %v540
      %v542 = vshrl.u32 %v352, %v540
      %v543 = vshrl.u32 %v355, %v540
      %v544 = vshrl.u32 %v358, %v540
      %v545 = vshrl.u32 %v361, %v540
      %v546 = vshrl.u32 %v364, %v540
      %v547 = vshrl.u32 %v367, %v540
      %v548 = vshrl.u32 %v370, %v540
      %v549 = vshrl.u32 %v373, %v540
      %v550 = vshrl.u32 %v376, %v540
      %v551 = vshrl.u32 %v379, %v540
      %v552 = vshrl.u32 %v382, %v540
      %v553 = vshrl.u32 %v385, %v540
      %v554 = vshrl.u32 %v388, %v540
      %v555 = vshrl.u32 %v391, %v540
      %v556 = vshrl.u32 %v394, %v540
      %v557 = vshrl.u32 %v397, %v540
      %v558 = vshrl.u32 %v400, %v540
      %v559 = vshrl.u32 %v403, %v540
      %v560 = vshrl.u32 %v406, %v540
      %v561 = vshrl.u32 %v409, %v540
      %v562 = vshrl.u32 %v412, %v540
      %v563 = vshrl.u32 %v415, %v540
      %v564 = vshrl.u32 %v418, %v540
      %v565 = vshrl.u32 %v421, %v540
      %v566 = vshrl.u32 %v424, %v540
      %v567 = vshrl.u32 %v427, %v540
      %v568 = vshrl.u32 %v430, %v540
      %v569 = vshrl.u32 %v433, %v540
      %v570 = vshrl.u32 %v436, %v540
      %v571 = vshrl.u32 %v439, %v540
      %v572 = vshrl.u32 %v442, %v540
      %v573 = vshrl.u32 %v445, %v540
      %v574 = vshrl.u32 %v448, %v540
      %v575 = vshrl.u32 %v451, %v540
      %v576 = vshrl.u32 %v454, %v540
      %v577 = vshrl.u32 %v457, %v540
      %v578 = vshrl.u32 %v460, %v540
      %v579 = vshrl.u32 %v463, %v540
      %v580 = vshrl.u32 %v466, %v540
      %v581 = vshrl.u32 %v469, %v540
      %v582 = vshrl.u32 %v472, %v540
      %v583 = vshrl.u32 %v475, %v540
      %v584 = vshrl.u32 %v478, %v540
      %v585 = vshrl.u32 %v481, %v540
      %v586 = vshrl.u32 %v484, %v540
      %v587 = vshrl.u32 %v487, %v540
      %v588 = vshrl.u32 %v490, %v540
      %v589 = vshrl.u32 %v493, %v540
      %v590 = vshrl.u32 %v496, %v540
      %v591 = vshrl.u32 %v499, %v540
      %v592 = vshrl.u32 %v502, %v540
      %v593 = vshrl.u32 %v505, %v540
      %v594 = vshrl.u32 %v508, %v540
      %v595 = vshrl.u32 %v511, %v540
      %v596 = vshrl.u32 %v514, %v540
      %v597 = vshrl.u32 %v517, %v540
      %v598 = vshrl.u32 %v520, %v540
      %v599 = vshrl.u32 %v523, %v540
      %v600 = vshrl.u32 %v526, %v540
      %v601 = vshrl.u32 %v529, %v540
      %v602 = vshrl.u32 %v532, %v540
      %v603 = vshrl.u32 %v535, %v540
      %v604 = vshrl.u32 %v538, %v540
      %v605 = vand.u32 %v541, 1
      %v606 = vand.u32 %v542, 1
      %v607 = vand.u32 %v543, 1
      %v608 = vand.u32 %v544, 1
      %v609 = vand.u32 %v545, 1
      %v610 = vand.u32 %v546, 1
      %v611 = vand.u32 %v547, 1
      %v612 = vand.u32 %v548, 1
      %v613 = vand.u32 %v549, 1
      %v614 = vand.u32 %v550, 1
      %v615 = vand.u32 %v551, 1
      %v616 = vand.u32 %v552, 1
      %v617 = vand.u32 %v553, 1
      %v618 = vand.u32 %v554, 1
      %v619 = vand.u32 %v555, 1
      %v620 = vand.u32 %v556, 1
      %v621 = vand.u32 %v557, 1
      %v622 = vand.u32 %v558, 1
      %v623 = vand.u32 %v559, 1
      %v624 = vand.u32 %v560, 1
      %v625 = vand.u32 %v561, 1
      %v626 = vand.u32 %v562, 1
      %v627 = vand.u32 %v563, 1
      %v628 = vand.u32 %v564, 1
      %v629 = vand.u32 %v565, 1
      %v630 = vand.u32 %v566, 1
      %v631 = vand.u32 %v567, 1
      %v632 = vand.u32 %v568, 1
      %v633 = vand.u32 %v569, 1
      %v634 = vand.u32 %v570, 1
      %v635 = vand.u32 %v571, 1
      %v636 = vand.u32 %v572, 1
      %v637 = vand.u32 %v573, 1
      %v638 = vand.u32 %v574, 1
      %v639 = vand.u32 %v575, 1
      %v640 = vand.u32 %v576, 1
      %v641 = vand.u32 %v577, 1
      %v642 = vand.u32 %v578, 1
      %v643 = vand.u32 %v579, 1
      %v644 = vand.u32 %v580, 1
      %v645 = vand.u32 %v581, 1
      %v646 = vand.u32 %v582, 1
      %v647 = vand.u32 %v583, 1
      %v648 = vand.u32 %v584, 1
      %v649 = vand.u32 %v585, 1
      %v650 = vand.u32 %v586, 1
      %v651 = vand.u32 %v587, 1
      %v652 = vand.u32 %v588, 1
      %v653 = vand.u32 %v589, 1
      %v654 = vand.u32 %v590, 1
      %v655 = vand.u32 %v591, 1
      %v656 = vand.u32 %v592, 1
      %v657 = vand.u32 %v593, 1
      %v658 = vand.u32 %v594, 1
      %v659 = vand.u32 %v595, 1
      %v660 = vand.u32 %v596, 1
      %v661 = vand.u32 %v597, 1
      %v662 = vand.u32 %v598, 1
      %v663 = vand.u32 %v599, 1
      %v664 = vand.u32 %v600, 1
      %v665 = vand.u32 %v601, 1
      %v666 = vand.u32 %v602, 1
      %v667 = vand.u32 %v603, 1
      %v668 = vand.u32 %v604, 1
      %vm669 = vcmp.lt.s32.totalorder %v540, 12
      %v670 = vsel %vm669, %v605, 0
      %v671 = vsel %vm669, %v606, 0
      %v672 = vsel %vm669, %v607, 0
      %v673 = vsel %vm669, %v608, 0
      %v674 = vsel %vm669, %v609, 0
      %v675 = vsel %vm669, %v610, 0
      %v676 = vsel %vm669, %v611, 0
      %v677 = vsel %vm669, %v612, 0
      %v678 = vsel %vm669, %v613, 0
      %v679 = vsel %vm669, %v614, 0
      %v680 = vsel %vm669, %v615, 0
      %v681 = vsel %vm669, %v616, 0
      %v682 = vsel %vm669, %v617, 0
      %v683 = vsel %vm669, %v618, 0
      %v684 = vsel %vm669, %v619, 0
      %v685 = vsel %vm669, %v620, 0
      %v686 = vsel %vm669, %v621, 0
      %v687 = vsel %vm669, %v622, 0
      %v688 = vsel %vm669, %v623, 0
      %v689 = vsel %vm669, %v624, 0
      %v690 = vsel %vm669, %v625, 0
      %v691 = vsel %vm669, %v626, 0
      %v692 = vsel %vm669, %v627, 0
      %v693 = vsel %vm669, %v628, 0
      %v694 = vsel %vm669, %v629, 0
      %v695 = vsel %vm669, %v630, 0
      %v696 = vsel %vm669, %v631, 0
      %v697 = vsel %vm669, %v632, 0
      %v698 = vsel %vm669, %v633, 0
      %v699 = vsel %vm669, %v634, 0
      %v700 = vsel %vm669, %v635, 0
      %v701 = vsel %vm669, %v636, 0
      %v702 = vsel %vm669, %v637, 0
      %v703 = vsel %vm669, %v638, 0
      %v704 = vsel %vm669, %v639, 0
      %v705 = vsel %vm669, %v640, 0
      %v706 = vsel %vm669, %v641, 0
      %v707 = vsel %vm669, %v642, 0
      %v708 = vsel %vm669, %v643, 0
      %v709 = vsel %vm669, %v644, 0
      %v710 = vsel %vm669, %v645, 0
      %v711 = vsel %vm669, %v646, 0
      %v712 = vsel %vm669, %v647, 0
      %v713 = vsel %vm669, %v648, 0
      %v714 = vsel %vm669, %v649, 0
      %v715 = vsel %vm669, %v650, 0
      %v716 = vsel %vm669, %v651, 0
      %v717 = vsel %vm669, %v652, 0
      %v718 = vsel %vm669, %v653, 0
      %v719 = vsel %vm669, %v654, 0
      %v720 = vsel %vm669, %v655, 0
      %v721 = vsel %vm669, %v656, 0
      %v722 = vsel %vm669, %v657, 0
      %v723 = vsel %vm669, %v658, 0
      %v724 = vsel %vm669, %v659, 0
      %v725 = vsel %vm669, %v660, 0
      %v726 = vsel %vm669, %v661, 0
      %v727 = vsel %vm669, %v662, 0
      %v728 = vsel %vm669, %v663, 0
      %v729 = vsel %vm669, %v664, 0
      %v730 = vsel %vm669, %v665, 0
      %v731 = vsel %vm669, %v666, 0
      %v732 = vsel %vm669, %v667, 0
      %v733 = vsel %vm669, %v668, 0
      %vm734 = vcmp.eq.s32.totalorder %v540, 12
      %v735 = vsel %vm734, 1, %v670
      %v736 = vsel %vm734, 1, %v671
      %v737 = vsel %vm734, 1, %v672
      %v738 = vsel %vm734, 1, %v673
      %v739 = vsel %vm734, 1, %v674
      %v740 = vsel %vm734, 1, %v675
      %v741 = vsel %vm734, 1, %v676
      %v742 = vsel %vm734, 1, %v677
      %v743 = vsel %vm734, 1, %v678
      %v744 = vsel %vm734, 1, %v679
      %v745 = vsel %vm734, 1, %v680
      %v746 = vsel %vm734, 1, %v681
      %v747 = vsel %vm734, 1, %v682
      %v748 = vsel %vm734, 1, %v683
      %v749 = vsel %vm734, 1, %v684
      %v750 = vsel %vm734, 1, %v685
      %v751 = vsel %vm734, 1, %v686
      %v752 = vsel %vm734, 1, %v687
      %v753 = vsel %vm734, 1, %v688
      %v754 = vsel %vm734, 1, %v689
      %v755 = vsel %vm734, 1, %v690
      %v756 = vsel %vm734, 1, %v691
      %v757 = vsel %vm734, 1, %v692
      %v758 = vsel %vm734, 1, %v693
      %v759 = vsel %vm734, 1, %v694
      %v760 = vsel %vm734, 1, %v695
      %v761 = vsel %vm734, 1, %v696
      %v762 = vsel %vm734, 1, %v697
      %v763 = vsel %vm734, 1, %v698
      %v764 = vsel %vm734, 1, %v699
      %v765 = vsel %vm734, 1, %v700
      %v766 = vsel %vm734, 1, %v701
      %v767 = vsel %vm734, 1, %v702
      %v768 = vsel %vm734, 1, %v703
      %v769 = vsel %vm734, 1, %v704
      %v770 = vsel %vm734, 1, %v705
      %v771 = vsel %vm734, 1, %v706
      %v772 = vsel %vm734, 1, %v707
      %v773 = vsel %vm734, 1, %v708
      %v774 = vsel %vm734, 1, %v709
      %v775 = vsel %vm734, 1, %v710
      %v776 = vsel %vm734, 1, %v711
      %v777 = vsel %vm734, 1, %v712
      %v778 = vsel %vm734, 1, %v713
      %v779 = vsel %vm734, 1, %v714
      %v780 = vsel %vm734, 1, %v715
      %v781 = vsel %vm734, 1, %v716
      %v782 = vsel %vm734, 1, %v717
      %v783 = vsel %vm734, 1, %v718
      %v784 = vsel %vm734, 1, %v719
      %v785 = vsel %vm734, 1, %v720
      %v786 = vsel %vm734, 1, %v721
      %v787 = vsel %vm734, 1, %v722
      %v788 = vsel %vm734, 1, %v723
      %v789 = vsel %vm734, 1, %v724
      %v790 = vsel %vm734, 1, %v725
      %v791 = vsel %vm734, 1, %v726
      %v792 = vsel %vm734, 1, %v727
      %v793 = vsel %vm734, 1, %v728
      %v794 = vsel %vm734, 1, %v729
      %v795 = vsel %vm734, 1, %v730
      %v796 = vsel %vm734, 1, %v731
      %v797 = vsel %vm734, 1, %v732
      %v798 = vsel %vm734, 1, %v733
      %v799 = vcvt.s32.f32 %v735
      %v800 = vcvt.s32.f32 %v736
      %v801 = vcvt.s32.f32 %v737
      %v802 = vcvt.s32.f32 %v738
      %v803 = vcvt.s32.f32 %v739
      %v804 = vcvt.s32.f32 %v740
      %v805 = vcvt.s32.f32 %v741
      %v806 = vcvt.s32.f32 %v742
      %v807 = vcvt.s32.f32 %v743
      %v808 = vcvt.s32.f32 %v744
      %v809 = vcvt.s32.f32 %v745
      %v810 = vcvt.s32.f32 %v746
      %v811 = vcvt.s32.f32 %v747
      %v812 = vcvt.s32.f32 %v748
      %v813 = vcvt.s32.f32 %v749
      %v814 = vcvt.s32.f32 %v750
      %v815 = vcvt.s32.f32 %v751
      %v816 = vcvt.s32.f32 %v752
      %v817 = vcvt.s32.f32 %v753
      %v818 = vcvt.s32.f32 %v754
      %v819 = vcvt.s32.f32 %v755
      %v820 = vcvt.s32.f32 %v756
      %v821 = vcvt.s32.f32 %v757
      %v822 = vcvt.s32.f32 %v758
      %v823 = vcvt.s32.f32 %v759
      %v824 = vcvt.s32.f32 %v760
      %v825 = vcvt.s32.f32 %v761
      %v826 = vcvt.s32.f32 %v762
      %v827 = vcvt.s32.f32 %v763
      %v828 = vcvt.s32.f32 %v764
      %v829 = vcvt.s32.f32 %v765
      %v830 = vcvt.s32.f32 %v766
      %v831 = vcvt.s32.f32 %v767
      %v832 = vcvt.s32.f32 %v768
      %v833 = vcvt.s32.f32 %v769
      %v834 = vcvt.s32.f32 %v770
      %v835 = vcvt.s32.f32 %v771
      %v836 = vcvt.s32.f32 %v772
      %v837 = vcvt.s32.f32 %v773
      %v838 = vcvt.s32.f32 %v774
      %v839 = vcvt.s32.f32 %v775
      %v840 = vcvt.s32.f32 %v776
      %v841 = vcvt.s32.f32 %v777
      %v842 = vcvt.s32.f32 %v778
      %v843 = vcvt.s32.f32 %v779
      %v844 = vcvt.s32.f32 %v780
      %v845 = vcvt.s32.f32 %v781
      %v846 = vcvt.s32.f32 %v782
      %v847 = vcvt.s32.f32 %v783
      %v848 = vcvt.s32.f32 %v784
      %v849 = vcvt.s32.f32 %v785
      %v850 = vcvt.s32.f32 %v786
      %v851 = vcvt.s32.f32 %v787
      %v852 = vcvt.s32.f32 %v788
      %v853 = vcvt.s32.f32 %v789
      %v854 = vcvt.s32.f32 %v790
      %v855 = vcvt.s32.f32 %v791
      %v856 = vcvt.s32.f32 %v792
      %v857 = vcvt.s32.f32 %v793
      %v858 = vcvt.s32.f32 %v794
      %v859 = vcvt.s32.f32 %v795
      %v860 = vcvt.s32.f32 %v796
      %v861 = vcvt.s32.f32 %v797
      %v862 = vcvt.s32.f32 %v798
      %v863 = vpack.c.bf16 %v800, %v799
      %v864 = vpack.c.bf16 %v802, %v801
      %v865 = vpack.c.bf16 %v804, %v803
      %v866 = vpack.c.bf16 %v806, %v805
      %v867 = vpack.c.bf16 %v808, %v807
      %v868 = vpack.c.bf16 %v810, %v809
      %v869 = vpack.c.bf16 %v812, %v811
      %v870 = vpack.c.bf16 %v814, %v813
      %v871 = vpack.c.bf16 %v816, %v815
      %v872 = vpack.c.bf16 %v818, %v817
      %v873 = vpack.c.bf16 %v820, %v819
      %v874 = vpack.c.bf16 %v822, %v821
      %v875 = vpack.c.bf16 %v824, %v823
      %v876 = vpack.c.bf16 %v826, %v825
      %v877 = vpack.c.bf16 %v828, %v827
      %v878 = vpack.c.bf16 %v830, %v829
      %v879 = vpack.c.bf16 %v832, %v831
      %v880 = vpack.c.bf16 %v834, %v833
      %v881 = vpack.c.bf16 %v836, %v835
      %v882 = vpack.c.bf16 %v838, %v837
      %v883 = vpack.c.bf16 %v840, %v839
      %v884 = vpack.c.bf16 %v842, %v841
      %v885 = vpack.c.bf16 %v844, %v843
      %v886 = vpack.c.bf16 %v846, %v845
      %v887 = vpack.c.bf16 %v848, %v847
      %v888 = vpack.c.bf16 %v850, %v849
      %v889 = vpack.c.bf16 %v852, %v851
      %v890 = vpack.c.bf16 %v854, %v853
      %v891 = vpack.c.bf16 %v856, %v855
      %v892 = vpack.c.bf16 %v858, %v857
      %v893 = vpack.c.bf16 %v860, %v859
      %v894 = vpack.c.bf16 %v862, %v861
      %v895 = vld [vmem:[%s1] sm:$0xf]
      %v896 = vld [vmem:[%s1 + $0x4] sm:$0xf]
      %v899 = vunpack.c.l.b16 %v895
      %v900 = vunpack.c.l.b16 %v896
      %v901 = vpack.c.b16 %v900, %v899
      %vm903 = vcmask 130048
      %v905 = vsel %vm903, %v863, 0
      %v908 = vsel %vm903, %v864, 0
      %v911 = vsel %vm903, %v865, 0
      %v914 = vsel %vm903, %v866, 0
      %v917 = vsel %vm903, %v867, 0
      %v920 = vsel %vm903, %v868, 0
      %v923 = vsel %vm903, %v869, 0
      %v926 = vsel %vm903, %v870, 0
      %v929 = vsel %vm903, %v871, 0
      %v932 = vsel %vm903, %v872, 0
      %v935 = vsel %vm903, %v873, 0
      %v938 = vsel %vm903, %v874, 0
      %v941 = vsel %vm903, %v875, 0
      %v944 = vsel %vm903, %v876, 0
      %v947 = vsel %vm903, %v877, 0
      %v950 = vsel %vm903, %v878, 0
      %v953 = vsel %vm903, %v879, 0
      %v956 = vsel %vm903, %v880, 0
      %v959 = vsel %vm903, %v881, 0
      %v962 = vsel %vm903, %v882, 0
      %v965 = vsel %vm903, %v883, 0
      %v968 = vsel %vm903, %v884, 0
      %v971 = vsel %vm903, %v885, 0
      %v974 = vsel %vm903, %v886, 0
      %v977 = vsel %vm903, %v887, 0
      %v980 = vsel %vm903, %v888, 0
      %v983 = vsel %vm903, %v889, 0
      %v986 = vsel %vm903, %v890, 0
      %v989 = vsel %vm903, %v891, 0
      %v992 = vsel %vm903, %v892, 0
      %v995 = vsel %vm903, %v893, 0
      %v998 = vsel %vm903, %v894, 0
      %1000 = vmatprep.subr.bf16.mxu0 0
      %1001 = vmatpush1.bf16.msra.mxu0 %v901
      %1002 = vmatprep.subr.bf16.mxu0 0
      %1003 = vmatpush1.bf16.msra.mxu0 0
      %1004 = vmatprep.subr.bf16.mxu0 0
      %1005 = vmatpush1.bf16.msra.mxu0 0
      %1006 = vmatprep.subr.bf16.mxu0 0
      %1007 = vmatpush1.bf16.msra.mxu0 0
      %1008 = vmatprep.subr.bf16.mxu0 0
      %1009 = vmatpush1.bf16.msra.mxu0 0
      %1010 = vmatprep.subr.bf16.mxu0 0
      %1011 = vmatpush1.bf16.msra.mxu0 0
      %1012 = vmatprep.subr.bf16.mxu0 0
      %1013 = vmatpush1.bf16.msra.mxu0 0
      %1014 = vmatprep.subr.bf16.mxu0 0
      %1015 = vmatpush1.bf16.msra.mxu0 0
      %1016 = vmatprep.subr.bf16.mxu0 0
      %1017 = vmatpush1.bf16.msra.mxu0 0
      %1018 = vmatprep.subr.bf16.mxu0 0
      %1019 = vmatpush1.bf16.msra.mxu0 0
      %1020 = vmatprep.subr.bf16.mxu0 0
      %1021 = vmatpush1.bf16.msra.mxu0 0
      %1022 = vmatprep.subr.bf16.mxu0 0
      %1023 = vmatpush1.bf16.msra.mxu0 0
      %1024 = vmatprep.subr.bf16.mxu0 0
      %1025 = vmatpush1.bf16.msra.mxu0 0
      %1026 = vmatprep.subr.bf16.mxu0 0
      %1027 = vmatpush1.bf16.msra.mxu0 0
      %1028 = vmatprep.subr.bf16.mxu0 0
      %1029 = vmatpush1.bf16.msra.mxu0 0
      %1030 = vmatprep.subr.bf16.mxu0 0
      %1031 = vmatpush1.bf16.msra.mxu0 0
      %1032 = vmatprep.mubr.bf16.mxu0 0
      %1033 = vmatmul.mubr.bf16.gmra.mrb[0].mxu0 %v905
      %v1034 = vpop.f32.mrb[0].mxu0
      %v1035 = vadd.f32 0.0, %v1034
      %v1036 = vpop.f32.mrb[0].mxu0
      %v1037 = vpop.f32.mrb[0].mxu0
      %v1038 = vadd.f32 0.0, %v1037
      %v1039 = vpop.f32.mrb[0].mxu0
      %1040 = vmatprep.mubr.bf16.mxu0 0
      %1041 = vmatmul.mubr.bf16.gmra.mrb[0].mxu0 %v908
      %v1042 = vpop.f32.mrb[0].mxu0
      %v1043 = vadd.f32 0.0, %v1042
      %v1044 = vpop.f32.mrb[0].mxu0
      %v1045 = vpop.f32.mrb[0].mxu0
      %v1046 = vadd.f32 0.0, %v1045
      %v1047 = vpop.f32.mrb[0].mxu0
      %1048 = vmatprep.mubr.bf16.mxu0 0
      %1049 = vmatmul.mubr.bf16.gmra.mrb[0].mxu0 %v911
      %v1050 = vpop.f32.mrb[0].mxu0
      %v1051 = vadd.f32 0.0, %v1050
      %v1052 = vpop.f32.mrb[0].mxu0
      %v1053 = vpop.f32.mrb[0].mxu0
      %v1054 = vadd.f32 0.0, %v1053
      %v1055 = vpop.f32.mrb[0].mxu0
      %1056 = vmatprep.mubr.bf16.mxu0 0
      %1057 = vmatmul.mubr.bf16.gmra.mrb[0].mxu0 %v914
      %v1058 = vpop.f32.mrb[0].mxu0
      %v1059 = vadd.f32 0.0, %v1058
      %v1060 = vpop.f32.mrb[0].mxu0
      %v1061 = vpop.f32.mrb[0].mxu0
      %v1062 = vadd.f32 0.0, %v1061
      %v1063 = vpop.f32.mrb[0].mxu0
      %1064 = vmatprep.mubr.bf16.mxu0 0
      %1065 = vmatmul.mubr.bf16.gmra.mrb[0].mxu0 %v917
      %v1066 = vpop.f32.mrb[0].mxu0
      %v1067 = vadd.f32 0.0, %v1066
      %v1068 = vpop.f32.mrb[0].mxu0
      %v1069 = vpop.f32.mrb[0].mxu0
      %v1070 = vadd.f32 0.0, %v1069
      %v1071 = vpop.f32.mrb[0].mxu0
      %1072 = vmatprep.mubr.bf16.mxu0 0
      %1073 = vmatmul.mubr.bf16.gmra.mrb[0].mxu0 %v920
      %v1074 = vpop.f32.mrb[0].mxu0
      %v1075 = vadd.f32 0.0, %v1074
      %v1076 = vpop.f32.mrb[0].mxu0
      %v1077 = vpop.f32.mrb[0].mxu0
      %v1078 = vadd.f32 0.0, %v1077
      %v1079 = vpop.f32.mrb[0].mxu0
      %1080 = vmatprep.mubr.bf16.mxu0 0
      %1081 = vmatmul.mubr.bf16.gmra.mrb[0].mxu0 %v923
      %v1082 = vpop.f32.mrb[0].mxu0
      %v1083 = vadd.f32 0.0, %v1082
      %v1084 = vpop.f32.mrb[0].mxu0
      %v1085 = vpop.f32.mrb[0].mxu0
      %v1086 = vadd.f32 0.0, %v1085
      %v1087 = vpop.f32.mrb[0].mxu0
      %1088 = vmatprep.mubr.bf16.mxu0 0
      %1089 = vmatmul.mubr.bf16.gmra.mrb[0].mxu0 %v926
      %v1090 = vpop.f32.mrb[0].mxu0
      %v1091 = vadd.f32 0.0, %v1090
      %v1092 = vpop.f32.mrb[0].mxu0
      %v1093 = vpop.f32.mrb[0].mxu0
      %v1094 = vadd.f32 0.0, %v1093
      %v1095 = vpop.f32.mrb[0].mxu0
      %1096 = vmatprep.mubr.bf16.mxu0 0
      %1097 = vmatmul.mubr.bf16.gmra.mrb[0].mxu0 %v929
      %v1098 = vpop.f32.mrb[0].mxu0
      %v1099 = vadd.f32 0.0, %v1098
      %v1100 = vpop.f32.mrb[0].mxu0
      %v1101 = vpop.f32.mrb[0].mxu0
      %v1102 = vadd.f32 0.0, %v1101
      %v1103 = vpop.f32.mrb[0].mxu0
      %1104 = vmatprep.mubr.bf16.mxu0 0
      %1105 = vmatmul.mubr.bf16.gmra.mrb[0].mxu0 %v932
      %v1106 = vpop.f32.mrb[0].mxu0
      %v1107 = vadd.f32 0.0, %v1106
      %v1108 = vpop.f32.mrb[0].mxu0
      %v1109 = vpop.f32.mrb[0].mxu0
      %v1110 = vadd.f32 0.0, %v1109
      %v1111 = vpop.f32.mrb[0].mxu0
      %1112 = vmatprep.mubr.bf16.mxu0 0
      %1113 = vmatmul.mubr.bf16.gmra.mrb[0].mxu0 %v935
      %v1114 = vpop.f32.mrb[0].mxu0
      %v1115 = vadd.f32 0.0, %v1114
      %v1116 = vpop.f32.mrb[0].mxu0
      %v1117 = vpop.f32.mrb[0].mxu0
      %v1118 = vadd.f32 0.0, %v1117
      %v1119 = vpop.f32.mrb[0].mxu0
      %1120 = vmatprep.mubr.bf16.mxu0 0
      %1121 = vmatmul.mubr.bf16.gmra.mrb[0].mxu0 %v938
      %v1122 = vpop.f32.mrb[0].mxu0
      %v1123 = vadd.f32 0.0, %v1122
      %v1124 = vpop.f32.mrb[0].mxu0
      %v1125 = vpop.f32.mrb[0].mxu0
      %v1126 = vadd.f32 0.0, %v1125
      %v1127 = vpop.f32.mrb[0].mxu0
      %1128 = vmatprep.mubr.bf16.mxu0 0
      %1129 = vmatmul.mubr.bf16.gmra.mrb[0].mxu0 %v941
      %v1130 = vpop.f32.mrb[0].mxu0
      %v1131 = vadd.f32 0.0, %v1130
      %v1132 = vpop.f32.mrb[0].mxu0
      %v1133 = vpop.f32.mrb[0].mxu0
      %v1134 = vadd.f32 0.0, %v1133
      %v1135 = vpop.f32.mrb[0].mxu0
      %1136 = vmatprep.mubr.bf16.mxu0 0
      %1137 = vmatmul.mubr.bf16.gmra.mrb[0].mxu0 %v944
      %v1138 = vpop.f32.mrb[0].mxu0
      %v1139 = vadd.f32 0.0, %v1138
      %v1140 = vpop.f32.mrb[0].mxu0
      %v1141 = vpop.f32.mrb[0].mxu0
      %v1142 = vadd.f32 0.0, %v1141
      %v1143 = vpop.f32.mrb[0].mxu0
      %1144 = vmatprep.mubr.bf16.mxu0 0
      %1145 = vmatmul.mubr.bf16.gmra.mrb[0].mxu0 %v947
      %v1146 = vpop.f32.mrb[0].mxu0
      %v1147 = vadd.f32 0.0, %v1146
      %v1148 = vpop.f32.mrb[0].mxu0
      %v1149 = vpop.f32.mrb[0].mxu0
      %v1150 = vadd.f32 0.0, %v1149
      %v1151 = vpop.f32.mrb[0].mxu0
      %1152 = vmatprep.mubr.bf16.mxu0 0
      %1153 = vmatmul.mubr.bf16.gmra.mrb[0].mxu0 %v950
      %v1154 = vpop.f32.mrb[0].mxu0
      %v1155 = vadd.f32 0.0, %v1154
      %v1156 = vpop.f32.mrb[0].mxu0
      %v1157 = vpop.f32.mrb[0].mxu0
      %v1158 = vadd.f32 0.0, %v1157
      %v1159 = vpop.f32.mrb[0].mxu0
      %1160 = vmatprep.mubr.bf16.mxu0 0
      %1161 = vmatmul.mubr.bf16.gmra.mrb[0].mxu0 %v953
      %v1162 = vpop.f32.mrb[0].mxu0
      %v1163 = vadd.f32 0.0, %v1162
      %v1164 = vpop.f32.mrb[0].mxu0
      %v1165 = vpop.f32.mrb[0].mxu0
      %v1166 = vadd.f32 0.0, %v1165
      %v1167 = vpop.f32.mrb[0].mxu0
      %1168 = vmatprep.mubr.bf16.mxu0 0
      %1169 = vmatmul.mubr.bf16.gmra.mrb[0].mxu0 %v956
      %v1170 = vpop.f32.mrb[0].mxu0
      %v1171 = vadd.f32 0.0, %v1170
      %v1172 = vpop.f32.mrb[0].mxu0
      %v1173 = vpop.f32.mrb[0].mxu0
      %v1174 = vadd.f32 0.0, %v1173
      %v1175 = vpop.f32.mrb[0].mxu0
      %1176 = vmatprep.mubr.bf16.mxu0 0
      %1177 = vmatmul.mubr.bf16.gmra.mrb[0].mxu0 %v959
      %v1178 = vpop.f32.mrb[0].mxu0
      %v1179 = vadd.f32 0.0, %v1178
      %v1180 = vpop.f32.mrb[0].mxu0
      %v1181 = vpop.f32.mrb[0].mxu0
      %v1182 = vadd.f32 0.0, %v1181
      %v1183 = vpop.f32.mrb[0].mxu0
      %1184 = vmatprep.mubr.bf16.mxu0 0
      %1185 = vmatmul.mubr.bf16.gmra.mrb[0].mxu0 %v962
      %v1186 = vpop.f32.mrb[0].mxu0
      %v1187 = vadd.f32 0.0, %v1186
      %v1188 = vpop.f32.mrb[0].mxu0
      %v1189 = vpop.f32.mrb[0].mxu0
      %v1190 = vadd.f32 0.0, %v1189
      %v1191 = vpop.f32.mrb[0].mxu0
      %1192 = vmatprep.mubr.bf16.mxu0 0
      %1193 = vmatmul.mubr.bf16.gmra.mrb[0].mxu0 %v965
      %v1194 = vpop.f32.mrb[0].mxu0
      %v1195 = vadd.f32 0.0, %v1194
      %v1196 = vpop.f32.mrb[0].mxu0
      %v1197 = vpop.f32.mrb[0].mxu0
      %v1198 = vadd.f32 0.0, %v1197
      %v1199 = vpop.f32.mrb[0].mxu0
      %1200 = vmatprep.mubr.bf16.mxu0 0
      %1201 = vmatmul.mubr.bf16.gmra.mrb[0].mxu0 %v968
      %v1202 = vpop.f32.mrb[0].mxu0
      %v1203 = vadd.f32 0.0, %v1202
      %v1204 = vpop.f32.mrb[0].mxu0
      %v1205 = vpop.f32.mrb[0].mxu0
      %v1206 = vadd.f32 0.0, %v1205
      %v1207 = vpop.f32.mrb[0].mxu0
      %1208 = vmatprep.mubr.bf16.mxu0 0
      %1209 = vmatmul.mubr.bf16.gmra.mrb[0].mxu0 %v971
      %v1210 = vpop.f32.mrb[0].mxu0
      %v1211 = vadd.f32 0.0, %v1210
      %v1212 = vpop.f32.mrb[0].mxu0
      %v1213 = vpop.f32.mrb[0].mxu0
      %v1214 = vadd.f32 0.0, %v1213
      %v1215 = vpop.f32.mrb[0].mxu0
      %1216 = vmatprep.mubr.bf16.mxu0 0
      %1217 = vmatmul.mubr.bf16.gmra.mrb[0].mxu0 %v974
      %v1218 = vpop.f32.mrb[0].mxu0
      %v1219 = vadd.f32 0.0, %v1218
      %v1220 = vpop.f32.mrb[0].mxu0
      %v1221 = vpop.f32.mrb[0].mxu0
      %v1222 = vadd.f32 0.0, %v1221
      %v1223 = vpop.f32.mrb[0].mxu0
      %1224 = vmatprep.mubr.bf16.mxu0 0
      %1225 = vmatmul.mubr.bf16.gmra.mrb[0].mxu0 %v977
      %v1226 = vpop.f32.mrb[0].mxu0
      %v1227 = vadd.f32 0.0, %v1226
      %v1228 = vpop.f32.mrb[0].mxu0
      %v1229 = vpop.f32.mrb[0].mxu0
      %v1230 = vadd.f32 0.0, %v1229
      %v1231 = vpop.f32.mrb[0].mxu0
      %1232 = vmatprep.mubr.bf16.mxu0 0
      %1233 = vmatmul.mubr.bf16.gmra.mrb[0].mxu0 %v980
      %v1234 = vpop.f32.mrb[0].mxu0
      %v1235 = vadd.f32 0.0, %v1234
      %v1236 = vpop.f32.mrb[0].mxu0
      %v1237 = vpop.f32.mrb[0].mxu0
      %v1238 = vadd.f32 0.0, %v1237
      %v1239 = vpop.f32.mrb[0].mxu0
      %1240 = vmatprep.mubr.bf16.mxu0 0
      %1241 = vmatmul.mubr.bf16.gmra.mrb[0].mxu0 %v983
      %v1242 = vpop.f32.mrb[0].mxu0
      %v1243 = vadd.f32 0.0, %v1242
      %v1244 = vpop.f32.mrb[0].mxu0
      %v1245 = vpop.f32.mrb[0].mxu0
      %v1246 = vadd.f32 0.0, %v1245
      %v1247 = vpop.f32.mrb[0].mxu0
      %1248 = vmatprep.mubr.bf16.mxu0 0
      %1249 = vmatmul.mubr.bf16.gmra.mrb[0].mxu0 %v986
      %v1250 = vpop.f32.mrb[0].mxu0
      %v1251 = vadd.f32 0.0, %v1250
      %v1252 = vpop.f32.mrb[0].mxu0
      %v1253 = vpop.f32.mrb[0].mxu0
      %v1254 = vadd.f32 0.0, %v1253
      %v1255 = vpop.f32.mrb[0].mxu0
      %1256 = vmatprep.mubr.bf16.mxu0 0
      %1257 = vmatmul.mubr.bf16.gmra.mrb[0].mxu0 %v989
      %v1258 = vpop.f32.mrb[0].mxu0
      %v1259 = vadd.f32 0.0, %v1258
      %v1260 = vpop.f32.mrb[0].mxu0
      %v1261 = vpop.f32.mrb[0].mxu0
      %v1262 = vadd.f32 0.0, %v1261
      %v1263 = vpop.f32.mrb[0].mxu0
      %1264 = vmatprep.mubr.bf16.mxu0 0
      %1265 = vmatmul.mubr.bf16.gmra.mrb[0].mxu0 %v992
      %v1266 = vpop.f32.mrb[0].mxu0
      %v1267 = vadd.f32 0.0, %v1266
      %v1268 = vpop.f32.mrb[0].mxu0
      %v1269 = vpop.f32.mrb[0].mxu0
      %v1270 = vadd.f32 0.0, %v1269
      %v1271 = vpop.f32.mrb[0].mxu0
      %1272 = vmatprep.mubr.bf16.mxu0 0
      %1273 = vmatmul.mubr.bf16.gmra.mrb[0].mxu0 %v995
      %v1274 = vpop.f32.mrb[0].mxu0
      %v1275 = vadd.f32 0.0, %v1274
      %v1276 = vpop.f32.mrb[0].mxu0
      %v1277 = vpop.f32.mrb[0].mxu0
      %v1278 = vadd.f32 0.0, %v1277
      %v1279 = vpop.f32.mrb[0].mxu0
      %1280 = vmatprep.mubr.bf16.mxu0 0
      %1281 = vmatmul.mubr.bf16.gmra.mrb[0].mxu0 %v998
      %v1282 = vpop.f32.mrb[0].mxu0
      %v1283 = vadd.f32 0.0, %v1282
      %v1284 = vpop.f32.mrb[0].mxu0
      %v1285 = vpop.f32.mrb[0].mxu0
      %v1286 = vadd.f32 0.0, %v1285
      %v1287 = vpop.f32.mrb[0].mxu0
      %1288 = vdwg.mxu0
      %v1289 = vmax.f32 %v1035, 0.0
      %v1290 = vmax.f32 %v1038, 0.0
      %v1291 = vmax.f32 %v1043, 0.0
      %v1292 = vmax.f32 %v1046, 0.0
      %v1293 = vmax.f32 %v1051, 0.0
      %v1294 = vmax.f32 %v1054, 0.0
      %v1295 = vmax.f32 %v1059, 0.0
      %v1296 = vmax.f32 %v1062, 0.0
      %v1297 = vmax.f32 %v1067, 0.0
      %v1298 = vmax.f32 %v1070, 0.0
      %v1299 = vmax.f32 %v1075, 0.0
      %v1300 = vmax.f32 %v1078, 0.0
      %v1301 = vmax.f32 %v1083, 0.0
      %v1302 = vmax.f32 %v1086, 0.0
      %v1303 = vmax.f32 %v1091, 0.0
      %v1304 = vmax.f32 %v1094, 0.0
      %v1305 = vmax.f32 %v1099, 0.0
      %v1306 = vmax.f32 %v1102, 0.0
      %v1307 = vmax.f32 %v1107, 0.0
      %v1308 = vmax.f32 %v1110, 0.0
      %v1309 = vmax.f32 %v1115, 0.0
      %v1310 = vmax.f32 %v1118, 0.0
      %v1311 = vmax.f32 %v1123, 0.0
      %v1312 = vmax.f32 %v1126, 0.0
      %v1313 = vmax.f32 %v1131, 0.0
      %v1314 = vmax.f32 %v1134, 0.0
      %v1315 = vmax.f32 %v1139, 0.0
      %v1316 = vmax.f32 %v1142, 0.0
      %v1317 = vmax.f32 %v1147, 0.0
      %v1318 = vmax.f32 %v1150, 0.0
      %v1319 = vmax.f32 %v1155, 0.0
      %v1320 = vmax.f32 %v1158, 0.0
      %v1321 = vmax.f32 %v1163, 0.0
      %v1322 = vmax.f32 %v1166, 0.0
      %v1323 = vmax.f32 %v1171, 0.0
      %v1324 = vmax.f32 %v1174, 0.0
      %v1325 = vmax.f32 %v1179, 0.0
      %v1326 = vmax.f32 %v1182, 0.0
      %v1327 = vmax.f32 %v1187, 0.0
      %v1328 = vmax.f32 %v1190, 0.0
      %v1329 = vmax.f32 %v1195, 0.0
      %v1330 = vmax.f32 %v1198, 0.0
      %v1331 = vmax.f32 %v1203, 0.0
      %v1332 = vmax.f32 %v1206, 0.0
      %v1333 = vmax.f32 %v1211, 0.0
      %v1334 = vmax.f32 %v1214, 0.0
      %v1335 = vmax.f32 %v1219, 0.0
      %v1336 = vmax.f32 %v1222, 0.0
      %v1337 = vmax.f32 %v1227, 0.0
      %v1338 = vmax.f32 %v1230, 0.0
      %v1339 = vmax.f32 %v1235, 0.0
      %v1340 = vmax.f32 %v1238, 0.0
      %v1341 = vmax.f32 %v1243, 0.0
      %v1342 = vmax.f32 %v1246, 0.0
      %v1343 = vmax.f32 %v1251, 0.0
      %v1344 = vmax.f32 %v1254, 0.0
      %v1345 = vmax.f32 %v1259, 0.0
      %v1346 = vmax.f32 %v1262, 0.0
      %v1347 = vmax.f32 %v1267, 0.0
      %v1348 = vmax.f32 %v1270, 0.0
      %v1349 = vmax.f32 %v1275, 0.0
      %v1350 = vmax.f32 %v1278, 0.0
      %v1351 = vmax.f32 %v1283, 0.0
      %v1352 = vmax.f32 %v1286, 0.0
      %v1353 = vpack.c.bf16 %v1290, %v1289
      %v1354 = vpack.c.bf16 %v1292, %v1291
      %v1355 = vpack.c.bf16 %v1294, %v1293
      %v1356 = vpack.c.bf16 %v1296, %v1295
      %v1357 = vpack.c.bf16 %v1298, %v1297
      %v1358 = vpack.c.bf16 %v1300, %v1299
      %v1359 = vpack.c.bf16 %v1302, %v1301
      %v1360 = vpack.c.bf16 %v1304, %v1303
      %v1361 = vpack.c.bf16 %v1306, %v1305
      %v1362 = vpack.c.bf16 %v1308, %v1307
      %v1363 = vpack.c.bf16 %v1310, %v1309
      %v1364 = vpack.c.bf16 %v1312, %v1311
      %v1365 = vpack.c.bf16 %v1314, %v1313
      %v1366 = vpack.c.bf16 %v1316, %v1315
      %v1367 = vpack.c.bf16 %v1318, %v1317
      %v1368 = vpack.c.bf16 %v1320, %v1319
      %v1369 = vpack.c.bf16 %v1322, %v1321
      %v1370 = vpack.c.bf16 %v1324, %v1323
      %v1371 = vpack.c.bf16 %v1326, %v1325
      %v1372 = vpack.c.bf16 %v1328, %v1327
      %v1373 = vpack.c.bf16 %v1330, %v1329
      %v1374 = vpack.c.bf16 %v1332, %v1331
      %v1375 = vpack.c.bf16 %v1334, %v1333
      %v1376 = vpack.c.bf16 %v1336, %v1335
      %v1377 = vpack.c.bf16 %v1338, %v1337
      %v1378 = vpack.c.bf16 %v1340, %v1339
      %v1379 = vpack.c.bf16 %v1342, %v1341
      %v1380 = vpack.c.bf16 %v1344, %v1343
      %v1381 = vpack.c.bf16 %v1346, %v1345
      %v1382 = vpack.c.bf16 %v1348, %v1347
      %v1383 = vpack.c.bf16 %v1350, %v1349
      %v1384 = vpack.c.bf16 %v1352, %v1351
      %v1385 = vld [vmem:[%s2] sm:$0xf]
      %v1386 = vld [vmem:[%s2 + $0x4] sm:$0xf]
      %v1387 = vld [vmem:[%s2 + $0x8] sm:$0xf]
      %v1388 = vld [vmem:[%s2 + $0xc] sm:$0xf]
      %v1389 = vld [vmem:[%s2 + $0x10] sm:$0xf]
      %v1390 = vld [vmem:[%s2 + $0x14] sm:$0xf]
      %v1391 = vld [vmem:[%s2 + $0x18] sm:$0xf]
      %v1392 = vld [vmem:[%s2 + $0x1c] sm:$0xf]
      %v1393 = vld [vmem:[%s2 + $0x20] sm:$0xf]
      %v1394 = vld [vmem:[%s2 + $0x24] sm:$0xf]
      %v1395 = vld [vmem:[%s2 + $0x28] sm:$0xf]
      %v1396 = vld [vmem:[%s2 + $0x2c] sm:$0xf]
      %v1397 = vld [vmem:[%s2 + $0x30] sm:$0xf]
      %v1398 = vld [vmem:[%s2 + $0x34] sm:$0xf]
      %v1399 = vld [vmem:[%s2 + $0x38] sm:$0xf]
      %v1400 = vld [vmem:[%s2 + $0x3c] sm:$0xf]
      %v1417 = vunpack.c.l.b16 %v1385
      %v1418 = vunpack.c.l.b16 %v1386
      %v1419 = vunpack.c.l.b16 %v1387
      %v1420 = vunpack.c.l.b16 %v1388
      %v1421 = vunpack.c.l.b16 %v1389
      %v1422 = vunpack.c.l.b16 %v1390
      %v1423 = vunpack.c.l.b16 %v1391
      %v1424 = vunpack.c.l.b16 %v1392
      %v1425 = vunpack.c.l.b16 %v1393
      %v1426 = vunpack.c.l.b16 %v1394
      %v1427 = vunpack.c.l.b16 %v1395
      %v1428 = vunpack.c.l.b16 %v1396
      %v1429 = vunpack.c.l.b16 %v1397
      %v1430 = vunpack.c.l.b16 %v1398
      %v1431 = vunpack.c.l.b16 %v1399
      %v1432 = vunpack.c.l.b16 %v1400
      %v1433 = vpack.c.b16 %v1418, %v1417
      %v1434 = vpack.c.b16 %v1420, %v1419
      %v1435 = vpack.c.b16 %v1422, %v1421
      %v1436 = vpack.c.b16 %v1424, %v1423
      %v1437 = vpack.c.b16 %v1426, %v1425
      %v1438 = vpack.c.b16 %v1428, %v1427
      %v1439 = vpack.c.b16 %v1430, %v1429
      %v1440 = vpack.c.b16 %v1432, %v1431
      %1449 = vmatprep.subr.bf16.mxu0 0
      %1450 = vmatpush1.bf16.msra.mxu0 %v1433
      %1451 = vmatprep.subr.bf16.mxu0 0
      %1452 = vmatpush1.bf16.msra.mxu0 %v1434
      %1453 = vmatprep.subr.bf16.mxu0 0
      %1454 = vmatpush1.bf16.msra.mxu0 %v1435
      %1455 = vmatprep.subr.bf16.mxu0 0
      %1456 = vmatpush1.bf16.msra.mxu0 %v1436
      %1457 = vmatprep.subr.bf16.mxu0 0
      %1458 = vmatpush1.bf16.msra.mxu0 %v1437
      %1459 = vmatprep.subr.bf16.mxu0 0
      %1460 = vmatpush1.bf16.msra.mxu0 %v1438
      %1461 = vmatprep.subr.bf16.mxu0 0
      %1462 = vmatpush1.bf16.msra.mxu0 %v1439
      %1463 = vmatprep.subr.bf16.mxu0 0
      %1464 = vmatpush1.bf16.msra.mxu0 %v1440
      %1465 = vmatprep.subr.bf16.mxu0 0
      %1466 = vmatpush1.bf16.msra.mxu0 0
      %1467 = vmatprep.subr.bf16.mxu0 0
      %1468 = vmatpush1.bf16.msra.mxu0 0
      %1469 = vmatprep.subr.bf16.mxu0 0
      %1470 = vmatpush1.bf16.msra.mxu0 0
      %1471 = vmatprep.subr.bf16.mxu0 0
      %1472 = vmatpush1.bf16.msra.mxu0 0
      %1473 = vmatprep.subr.bf16.mxu0 0
      %1474 = vmatpush1.bf16.msra.mxu0 0
      %1475 = vmatprep.subr.bf16.mxu0 0
      %1476 = vmatpush1.bf16.msra.mxu0 0
      %1477 = vmatprep.subr.bf16.mxu0 0
      %1478 = vmatpush1.bf16.msra.mxu0 0
      %1479 = vmatprep.subr.bf16.mxu0 0
      %1480 = vmatpush1.bf16.msra.mxu0 0
      %1481 = vmatprep.mubr.bf16.mxu0 0
      %1482 = vmatmul.mubr.bf16.gmra.mrb[0].mxu0 %v1353
      %v1483 = vpop.f32.mrb[0].mxu0
      %v1484 = vadd.f32 0.0, %v1483
      %v1485 = vpop.f32.mrb[0].mxu0
      %v1486 = vpop.f32.mrb[0].mxu0
      %v1487 = vadd.f32 0.0, %v1486
      %v1488 = vpop.f32.mrb[0].mxu0
      %1489 = vmatprep.mubr.bf16.mxu0 0
      %1490 = vmatmul.mubr.bf16.gmra.mrb[0].mxu0 %v1354
      %v1491 = vpop.f32.mrb[0].mxu0
      %v1492 = vadd.f32 0.0, %v1491
      %v1493 = vpop.f32.mrb[0].mxu0
      %v1494 = vpop.f32.mrb[0].mxu0
      %v1495 = vadd.f32 0.0, %v1494
      %v1496 = vpop.f32.mrb[0].mxu0
      %1497 = vmatprep.mubr.bf16.mxu0 0
      %1498 = vmatmul.mubr.bf16.gmra.mrb[0].mxu0 %v1355
      %v1499 = vpop.f32.mrb[0].mxu0
      %v1500 = vadd.f32 0.0, %v1499
      %v1501 = vpop.f32.mrb[0].mxu0
      %v1502 = vpop.f32.mrb[0].mxu0
      %v1503 = vadd.f32 0.0, %v1502
      %v1504 = vpop.f32.mrb[0].mxu0
      %1505 = vmatprep.mubr.bf16.mxu0 0
      %1506 = vmatmul.mubr.bf16.gmra.mrb[0].mxu0 %v1356
      %v1507 = vpop.f32.mrb[0].mxu0
      %v1508 = vadd.f32 0.0, %v1507
      %v1509 = vpop.f32.mrb[0].mxu0
      %v1510 = vpop.f32.mrb[0].mxu0
      %v1511 = vadd.f32 0.0, %v1510
      %v1512 = vpop.f32.mrb[0].mxu0
      %1513 = vmatprep.mubr.bf16.mxu0 0
      %1514 = vmatmul.mubr.bf16.gmra.mrb[0].mxu0 %v1357
      %v1515 = vpop.f32.mrb[0].mxu0
      %v1516 = vadd.f32 0.0, %v1515
      %v1517 = vpop.f32.mrb[0].mxu0
      %v1518 = vpop.f32.mrb[0].mxu0
      %v1519 = vadd.f32 0.0, %v1518
      %v1520 = vpop.f32.mrb[0].mxu0
      %1521 = vmatprep.mubr.bf16.mxu0 0
      %1522 = vmatmul.mubr.bf16.gmra.mrb[0].mxu0 %v1358
      %v1523 = vpop.f32.mrb[0].mxu0
      %v1524 = vadd.f32 0.0, %v1523
      %v1525 = vpop.f32.mrb[0].mxu0
      %v1526 = vpop.f32.mrb[0].mxu0
      %v1527 = vadd.f32 0.0, %v1526
      %v1528 = vpop.f32.mrb[0].mxu0
      %1529 = vmatprep.mubr.bf16.mxu0 0
      %1530 = vmatmul.mubr.bf16.gmra.mrb[0].mxu0 %v1359
      %v1531 = vpop.f32.mrb[0].mxu0
      %v1532 = vadd.f32 0.0, %v1531
      %v1533 = vpop.f32.mrb[0].mxu0
      %v1534 = vpop.f32.mrb[0].mxu0
      %v1535 = vadd.f32 0.0, %v1534
      %v1536 = vpop.f32.mrb[0].mxu0
      %1537 = vmatprep.mubr.bf16.mxu0 0
      %1538 = vmatmul.mubr.bf16.gmra.mrb[0].mxu0 %v1360
      %v1539 = vpop.f32.mrb[0].mxu0
      %v1540 = vadd.f32 0.0, %v1539
      %v1541 = vpop.f32.mrb[0].mxu0
      %v1542 = vpop.f32.mrb[0].mxu0
      %v1543 = vadd.f32 0.0, %v1542
      %v1544 = vpop.f32.mrb[0].mxu0
      %1545 = vmatprep.mubr.bf16.mxu0 0
      %1546 = vmatmul.mubr.bf16.gmra.mrb[0].mxu0 %v1361
      %v1547 = vpop.f32.mrb[0].mxu0
      %v1548 = vadd.f32 0.0, %v1547
      %v1549 = vpop.f32.mrb[0].mxu0
      %v1550 = vpop.f32.mrb[0].mxu0
      %v1551 = vadd.f32 0.0, %v1550
      %v1552 = vpop.f32.mrb[0].mxu0
      %1553 = vmatprep.mubr.bf16.mxu0 0
      %1554 = vmatmul.mubr.bf16.gmra.mrb[0].mxu0 %v1362
      %v1555 = vpop.f32.mrb[0].mxu0
      %v1556 = vadd.f32 0.0, %v1555
      %v1557 = vpop.f32.mrb[0].mxu0
      %v1558 = vpop.f32.mrb[0].mxu0
      %v1559 = vadd.f32 0.0, %v1558
      %v1560 = vpop.f32.mrb[0].mxu0
      %1561 = vmatprep.mubr.bf16.mxu0 0
      %1562 = vmatmul.mubr.bf16.gmra.mrb[0].mxu0 %v1363
      %v1563 = vpop.f32.mrb[0].mxu0
      %v1564 = vadd.f32 0.0, %v1563
      %v1565 = vpop.f32.mrb[0].mxu0
      %v1566 = vpop.f32.mrb[0].mxu0
      %v1567 = vadd.f32 0.0, %v1566
      %v1568 = vpop.f32.mrb[0].mxu0
      %1569 = vmatprep.mubr.bf16.mxu0 0
      %1570 = vmatmul.mubr.bf16.gmra.mrb[0].mxu0 %v1364
      %v1571 = vpop.f32.mrb[0].mxu0
      %v1572 = vadd.f32 0.0, %v1571
      %v1573 = vpop.f32.mrb[0].mxu0
      %v1574 = vpop.f32.mrb[0].mxu0
      %v1575 = vadd.f32 0.0, %v1574
      %v1576 = vpop.f32.mrb[0].mxu0
      %1577 = vmatprep.mubr.bf16.mxu0 0
      %1578 = vmatmul.mubr.bf16.gmra.mrb[0].mxu0 %v1365
      %v1579 = vpop.f32.mrb[0].mxu0
      %v1580 = vadd.f32 0.0, %v1579
      %v1581 = vpop.f32.mrb[0].mxu0
      %v1582 = vpop.f32.mrb[0].mxu0
      %v1583 = vadd.f32 0.0, %v1582
      %v1584 = vpop.f32.mrb[0].mxu0
      %1585 = vmatprep.mubr.bf16.mxu0 0
      %1586 = vmatmul.mubr.bf16.gmra.mrb[0].mxu0 %v1366
      %v1587 = vpop.f32.mrb[0].mxu0
      %v1588 = vadd.f32 0.0, %v1587
      %v1589 = vpop.f32.mrb[0].mxu0
      %v1590 = vpop.f32.mrb[0].mxu0
      %v1591 = vadd.f32 0.0, %v1590
      %v1592 = vpop.f32.mrb[0].mxu0
      %1593 = vmatprep.mubr.bf16.mxu0 0
      %1594 = vmatmul.mubr.bf16.gmra.mrb[0].mxu0 %v1367
      %v1595 = vpop.f32.mrb[0].mxu0
      %v1596 = vadd.f32 0.0, %v1595
      %v1597 = vpop.f32.mrb[0].mxu0
      %v1598 = vpop.f32.mrb[0].mxu0
      %v1599 = vadd.f32 0.0, %v1598
      %v1600 = vpop.f32.mrb[0].mxu0
      %1601 = vmatprep.mubr.bf16.mxu0 0
      %1602 = vmatmul.mubr.bf16.gmra.mrb[0].mxu0 %v1368
      %v1603 = vpop.f32.mrb[0].mxu0
      %v1604 = vadd.f32 0.0, %v1603
      %v1605 = vpop.f32.mrb[0].mxu0
      %v1606 = vpop.f32.mrb[0].mxu0
      %v1607 = vadd.f32 0.0, %v1606
      %v1608 = vpop.f32.mrb[0].mxu0
      %1609 = vmatprep.mubr.bf16.mxu0 0
      %1610 = vmatmul.mubr.bf16.gmra.mrb[0].mxu0 %v1369
      %v1611 = vpop.f32.mrb[0].mxu0
      %v1612 = vadd.f32 0.0, %v1611
      %v1613 = vpop.f32.mrb[0].mxu0
      %v1614 = vpop.f32.mrb[0].mxu0
      %v1615 = vadd.f32 0.0, %v1614
      %v1616 = vpop.f32.mrb[0].mxu0
      %1617 = vmatprep.mubr.bf16.mxu0 0
      %1618 = vmatmul.mubr.bf16.gmra.mrb[0].mxu0 %v1370
      %v1619 = vpop.f32.mrb[0].mxu0
      %v1620 = vadd.f32 0.0, %v1619
      %v1621 = vpop.f32.mrb[0].mxu0
      %v1622 = vpop.f32.mrb[0].mxu0
      %v1623 = vadd.f32 0.0, %v1622
      %v1624 = vpop.f32.mrb[0].mxu0
      %1625 = vmatprep.mubr.bf16.mxu0 0
      %1626 = vmatmul.mubr.bf16.gmra.mrb[0].mxu0 %v1371
      %v1627 = vpop.f32.mrb[0].mxu0
      %v1628 = vadd.f32 0.0, %v1627
      %v1629 = vpop.f32.mrb[0].mxu0
      %v1630 = vpop.f32.mrb[0].mxu0
      %v1631 = vadd.f32 0.0, %v1630
      %v1632 = vpop.f32.mrb[0].mxu0
      %1633 = vmatprep.mubr.bf16.mxu0 0
      %1634 = vmatmul.mubr.bf16.gmra.mrb[0].mxu0 %v1372
      %v1635 = vpop.f32.mrb[0].mxu0
      %v1636 = vadd.f32 0.0, %v1635
      %v1637 = vpop.f32.mrb[0].mxu0
      %v1638 = vpop.f32.mrb[0].mxu0
      %v1639 = vadd.f32 0.0, %v1638
      %v1640 = vpop.f32.mrb[0].mxu0
      %1641 = vmatprep.mubr.bf16.mxu0 0
      %1642 = vmatmul.mubr.bf16.gmra.mrb[0].mxu0 %v1373
      %v1643 = vpop.f32.mrb[0].mxu0
      %v1644 = vadd.f32 0.0, %v1643
      %v1645 = vpop.f32.mrb[0].mxu0
      %v1646 = vpop.f32.mrb[0].mxu0
      %v1647 = vadd.f32 0.0, %v1646
      %v1648 = vpop.f32.mrb[0].mxu0
      %1649 = vmatprep.mubr.bf16.mxu0 0
      %1650 = vmatmul.mubr.bf16.gmra.mrb[0].mxu0 %v1374
      %v1651 = vpop.f32.mrb[0].mxu0
      %v1652 = vadd.f32 0.0, %v1651
      %v1653 = vpop.f32.mrb[0].mxu0
      %v1654 = vpop.f32.mrb[0].mxu0
      %v1655 = vadd.f32 0.0, %v1654
      %v1656 = vpop.f32.mrb[0].mxu0
      %1657 = vmatprep.mubr.bf16.mxu0 0
      %1658 = vmatmul.mubr.bf16.gmra.mrb[0].mxu0 %v1375
      %v1659 = vpop.f32.mrb[0].mxu0
      %v1660 = vadd.f32 0.0, %v1659
      %v1661 = vpop.f32.mrb[0].mxu0
      %v1662 = vpop.f32.mrb[0].mxu0
      %v1663 = vadd.f32 0.0, %v1662
      %v1664 = vpop.f32.mrb[0].mxu0
      %1665 = vmatprep.mubr.bf16.mxu0 0
      %1666 = vmatmul.mubr.bf16.gmra.mrb[0].mxu0 %v1376
      %v1667 = vpop.f32.mrb[0].mxu0
      %v1668 = vadd.f32 0.0, %v1667
      %v1669 = vpop.f32.mrb[0].mxu0
      %v1670 = vpop.f32.mrb[0].mxu0
      %v1671 = vadd.f32 0.0, %v1670
      %v1672 = vpop.f32.mrb[0].mxu0
      %1673 = vmatprep.mubr.bf16.mxu0 0
      %1674 = vmatmul.mubr.bf16.gmra.mrb[0].mxu0 %v1377
      %v1675 = vpop.f32.mrb[0].mxu0
      %v1676 = vadd.f32 0.0, %v1675
      %v1677 = vpop.f32.mrb[0].mxu0
      %v1678 = vpop.f32.mrb[0].mxu0
      %v1679 = vadd.f32 0.0, %v1678
      %v1680 = vpop.f32.mrb[0].mxu0
      %1681 = vmatprep.mubr.bf16.mxu0 0
      %1682 = vmatmul.mubr.bf16.gmra.mrb[0].mxu0 %v1378
      %v1683 = vpop.f32.mrb[0].mxu0
      %v1684 = vadd.f32 0.0, %v1683
      %v1685 = vpop.f32.mrb[0].mxu0
      %v1686 = vpop.f32.mrb[0].mxu0
      %v1687 = vadd.f32 0.0, %v1686
      %v1688 = vpop.f32.mrb[0].mxu0
      %1689 = vmatprep.mubr.bf16.mxu0 0
      %1690 = vmatmul.mubr.bf16.gmra.mrb[0].mxu0 %v1379
      %v1691 = vpop.f32.mrb[0].mxu0
      %v1692 = vadd.f32 0.0, %v1691
      %v1693 = vpop.f32.mrb[0].mxu0
      %v1694 = vpop.f32.mrb[0].mxu0
      %v1695 = vadd.f32 0.0, %v1694
      %v1696 = vpop.f32.mrb[0].mxu0
      %1697 = vmatprep.mubr.bf16.mxu0 0
      %1698 = vmatmul.mubr.bf16.gmra.mrb[0].mxu0 %v1380
      %v1699 = vpop.f32.mrb[0].mxu0
      %v1700 = vadd.f32 0.0, %v1699
      %v1701 = vpop.f32.mrb[0].mxu0
      %v1702 = vpop.f32.mrb[0].mxu0
      %v1703 = vadd.f32 0.0, %v1702
      %v1704 = vpop.f32.mrb[0].mxu0
      %1705 = vmatprep.mubr.bf16.mxu0 0
      %1706 = vmatmul.mubr.bf16.gmra.mrb[0].mxu0 %v1381
      %v1707 = vpop.f32.mrb[0].mxu0
      %v1708 = vadd.f32 0.0, %v1707
      %v1709 = vpop.f32.mrb[0].mxu0
      %v1710 = vpop.f32.mrb[0].mxu0
      %v1711 = vadd.f32 0.0, %v1710
      %v1712 = vpop.f32.mrb[0].mxu0
      %1713 = vmatprep.mubr.bf16.mxu0 0
      %1714 = vmatmul.mubr.bf16.gmra.mrb[0].mxu0 %v1382
      %v1715 = vpop.f32.mrb[0].mxu0
      %v1716 = vadd.f32 0.0, %v1715
      %v1717 = vpop.f32.mrb[0].mxu0
      %v1718 = vpop.f32.mrb[0].mxu0
      %v1719 = vadd.f32 0.0, %v1718
      %v1720 = vpop.f32.mrb[0].mxu0
      %1721 = vmatprep.mubr.bf16.mxu0 0
      %1722 = vmatmul.mubr.bf16.gmra.mrb[0].mxu0 %v1383
      %v1723 = vpop.f32.mrb[0].mxu0
      %v1724 = vadd.f32 0.0, %v1723
      %v1725 = vpop.f32.mrb[0].mxu0
      %v1726 = vpop.f32.mrb[0].mxu0
      %v1727 = vadd.f32 0.0, %v1726
      %v1728 = vpop.f32.mrb[0].mxu0
      %1729 = vmatprep.mubr.bf16.mxu0 0
      %1730 = vmatmul.mubr.bf16.gmra.mrb[0].mxu0 %v1384
      %v1731 = vpop.f32.mrb[0].mxu0
      %v1732 = vadd.f32 0.0, %v1731
      %v1733 = vpop.f32.mrb[0].mxu0
      %v1734 = vpop.f32.mrb[0].mxu0
      %v1735 = vadd.f32 0.0, %v1734
      %v1736 = vpop.f32.mrb[0].mxu0
      %1737 = vdwg.mxu0
      %v1738 = vmax.f32 %v1484, 0.0
      %v1739 = vmax.f32 %v1487, 0.0
      %v1740 = vmax.f32 %v1492, 0.0
      %v1741 = vmax.f32 %v1495, 0.0
      %v1742 = vmax.f32 %v1500, 0.0
      %v1743 = vmax.f32 %v1503, 0.0
      %v1744 = vmax.f32 %v1508, 0.0
      %v1745 = vmax.f32 %v1511, 0.0
      %v1746 = vmax.f32 %v1516, 0.0
      %v1747 = vmax.f32 %v1519, 0.0
      %v1748 = vmax.f32 %v1524, 0.0
      %v1749 = vmax.f32 %v1527, 0.0
      %v1750 = vmax.f32 %v1532, 0.0
      %v1751 = vmax.f32 %v1535, 0.0
      %v1752 = vmax.f32 %v1540, 0.0
      %v1753 = vmax.f32 %v1543, 0.0
      %v1754 = vmax.f32 %v1548, 0.0
      %v1755 = vmax.f32 %v1551, 0.0
      %v1756 = vmax.f32 %v1556, 0.0
      %v1757 = vmax.f32 %v1559, 0.0
      %v1758 = vmax.f32 %v1564, 0.0
      %v1759 = vmax.f32 %v1567, 0.0
      %v1760 = vmax.f32 %v1572, 0.0
      %v1761 = vmax.f32 %v1575, 0.0
      %v1762 = vmax.f32 %v1580, 0.0
      %v1763 = vmax.f32 %v1583, 0.0
      %v1764 = vmax.f32 %v1588, 0.0
      %v1765 = vmax.f32 %v1591, 0.0
      %v1766 = vmax.f32 %v1596, 0.0
      %v1767 = vmax.f32 %v1599, 0.0
      %v1768 = vmax.f32 %v1604, 0.0
      %v1769 = vmax.f32 %v1607, 0.0
      %v1770 = vmax.f32 %v1612, 0.0
      %v1771 = vmax.f32 %v1615, 0.0
      %v1772 = vmax.f32 %v1620, 0.0
      %v1773 = vmax.f32 %v1623, 0.0
      %v1774 = vmax.f32 %v1628, 0.0
      %v1775 = vmax.f32 %v1631, 0.0
      %v1776 = vmax.f32 %v1636, 0.0
      %v1777 = vmax.f32 %v1639, 0.0
      %v1778 = vmax.f32 %v1644, 0.0
      %v1779 = vmax.f32 %v1647, 0.0
      %v1780 = vmax.f32 %v1652, 0.0
      %v1781 = vmax.f32 %v1655, 0.0
      %v1782 = vmax.f32 %v1660, 0.0
      %v1783 = vmax.f32 %v1663, 0.0
      %v1784 = vmax.f32 %v1668, 0.0
      %v1785 = vmax.f32 %v1671, 0.0
      %v1786 = vmax.f32 %v1676, 0.0
      %v1787 = vmax.f32 %v1679, 0.0
      %v1788 = vmax.f32 %v1684, 0.0
      %v1789 = vmax.f32 %v1687, 0.0
      %v1790 = vmax.f32 %v1692, 0.0
      %v1791 = vmax.f32 %v1695, 0.0
      %v1792 = vmax.f32 %v1700, 0.0
      %v1793 = vmax.f32 %v1703, 0.0
      %v1794 = vmax.f32 %v1708, 0.0
      %v1795 = vmax.f32 %v1711, 0.0
      %v1796 = vmax.f32 %v1716, 0.0
      %v1797 = vmax.f32 %v1719, 0.0
      %v1798 = vmax.f32 %v1724, 0.0
      %v1799 = vmax.f32 %v1727, 0.0
      %v1800 = vmax.f32 %v1732, 0.0
      %v1801 = vmax.f32 %v1735, 0.0
      %v1802 = vpack.c.bf16 %v1739, %v1738
      %v1803 = vpack.c.bf16 %v1741, %v1740
      %v1804 = vpack.c.bf16 %v1743, %v1742
      %v1805 = vpack.c.bf16 %v1745, %v1744
      %v1806 = vpack.c.bf16 %v1747, %v1746
      %v1807 = vpack.c.bf16 %v1749, %v1748
      %v1808 = vpack.c.bf16 %v1751, %v1750
      %v1809 = vpack.c.bf16 %v1753, %v1752
      %v1810 = vpack.c.bf16 %v1755, %v1754
      %v1811 = vpack.c.bf16 %v1757, %v1756
      %v1812 = vpack.c.bf16 %v1759, %v1758
      %v1813 = vpack.c.bf16 %v1761, %v1760
      %v1814 = vpack.c.bf16 %v1763, %v1762
      %v1815 = vpack.c.bf16 %v1765, %v1764
      %v1816 = vpack.c.bf16 %v1767, %v1766
      %v1817 = vpack.c.bf16 %v1769, %v1768
      %v1818 = vpack.c.bf16 %v1771, %v1770
      %v1819 = vpack.c.bf16 %v1773, %v1772
      %v1820 = vpack.c.bf16 %v1775, %v1774
      %v1821 = vpack.c.bf16 %v1777, %v1776
      %v1822 = vpack.c.bf16 %v1779, %v1778
      %v1823 = vpack.c.bf16 %v1781, %v1780
      %v1824 = vpack.c.bf16 %v1783, %v1782
      %v1825 = vpack.c.bf16 %v1785, %v1784
      %v1826 = vpack.c.bf16 %v1787, %v1786
      %v1827 = vpack.c.bf16 %v1789, %v1788
      %v1828 = vpack.c.bf16 %v1791, %v1790
      %v1829 = vpack.c.bf16 %v1793, %v1792
      %v1830 = vpack.c.bf16 %v1795, %v1794
      %v1831 = vpack.c.bf16 %v1797, %v1796
      %v1832 = vpack.c.bf16 %v1799, %v1798
      %v1833 = vpack.c.bf16 %v1801, %v1800
      %v1834 = vld [vmem:[%s3] sm:$0xf]
      %v1835 = vld [vmem:[%s3 + $0x4] sm:$0xf]
      %v1836 = vld [vmem:[%s3 + $0x8] sm:$0xf]
      %v1837 = vld [vmem:[%s3 + $0xc] sm:$0xf]
      %v1838 = vld [vmem:[%s3 + $0x10] sm:$0xf]
      %v1839 = vld [vmem:[%s3 + $0x14] sm:$0xf]
      %v1840 = vld [vmem:[%s3 + $0x18] sm:$0xf]
      %v1841 = vld [vmem:[%s3 + $0x1c] sm:$0xf]
      %v1842 = vld [vmem:[%s3 + $0x20] sm:$0xf]
      %v1843 = vld [vmem:[%s3 + $0x24] sm:$0xf]
      %v1844 = vld [vmem:[%s3 + $0x28] sm:$0xf]
      %v1845 = vld [vmem:[%s3 + $0x2c] sm:$0xf]
      %v1846 = vld [vmem:[%s3 + $0x30] sm:$0xf]
      %v1847 = vld [vmem:[%s3 + $0x34] sm:$0xf]
      %v1848 = vld [vmem:[%s3 + $0x38] sm:$0xf]
      %v1849 = vld [vmem:[%s3 + $0x3c] sm:$0xf]
      %v1866 = vunpack.c.l.b16 %v1834
      %v1867 = vunpack.c.l.b16 %v1835
      %v1868 = vunpack.c.l.b16 %v1836
      %v1869 = vunpack.c.l.b16 %v1837
      %v1870 = vunpack.c.l.b16 %v1838
      %v1871 = vunpack.c.l.b16 %v1839
      %v1872 = vunpack.c.l.b16 %v1840
      %v1873 = vunpack.c.l.b16 %v1841
      %v1874 = vunpack.c.l.b16 %v1842
      %v1875 = vunpack.c.l.b16 %v1843
      %v1876 = vunpack.c.l.b16 %v1844
      %v1877 = vunpack.c.l.b16 %v1845
      %v1878 = vunpack.c.l.b16 %v1846
      %v1879 = vunpack.c.l.b16 %v1847
      %v1880 = vunpack.c.l.b16 %v1848
      %v1881 = vunpack.c.l.b16 %v1849
      %v1882 = vpack.c.b16 %v1867, %v1866
      %v1883 = vpack.c.b16 %v1869, %v1868
      %v1884 = vpack.c.b16 %v1871, %v1870
      %v1885 = vpack.c.b16 %v1873, %v1872
      %v1886 = vpack.c.b16 %v1875, %v1874
      %v1887 = vpack.c.b16 %v1877, %v1876
      %v1888 = vpack.c.b16 %v1879, %v1878
      %v1889 = vpack.c.b16 %v1881, %v1880
      %1898 = vmatprep.subr.bf16.mxu0 0
      %1899 = vmatpush1.bf16.msra.mxu0 %v1882
      %1900 = vmatprep.subr.bf16.mxu0 0
      %1901 = vmatpush1.bf16.msra.mxu0 %v1883
      %1902 = vmatprep.subr.bf16.mxu0 0
      %1903 = vmatpush1.bf16.msra.mxu0 %v1884
      %1904 = vmatprep.subr.bf16.mxu0 0
      %1905 = vmatpush1.bf16.msra.mxu0 %v1885
      %1906 = vmatprep.subr.bf16.mxu0 0
      %1907 = vmatpush1.bf16.msra.mxu0 %v1886
      %1908 = vmatprep.subr.bf16.mxu0 0
      %1909 = vmatpush1.bf16.msra.mxu0 %v1887
      %1910 = vmatprep.subr.bf16.mxu0 0
      %1911 = vmatpush1.bf16.msra.mxu0 %v1888
      %1912 = vmatprep.subr.bf16.mxu0 0
      %1913 = vmatpush1.bf16.msra.mxu0 %v1889
      %1914 = vmatprep.subr.bf16.mxu0 0
      %1915 = vmatpush1.bf16.msra.mxu0 0
      %1916 = vmatprep.subr.bf16.mxu0 0
      %1917 = vmatpush1.bf16.msra.mxu0 0
      %1918 = vmatprep.subr.bf16.mxu0 0
      %1919 = vmatpush1.bf16.msra.mxu0 0
      %1920 = vmatprep.subr.bf16.mxu0 0
      %1921 = vmatpush1.bf16.msra.mxu0 0
      %1922 = vmatprep.subr.bf16.mxu0 0
      %1923 = vmatpush1.bf16.msra.mxu0 0
      %1924 = vmatprep.subr.bf16.mxu0 0
      %1925 = vmatpush1.bf16.msra.mxu0 0
      %1926 = vmatprep.subr.bf16.mxu0 0
      %1927 = vmatpush1.bf16.msra.mxu0 0
      %1928 = vmatprep.subr.bf16.mxu0 0
      %1929 = vmatpush1.bf16.msra.mxu0 0
      %1930 = vmatprep.mubr.bf16.mxu0 0
      %1931 = vmatmul.mubr.bf16.gmra.mrb[0].mxu0 %v1802
      %v1932 = vpop.f32.mrb[0].mxu0
      %v1933 = vadd.f32 0.0, %v1932
      %v1934 = vpop.f32.mrb[0].mxu0
      %v1935 = vpop.f32.mrb[0].mxu0
      %v1936 = vadd.f32 0.0, %v1935
      %v1937 = vpop.f32.mrb[0].mxu0
      %1938 = vmatprep.mubr.bf16.mxu0 0
      %1939 = vmatmul.mubr.bf16.gmra.mrb[0].mxu0 %v1803
      %v1940 = vpop.f32.mrb[0].mxu0
      %v1941 = vadd.f32 0.0, %v1940
      %v1942 = vpop.f32.mrb[0].mxu0
      %v1943 = vpop.f32.mrb[0].mxu0
      %v1944 = vadd.f32 0.0, %v1943
      %v1945 = vpop.f32.mrb[0].mxu0
      %1946 = vmatprep.mubr.bf16.mxu0 0
      %1947 = vmatmul.mubr.bf16.gmra.mrb[0].mxu0 %v1804
      %v1948 = vpop.f32.mrb[0].mxu0
      %v1949 = vadd.f32 0.0, %v1948
      %v1950 = vpop.f32.mrb[0].mxu0
      %v1951 = vpop.f32.mrb[0].mxu0
      %v1952 = vadd.f32 0.0, %v1951
      %v1953 = vpop.f32.mrb[0].mxu0
      %1954 = vmatprep.mubr.bf16.mxu0 0
      %1955 = vmatmul.mubr.bf16.gmra.mrb[0].mxu0 %v1805
      %v1956 = vpop.f32.mrb[0].mxu0
      %v1957 = vadd.f32 0.0, %v1956
      %v1958 = vpop.f32.mrb[0].mxu0
      %v1959 = vpop.f32.mrb[0].mxu0
      %v1960 = vadd.f32 0.0, %v1959
      %v1961 = vpop.f32.mrb[0].mxu0
      %1962 = vmatprep.mubr.bf16.mxu0 0
      %1963 = vmatmul.mubr.bf16.gmra.mrb[0].mxu0 %v1806
      %v1964 = vpop.f32.mrb[0].mxu0
      %v1965 = vadd.f32 0.0, %v1964
      %v1966 = vpop.f32.mrb[0].mxu0
      %v1967 = vpop.f32.mrb[0].mxu0
      %v1968 = vadd.f32 0.0, %v1967
      %v1969 = vpop.f32.mrb[0].mxu0
      %1970 = vmatprep.mubr.bf16.mxu0 0
      %1971 = vmatmul.mubr.bf16.gmra.mrb[0].mxu0 %v1807
      %v1972 = vpop.f32.mrb[0].mxu0
      %v1973 = vadd.f32 0.0, %v1972
      %v1974 = vpop.f32.mrb[0].mxu0
      %v1975 = vpop.f32.mrb[0].mxu0
      %v1976 = vadd.f32 0.0, %v1975
      %v1977 = vpop.f32.mrb[0].mxu0
      %1978 = vmatprep.mubr.bf16.mxu0 0
      %1979 = vmatmul.mubr.bf16.gmra.mrb[0].mxu0 %v1808
      %v1980 = vpop.f32.mrb[0].mxu0
      %v1981 = vadd.f32 0.0, %v1980
      %v1982 = vpop.f32.mrb[0].mxu0
      %v1983 = vpop.f32.mrb[0].mxu0
      %v1984 = vadd.f32 0.0, %v1983
      %v1985 = vpop.f32.mrb[0].mxu0
      %1986 = vmatprep.mubr.bf16.mxu0 0
      %1987 = vmatmul.mubr.bf16.gmra.mrb[0].mxu0 %v1809
      %v1988 = vpop.f32.mrb[0].mxu0
      %v1989 = vadd.f32 0.0, %v1988
      %v1990 = vpop.f32.mrb[0].mxu0
      %v1991 = vpop.f32.mrb[0].mxu0
      %v1992 = vadd.f32 0.0, %v1991
      %v1993 = vpop.f32.mrb[0].mxu0
      %1994 = vmatprep.mubr.bf16.mxu0 0
      %1995 = vmatmul.mubr.bf16.gmra.mrb[0].mxu0 %v1810
      %v1996 = vpop.f32.mrb[0].mxu0
      %v1997 = vadd.f32 0.0, %v1996
      %v1998 = vpop.f32.mrb[0].mxu0
      %v1999 = vpop.f32.mrb[0].mxu0
      %v2000 = vadd.f32 0.0, %v1999
      %v2001 = vpop.f32.mrb[0].mxu0
      %2002 = vmatprep.mubr.bf16.mxu0 0
      %2003 = vmatmul.mubr.bf16.gmra.mrb[0].mxu0 %v1811
      %v2004 = vpop.f32.mrb[0].mxu0
      %v2005 = vadd.f32 0.0, %v2004
      %v2006 = vpop.f32.mrb[0].mxu0
      %v2007 = vpop.f32.mrb[0].mxu0
      %v2008 = vadd.f32 0.0, %v2007
      %v2009 = vpop.f32.mrb[0].mxu0
      %2010 = vmatprep.mubr.bf16.mxu0 0
      %2011 = vmatmul.mubr.bf16.gmra.mrb[0].mxu0 %v1812
      %v2012 = vpop.f32.mrb[0].mxu0
      %v2013 = vadd.f32 0.0, %v2012
      %v2014 = vpop.f32.mrb[0].mxu0
      %v2015 = vpop.f32.mrb[0].mxu0
      %v2016 = vadd.f32 0.0, %v2015
      %v2017 = vpop.f32.mrb[0].mxu0
      %2018 = vmatprep.mubr.bf16.mxu0 0
      %2019 = vmatmul.mubr.bf16.gmra.mrb[0].mxu0 %v1813
      %v2020 = vpop.f32.mrb[0].mxu0
      %v2021 = vadd.f32 0.0, %v2020
      %v2022 = vpop.f32.mrb[0].mxu0
      %v2023 = vpop.f32.mrb[0].mxu0
      %v2024 = vadd.f32 0.0, %v2023
      %v2025 = vpop.f32.mrb[0].mxu0
      %2026 = vmatprep.mubr.bf16.mxu0 0
      %2027 = vmatmul.mubr.bf16.gmra.mrb[0].mxu0 %v1814
      %v2028 = vpop.f32.mrb[0].mxu0
      %v2029 = vadd.f32 0.0, %v2028
      %v2030 = vpop.f32.mrb[0].mxu0
      %v2031 = vpop.f32.mrb[0].mxu0
      %v2032 = vadd.f32 0.0, %v2031
      %v2033 = vpop.f32.mrb[0].mxu0
      %2034 = vmatprep.mubr.bf16.mxu0 0
      %2035 = vmatmul.mubr.bf16.gmra.mrb[0].mxu0 %v1815
      %v2036 = vpop.f32.mrb[0].mxu0
      %v2037 = vadd.f32 0.0, %v2036
      %v2038 = vpop.f32.mrb[0].mxu0
      %v2039 = vpop.f32.mrb[0].mxu0
      %v2040 = vadd.f32 0.0, %v2039
      %v2041 = vpop.f32.mrb[0].mxu0
      %2042 = vmatprep.mubr.bf16.mxu0 0
      %2043 = vmatmul.mubr.bf16.gmra.mrb[0].mxu0 %v1816
      %v2044 = vpop.f32.mrb[0].mxu0
      %v2045 = vadd.f32 0.0, %v2044
      %v2046 = vpop.f32.mrb[0].mxu0
      %v2047 = vpop.f32.mrb[0].mxu0
      %v2048 = vadd.f32 0.0, %v2047
      %v2049 = vpop.f32.mrb[0].mxu0
      %2050 = vmatprep.mubr.bf16.mxu0 0
      %2051 = vmatmul.mubr.bf16.gmra.mrb[0].mxu0 %v1817
      %v2052 = vpop.f32.mrb[0].mxu0
      %v2053 = vadd.f32 0.0, %v2052
      %v2054 = vpop.f32.mrb[0].mxu0
      %v2055 = vpop.f32.mrb[0].mxu0
      %v2056 = vadd.f32 0.0, %v2055
      %v2057 = vpop.f32.mrb[0].mxu0
      %2058 = vmatprep.mubr.bf16.mxu0 0
      %2059 = vmatmul.mubr.bf16.gmra.mrb[0].mxu0 %v1818
      %v2060 = vpop.f32.mrb[0].mxu0
      %v2061 = vadd.f32 0.0, %v2060
      %v2062 = vpop.f32.mrb[0].mxu0
      %v2063 = vpop.f32.mrb[0].mxu0
      %v2064 = vadd.f32 0.0, %v2063
      %v2065 = vpop.f32.mrb[0].mxu0
      %2066 = vmatprep.mubr.bf16.mxu0 0
      %2067 = vmatmul.mubr.bf16.gmra.mrb[0].mxu0 %v1819
      %v2068 = vpop.f32.mrb[0].mxu0
      %v2069 = vadd.f32 0.0, %v2068
      %v2070 = vpop.f32.mrb[0].mxu0
      %v2071 = vpop.f32.mrb[0].mxu0
      %v2072 = vadd.f32 0.0, %v2071
      %v2073 = vpop.f32.mrb[0].mxu0
      %2074 = vmatprep.mubr.bf16.mxu0 0
      %2075 = vmatmul.mubr.bf16.gmra.mrb[0].mxu0 %v1820
      %v2076 = vpop.f32.mrb[0].mxu0
      %v2077 = vadd.f32 0.0, %v2076
      %v2078 = vpop.f32.mrb[0].mxu0
      %v2079 = vpop.f32.mrb[0].mxu0
      %v2080 = vadd.f32 0.0, %v2079
      %v2081 = vpop.f32.mrb[0].mxu0
      %2082 = vmatprep.mubr.bf16.mxu0 0
      %2083 = vmatmul.mubr.bf16.gmra.mrb[0].mxu0 %v1821
      %v2084 = vpop.f32.mrb[0].mxu0
      %v2085 = vadd.f32 0.0, %v2084
      %v2086 = vpop.f32.mrb[0].mxu0
      %v2087 = vpop.f32.mrb[0].mxu0
      %v2088 = vadd.f32 0.0, %v2087
      %v2089 = vpop.f32.mrb[0].mxu0
      %2090 = vmatprep.mubr.bf16.mxu0 0
      %2091 = vmatmul.mubr.bf16.gmra.mrb[0].mxu0 %v1822
      %v2092 = vpop.f32.mrb[0].mxu0
      %v2093 = vadd.f32 0.0, %v2092
      %v2094 = vpop.f32.mrb[0].mxu0
      %v2095 = vpop.f32.mrb[0].mxu0
      %v2096 = vadd.f32 0.0, %v2095
      %v2097 = vpop.f32.mrb[0].mxu0
      %2098 = vmatprep.mubr.bf16.mxu0 0
      %2099 = vmatmul.mubr.bf16.gmra.mrb[0].mxu0 %v1823
      %v2100 = vpop.f32.mrb[0].mxu0
      %v2101 = vadd.f32 0.0, %v2100
      %v2102 = vpop.f32.mrb[0].mxu0
      %v2103 = vpop.f32.mrb[0].mxu0
      %v2104 = vadd.f32 0.0, %v2103
      %v2105 = vpop.f32.mrb[0].mxu0
      %2106 = vmatprep.mubr.bf16.mxu0 0
      %2107 = vmatmul.mubr.bf16.gmra.mrb[0].mxu0 %v1824
      %v2108 = vpop.f32.mrb[0].mxu0
      %v2109 = vadd.f32 0.0, %v2108
      %v2110 = vpop.f32.mrb[0].mxu0
      %v2111 = vpop.f32.mrb[0].mxu0
      %v2112 = vadd.f32 0.0, %v2111
      %v2113 = vpop.f32.mrb[0].mxu0
      %2114 = vmatprep.mubr.bf16.mxu0 0
      %2115 = vmatmul.mubr.bf16.gmra.mrb[0].mxu0 %v1825
      %v2116 = vpop.f32.mrb[0].mxu0
      %v2117 = vadd.f32 0.0, %v2116
      %v2118 = vpop.f32.mrb[0].mxu0
      %v2119 = vpop.f32.mrb[0].mxu0
      %v2120 = vadd.f32 0.0, %v2119
      %v2121 = vpop.f32.mrb[0].mxu0
      %2122 = vmatprep.mubr.bf16.mxu0 0
      %2123 = vmatmul.mubr.bf16.gmra.mrb[0].mxu0 %v1826
      %v2124 = vpop.f32.mrb[0].mxu0
      %v2125 = vadd.f32 0.0, %v2124
      %v2126 = vpop.f32.mrb[0].mxu0
      %v2127 = vpop.f32.mrb[0].mxu0
      %v2128 = vadd.f32 0.0, %v2127
      %v2129 = vpop.f32.mrb[0].mxu0
      %2130 = vmatprep.mubr.bf16.mxu0 0
      %2131 = vmatmul.mubr.bf16.gmra.mrb[0].mxu0 %v1827
      %v2132 = vpop.f32.mrb[0].mxu0
      %v2133 = vadd.f32 0.0, %v2132
      %v2134 = vpop.f32.mrb[0].mxu0
      %v2135 = vpop.f32.mrb[0].mxu0
      %v2136 = vadd.f32 0.0, %v2135
      %v2137 = vpop.f32.mrb[0].mxu0
      %2138 = vmatprep.mubr.bf16.mxu0 0
      %2139 = vmatmul.mubr.bf16.gmra.mrb[0].mxu0 %v1828
      %v2140 = vpop.f32.mrb[0].mxu0
      %v2141 = vadd.f32 0.0, %v2140
      %v2142 = vpop.f32.mrb[0].mxu0
      %v2143 = vpop.f32.mrb[0].mxu0
      %v2144 = vadd.f32 0.0, %v2143
      %v2145 = vpop.f32.mrb[0].mxu0
      %2146 = vmatprep.mubr.bf16.mxu0 0
      %2147 = vmatmul.mubr.bf16.gmra.mrb[0].mxu0 %v1829
      %v2148 = vpop.f32.mrb[0].mxu0
      %v2149 = vadd.f32 0.0, %v2148
      %v2150 = vpop.f32.mrb[0].mxu0
      %v2151 = vpop.f32.mrb[0].mxu0
      %v2152 = vadd.f32 0.0, %v2151
      %v2153 = vpop.f32.mrb[0].mxu0
      %2154 = vmatprep.mubr.bf16.mxu0 0
      %2155 = vmatmul.mubr.bf16.gmra.mrb[0].mxu0 %v1830
      %v2156 = vpop.f32.mrb[0].mxu0
      %v2157 = vadd.f32 0.0, %v2156
      %v2158 = vpop.f32.mrb[0].mxu0
      %v2159 = vpop.f32.mrb[0].mxu0
      %v2160 = vadd.f32 0.0, %v2159
      %v2161 = vpop.f32.mrb[0].mxu0
      %2162 = vmatprep.mubr.bf16.mxu0 0
      %2163 = vmatmul.mubr.bf16.gmra.mrb[0].mxu0 %v1831
      %v2164 = vpop.f32.mrb[0].mxu0
      %v2165 = vadd.f32 0.0, %v2164
      %v2166 = vpop.f32.mrb[0].mxu0
      %v2167 = vpop.f32.mrb[0].mxu0
      %v2168 = vadd.f32 0.0, %v2167
      %v2169 = vpop.f32.mrb[0].mxu0
      %2170 = vmatprep.mubr.bf16.mxu0 0
      %2171 = vmatmul.mubr.bf16.gmra.mrb[0].mxu0 %v1832
      %v2172 = vpop.f32.mrb[0].mxu0
      %v2173 = vadd.f32 0.0, %v2172
      %v2174 = vpop.f32.mrb[0].mxu0
      %v2175 = vpop.f32.mrb[0].mxu0
      %v2176 = vadd.f32 0.0, %v2175
      %v2177 = vpop.f32.mrb[0].mxu0
      %2178 = vmatprep.mubr.bf16.mxu0 0
      %2179 = vmatmul.mubr.bf16.gmra.mrb[0].mxu0 %v1833
      %v2180 = vpop.f32.mrb[0].mxu0
      %v2181 = vadd.f32 0.0, %v2180
      %v2182 = vpop.f32.mrb[0].mxu0
      %v2183 = vpop.f32.mrb[0].mxu0
      %v2184 = vadd.f32 0.0, %v2183
      %v2185 = vpop.f32.mrb[0].mxu0
      %2186 = vdwg.mxu0
      %v2187 = vadd.f32 %v1289, %v1933
      %v2188 = vadd.f32 %v1290, %v1936
      %v2189 = vadd.f32 %v1291, %v1941
      %v2190 = vadd.f32 %v1292, %v1944
      %v2191 = vadd.f32 %v1293, %v1949
      %v2192 = vadd.f32 %v1294, %v1952
      %v2193 = vadd.f32 %v1295, %v1957
      %v2194 = vadd.f32 %v1296, %v1960
      %v2195 = vadd.f32 %v1297, %v1965
      %v2196 = vadd.f32 %v1298, %v1968
      %v2197 = vadd.f32 %v1299, %v1973
      %v2198 = vadd.f32 %v1300, %v1976
      %v2199 = vadd.f32 %v1301, %v1981
      %v2200 = vadd.f32 %v1302, %v1984
      %v2201 = vadd.f32 %v1303, %v1989
      %v2202 = vadd.f32 %v1304, %v1992
      %v2203 = vadd.f32 %v1305, %v1997
      %v2204 = vadd.f32 %v1306, %v2000
      %v2205 = vadd.f32 %v1307, %v2005
      %v2206 = vadd.f32 %v1308, %v2008
      %v2207 = vadd.f32 %v1309, %v2013
      %v2208 = vadd.f32 %v1310, %v2016
      %v2209 = vadd.f32 %v1311, %v2021
      %v2210 = vadd.f32 %v1312, %v2024
      %v2211 = vadd.f32 %v1313, %v2029
      %v2212 = vadd.f32 %v1314, %v2032
      %v2213 = vadd.f32 %v1315, %v2037
      %v2214 = vadd.f32 %v1316, %v2040
      %v2215 = vadd.f32 %v1317, %v2045
      %v2216 = vadd.f32 %v1318, %v2048
      %v2217 = vadd.f32 %v1319, %v2053
      %v2218 = vadd.f32 %v1320, %v2056
      %v2219 = vadd.f32 %v1321, %v2061
      %v2220 = vadd.f32 %v1322, %v2064
      %v2221 = vadd.f32 %v1323, %v2069
      %v2222 = vadd.f32 %v1324, %v2072
      %v2223 = vadd.f32 %v1325, %v2077
      %v2224 = vadd.f32 %v1326, %v2080
      %v2225 = vadd.f32 %v1327, %v2085
      %v2226 = vadd.f32 %v1328, %v2088
      %v2227 = vadd.f32 %v1329, %v2093
      %v2228 = vadd.f32 %v1330, %v2096
      %v2229 = vadd.f32 %v1331, %v2101
      %v2230 = vadd.f32 %v1332, %v2104
      %v2231 = vadd.f32 %v1333, %v2109
      %v2232 = vadd.f32 %v1334, %v2112
      %v2233 = vadd.f32 %v1335, %v2117
      %v2234 = vadd.f32 %v1336, %v2120
      %v2235 = vadd.f32 %v1337, %v2125
      %v2236 = vadd.f32 %v1338, %v2128
      %v2237 = vadd.f32 %v1339, %v2133
      %v2238 = vadd.f32 %v1340, %v2136
      %v2239 = vadd.f32 %v1341, %v2141
      %v2240 = vadd.f32 %v1342, %v2144
      %v2241 = vadd.f32 %v1343, %v2149
      %v2242 = vadd.f32 %v1344, %v2152
      %v2243 = vadd.f32 %v1345, %v2157
      %v2244 = vadd.f32 %v1346, %v2160
      %v2245 = vadd.f32 %v1347, %v2165
      %v2246 = vadd.f32 %v1348, %v2168
      %v2247 = vadd.f32 %v1349, %v2173
      %v2248 = vadd.f32 %v1350, %v2176
      %v2249 = vadd.f32 %v1351, %v2181
      %v2250 = vadd.f32 %v1352, %v2184
      %v2251 = vmax.f32 %v2187, 0.0
      %v2252 = vmax.f32 %v2188, 0.0
      %v2253 = vmax.f32 %v2189, 0.0
      %v2254 = vmax.f32 %v2190, 0.0
      %v2255 = vmax.f32 %v2191, 0.0
      %v2256 = vmax.f32 %v2192, 0.0
      %v2257 = vmax.f32 %v2193, 0.0
      %v2258 = vmax.f32 %v2194, 0.0
      %v2259 = vmax.f32 %v2195, 0.0
      %v2260 = vmax.f32 %v2196, 0.0
      %v2261 = vmax.f32 %v2197, 0.0
      %v2262 = vmax.f32 %v2198, 0.0
      %v2263 = vmax.f32 %v2199, 0.0
      %v2264 = vmax.f32 %v2200, 0.0
      %v2265 = vmax.f32 %v2201, 0.0
      %v2266 = vmax.f32 %v2202, 0.0
      %v2267 = vmax.f32 %v2203, 0.0
      %v2268 = vmax.f32 %v2204, 0.0
      %v2269 = vmax.f32 %v2205, 0.0
      %v2270 = vmax.f32 %v2206, 0.0
      %v2271 = vmax.f32 %v2207, 0.0
      %v2272 = vmax.f32 %v2208, 0.0
      %v2273 = vmax.f32 %v2209, 0.0
      %v2274 = vmax.f32 %v2210, 0.0
      %v2275 = vmax.f32 %v2211, 0.0
      %v2276 = vmax.f32 %v2212, 0.0
      %v2277 = vmax.f32 %v2213, 0.0
      %v2278 = vmax.f32 %v2214, 0.0
      %v2279 = vmax.f32 %v2215, 0.0
      %v2280 = vmax.f32 %v2216, 0.0
      %v2281 = vmax.f32 %v2217, 0.0
      %v2282 = vmax.f32 %v2218, 0.0
      %v2283 = vmax.f32 %v2219, 0.0
      %v2284 = vmax.f32 %v2220, 0.0
      %v2285 = vmax.f32 %v2221, 0.0
      %v2286 = vmax.f32 %v2222, 0.0
      %v2287 = vmax.f32 %v2223, 0.0
      %v2288 = vmax.f32 %v2224, 0.0
      %v2289 = vmax.f32 %v2225, 0.0
      %v2290 = vmax.f32 %v2226, 0.0
      %v2291 = vmax.f32 %v2227, 0.0
      %v2292 = vmax.f32 %v2228, 0.0
      %v2293 = vmax.f32 %v2229, 0.0
      %v2294 = vmax.f32 %v2230, 0.0
      %v2295 = vmax.f32 %v2231, 0.0
      %v2296 = vmax.f32 %v2232, 0.0
      %v2297 = vmax.f32 %v2233, 0.0
      %v2298 = vmax.f32 %v2234, 0.0
      %v2299 = vmax.f32 %v2235, 0.0
      %v2300 = vmax.f32 %v2236, 0.0
      %v2301 = vmax.f32 %v2237, 0.0
      %v2302 = vmax.f32 %v2238, 0.0
      %v2303 = vmax.f32 %v2239, 0.0
      %v2304 = vmax.f32 %v2240, 0.0
      %v2305 = vmax.f32 %v2241, 0.0
      %v2306 = vmax.f32 %v2242, 0.0
      %v2307 = vmax.f32 %v2243, 0.0
      %v2308 = vmax.f32 %v2244, 0.0
      %v2309 = vmax.f32 %v2245, 0.0
      %v2310 = vmax.f32 %v2246, 0.0
      %v2311 = vmax.f32 %v2247, 0.0
      %v2312 = vmax.f32 %v2248, 0.0
      %v2313 = vmax.f32 %v2249, 0.0
      %v2314 = vmax.f32 %v2250, 0.0
      %v2315 = vpack.c.bf16 %v2252, %v2251
      %v2316 = vpack.c.bf16 %v2254, %v2253
      %v2317 = vpack.c.bf16 %v2256, %v2255
      %v2318 = vpack.c.bf16 %v2258, %v2257
      %v2319 = vpack.c.bf16 %v2260, %v2259
      %v2320 = vpack.c.bf16 %v2262, %v2261
      %v2321 = vpack.c.bf16 %v2264, %v2263
      %v2322 = vpack.c.bf16 %v2266, %v2265
      %v2323 = vpack.c.bf16 %v2268, %v2267
      %v2324 = vpack.c.bf16 %v2270, %v2269
      %v2325 = vpack.c.bf16 %v2272, %v2271
      %v2326 = vpack.c.bf16 %v2274, %v2273
      %v2327 = vpack.c.bf16 %v2276, %v2275
      %v2328 = vpack.c.bf16 %v2278, %v2277
      %v2329 = vpack.c.bf16 %v2280, %v2279
      %v2330 = vpack.c.bf16 %v2282, %v2281
      %v2331 = vpack.c.bf16 %v2284, %v2283
      %v2332 = vpack.c.bf16 %v2286, %v2285
      %v2333 = vpack.c.bf16 %v2288, %v2287
      %v2334 = vpack.c.bf16 %v2290, %v2289
      %v2335 = vpack.c.bf16 %v2292, %v2291
      %v2336 = vpack.c.bf16 %v2294, %v2293
      %v2337 = vpack.c.bf16 %v2296, %v2295
      %v2338 = vpack.c.bf16 %v2298, %v2297
      %v2339 = vpack.c.bf16 %v2300, %v2299
      %v2340 = vpack.c.bf16 %v2302, %v2301
      %v2341 = vpack.c.bf16 %v2304, %v2303
      %v2342 = vpack.c.bf16 %v2306, %v2305
      %v2343 = vpack.c.bf16 %v2308, %v2307
      %v2344 = vpack.c.bf16 %v2310, %v2309
      %v2345 = vpack.c.bf16 %v2312, %v2311
      %v2346 = vpack.c.bf16 %v2314, %v2313
      %v2347 = vld [vmem:[%s4] sm:$0xf]
      %v2348 = vld [vmem:[%s4 + $0x4] sm:$0xf]
      %v2349 = vld [vmem:[%s4 + $0x8] sm:$0xf]
      %v2350 = vld [vmem:[%s4 + $0xc] sm:$0xf]
      %v2351 = vld [vmem:[%s4 + $0x10] sm:$0xf]
      %v2352 = vld [vmem:[%s4 + $0x14] sm:$0xf]
      %v2353 = vld [vmem:[%s4 + $0x18] sm:$0xf]
      %v2354 = vld [vmem:[%s4 + $0x1c] sm:$0xf]
      %v2355 = vld [vmem:[%s4 + $0x20] sm:$0xf]
      %v2356 = vld [vmem:[%s4 + $0x24] sm:$0xf]
      %v2357 = vld [vmem:[%s4 + $0x28] sm:$0xf]
      %v2358 = vld [vmem:[%s4 + $0x2c] sm:$0xf]
      %v2359 = vld [vmem:[%s4 + $0x30] sm:$0xf]
      %v2360 = vld [vmem:[%s4 + $0x34] sm:$0xf]
      %v2361 = vld [vmem:[%s4 + $0x38] sm:$0xf]
      %v2362 = vld [vmem:[%s4 + $0x3c] sm:$0xf]
      %v2379 = vunpack.c.l.b16 %v2347
      %v2380 = vunpack.c.l.b16 %v2348
      %v2381 = vunpack.c.l.b16 %v2349
      %v2382 = vunpack.c.l.b16 %v2350
      %v2383 = vunpack.c.l.b16 %v2351
      %v2384 = vunpack.c.l.b16 %v2352
      %v2385 = vunpack.c.l.b16 %v2353
      %v2386 = vunpack.c.l.b16 %v2354
      %v2387 = vunpack.c.l.b16 %v2355
      %v2388 = vunpack.c.l.b16 %v2356
      %v2389 = vunpack.c.l.b16 %v2357
      %v2390 = vunpack.c.l.b16 %v2358
      %v2391 = vunpack.c.l.b16 %v2359
      %v2392 = vunpack.c.l.b16 %v2360
      %v2393 = vunpack.c.l.b16 %v2361
      %v2394 = vunpack.c.l.b16 %v2362
      %v2395 = vpack.c.b16 %v2380, %v2379
      %v2396 = vpack.c.b16 %v2382, %v2381
      %v2397 = vpack.c.b16 %v2384, %v2383
      %v2398 = vpack.c.b16 %v2386, %v2385
      %v2399 = vpack.c.b16 %v2388, %v2387
      %v2400 = vpack.c.b16 %v2390, %v2389
      %v2401 = vpack.c.b16 %v2392, %v2391
      %v2402 = vpack.c.b16 %v2394, %v2393
      %2411 = vmatprep.subr.bf16.mxu0 0
      %2412 = vmatpush1.bf16.msra.mxu0 %v2395
      %2413 = vmatprep.subr.bf16.mxu0 0
      %2414 = vmatpush1.bf16.msra.mxu0 %v2396
      %2415 = vmatprep.subr.bf16.mxu0 0
      %2416 = vmatpush1.bf16.msra.mxu0 %v2397
      %2417 = vmatprep.subr.bf16.mxu0 0
      %2418 = vmatpush1.bf16.msra.mxu0 %v2398
      %2419 = vmatprep.subr.bf16.mxu0 0
      %2420 = vmatpush1.bf16.msra.mxu0 %v2399
      %2421 = vmatprep.subr.bf16.mxu0 0
      %2422 = vmatpush1.bf16.msra.mxu0 %v2400
      %2423 = vmatprep.subr.bf16.mxu0 0
      %2424 = vmatpush1.bf16.msra.mxu0 %v2401
      %2425 = vmatprep.subr.bf16.mxu0 0
      %2426 = vmatpush1.bf16.msra.mxu0 %v2402
      %2427 = vmatprep.subr.bf16.mxu0 0
      %2428 = vmatpush1.bf16.msra.mxu0 0
      %2429 = vmatprep.subr.bf16.mxu0 0
      %2430 = vmatpush1.bf16.msra.mxu0 0
      %2431 = vmatprep.subr.bf16.mxu0 0
      %2432 = vmatpush1.bf16.msra.mxu0 0
      %2433 = vmatprep.subr.bf16.mxu0 0
      %2434 = vmatpush1.bf16.msra.mxu0 0
      %2435 = vmatprep.subr.bf16.mxu0 0
      %2436 = vmatpush1.bf16.msra.mxu0 0
      %2437 = vmatprep.subr.bf16.mxu0 0
      %2438 = vmatpush1.bf16.msra.mxu0 0
      %2439 = vmatprep.subr.bf16.mxu0 0
      %2440 = vmatpush1.bf16.msra.mxu0 0
      %2441 = vmatprep.subr.bf16.mxu0 0
      %2442 = vmatpush1.bf16.msra.mxu0 0
      %2443 = vmatprep.mubr.bf16.mxu0 0
      %2444 = vmatmul.mubr.bf16.gmra.mrb[0].mxu0 %v2315
      %v2445 = vpop.f32.mrb[0].mxu0
      %v2446 = vadd.f32 0.0, %v2445
      %v2447 = vpop.f32.mrb[0].mxu0
      %v2448 = vpop.f32.mrb[0].mxu0
      %v2449 = vadd.f32 0.0, %v2448
      %v2450 = vpop.f32.mrb[0].mxu0
      %2451 = vmatprep.mubr.bf16.mxu0 0
      %2452 = vmatmul.mubr.bf16.gmra.mrb[0].mxu0 %v2316
      %v2453 = vpop.f32.mrb[0].mxu0
      %v2454 = vadd.f32 0.0, %v2453
      %v2455 = vpop.f32.mrb[0].mxu0
      %v2456 = vpop.f32.mrb[0].mxu0
      %v2457 = vadd.f32 0.0, %v2456
      %v2458 = vpop.f32.mrb[0].mxu0
      %2459 = vmatprep.mubr.bf16.mxu0 0
      %2460 = vmatmul.mubr.bf16.gmra.mrb[0].mxu0 %v2317
      %v2461 = vpop.f32.mrb[0].mxu0
      %v2462 = vadd.f32 0.0, %v2461
      %v2463 = vpop.f32.mrb[0].mxu0
      %v2464 = vpop.f32.mrb[0].mxu0
      %v2465 = vadd.f32 0.0, %v2464
      %v2466 = vpop.f32.mrb[0].mxu0
      %2467 = vmatprep.mubr.bf16.mxu0 0
      %2468 = vmatmul.mubr.bf16.gmra.mrb[0].mxu0 %v2318
      %v2469 = vpop.f32.mrb[0].mxu0
      %v2470 = vadd.f32 0.0, %v2469
      %v2471 = vpop.f32.mrb[0].mxu0
      %v2472 = vpop.f32.mrb[0].mxu0
      %v2473 = vadd.f32 0.0, %v2472
      %v2474 = vpop.f32.mrb[0].mxu0
      %2475 = vmatprep.mubr.bf16.mxu0 0
      %2476 = vmatmul.mubr.bf16.gmra.mrb[0].mxu0 %v2319
      %v2477 = vpop.f32.mrb[0].mxu0
      %v2478 = vadd.f32 0.0, %v2477
      %v2479 = vpop.f32.mrb[0].mxu0
      %v2480 = vpop.f32.mrb[0].mxu0
      %v2481 = vadd.f32 0.0, %v2480
      %v2482 = vpop.f32.mrb[0].mxu0
      %2483 = vmatprep.mubr.bf16.mxu0 0
      %2484 = vmatmul.mubr.bf16.gmra.mrb[0].mxu0 %v2320
      %v2485 = vpop.f32.mrb[0].mxu0
      %v2486 = vadd.f32 0.0, %v2485
      %v2487 = vpop.f32.mrb[0].mxu0
      %v2488 = vpop.f32.mrb[0].mxu0
      %v2489 = vadd.f32 0.0, %v2488
      %v2490 = vpop.f32.mrb[0].mxu0
      %2491 = vmatprep.mubr.bf16.mxu0 0
      %2492 = vmatmul.mubr.bf16.gmra.mrb[0].mxu0 %v2321
      %v2493 = vpop.f32.mrb[0].mxu0
      %v2494 = vadd.f32 0.0, %v2493
      %v2495 = vpop.f32.mrb[0].mxu0
      %v2496 = vpop.f32.mrb[0].mxu0
      %v2497 = vadd.f32 0.0, %v2496
      %v2498 = vpop.f32.mrb[0].mxu0
      %2499 = vmatprep.mubr.bf16.mxu0 0
      %2500 = vmatmul.mubr.bf16.gmra.mrb[0].mxu0 %v2322
      %v2501 = vpop.f32.mrb[0].mxu0
      %v2502 = vadd.f32 0.0, %v2501
      %v2503 = vpop.f32.mrb[0].mxu0
      %v2504 = vpop.f32.mrb[0].mxu0
      %v2505 = vadd.f32 0.0, %v2504
      %v2506 = vpop.f32.mrb[0].mxu0
      %2507 = vmatprep.mubr.bf16.mxu0 0
      %2508 = vmatmul.mubr.bf16.gmra.mrb[0].mxu0 %v2323
      %v2509 = vpop.f32.mrb[0].mxu0
      %v2510 = vadd.f32 0.0, %v2509
      %v2511 = vpop.f32.mrb[0].mxu0
      %v2512 = vpop.f32.mrb[0].mxu0
      %v2513 = vadd.f32 0.0, %v2512
      %v2514 = vpop.f32.mrb[0].mxu0
      %2515 = vmatprep.mubr.bf16.mxu0 0
      %2516 = vmatmul.mubr.bf16.gmra.mrb[0].mxu0 %v2324
      %v2517 = vpop.f32.mrb[0].mxu0
      %v2518 = vadd.f32 0.0, %v2517
      %v2519 = vpop.f32.mrb[0].mxu0
      %v2520 = vpop.f32.mrb[0].mxu0
      %v2521 = vadd.f32 0.0, %v2520
      %v2522 = vpop.f32.mrb[0].mxu0
      %2523 = vmatprep.mubr.bf16.mxu0 0
      %2524 = vmatmul.mubr.bf16.gmra.mrb[0].mxu0 %v2325
      %v2525 = vpop.f32.mrb[0].mxu0
      %v2526 = vadd.f32 0.0, %v2525
      %v2527 = vpop.f32.mrb[0].mxu0
      %v2528 = vpop.f32.mrb[0].mxu0
      %v2529 = vadd.f32 0.0, %v2528
      %v2530 = vpop.f32.mrb[0].mxu0
      %2531 = vmatprep.mubr.bf16.mxu0 0
      %2532 = vmatmul.mubr.bf16.gmra.mrb[0].mxu0 %v2326
      %v2533 = vpop.f32.mrb[0].mxu0
      %v2534 = vadd.f32 0.0, %v2533
      %v2535 = vpop.f32.mrb[0].mxu0
      %v2536 = vpop.f32.mrb[0].mxu0
      %v2537 = vadd.f32 0.0, %v2536
      %v2538 = vpop.f32.mrb[0].mxu0
      %2539 = vmatprep.mubr.bf16.mxu0 0
      %2540 = vmatmul.mubr.bf16.gmra.mrb[0].mxu0 %v2327
      %v2541 = vpop.f32.mrb[0].mxu0
      %v2542 = vadd.f32 0.0, %v2541
      %v2543 = vpop.f32.mrb[0].mxu0
      %v2544 = vpop.f32.mrb[0].mxu0
      %v2545 = vadd.f32 0.0, %v2544
      %v2546 = vpop.f32.mrb[0].mxu0
      %2547 = vmatprep.mubr.bf16.mxu0 0
      %2548 = vmatmul.mubr.bf16.gmra.mrb[0].mxu0 %v2328
      %v2549 = vpop.f32.mrb[0].mxu0
      %v2550 = vadd.f32 0.0, %v2549
      %v2551 = vpop.f32.mrb[0].mxu0
      %v2552 = vpop.f32.mrb[0].mxu0
      %v2553 = vadd.f32 0.0, %v2552
      %v2554 = vpop.f32.mrb[0].mxu0
      %2555 = vmatprep.mubr.bf16.mxu0 0
      %2556 = vmatmul.mubr.bf16.gmra.mrb[0].mxu0 %v2329
      %v2557 = vpop.f32.mrb[0].mxu0
      %v2558 = vadd.f32 0.0, %v2557
      %v2559 = vpop.f32.mrb[0].mxu0
      %v2560 = vpop.f32.mrb[0].mxu0
      %v2561 = vadd.f32 0.0, %v2560
      %v2562 = vpop.f32.mrb[0].mxu0
      %2563 = vmatprep.mubr.bf16.mxu0 0
      %2564 = vmatmul.mubr.bf16.gmra.mrb[0].mxu0 %v2330
      %v2565 = vpop.f32.mrb[0].mxu0
      %v2566 = vadd.f32 0.0, %v2565
      %v2567 = vpop.f32.mrb[0].mxu0
      %v2568 = vpop.f32.mrb[0].mxu0
      %v2569 = vadd.f32 0.0, %v2568
      %v2570 = vpop.f32.mrb[0].mxu0
      %2571 = vmatprep.mubr.bf16.mxu0 0
      %2572 = vmatmul.mubr.bf16.gmra.mrb[0].mxu0 %v2331
      %v2573 = vpop.f32.mrb[0].mxu0
      %v2574 = vadd.f32 0.0, %v2573
      %v2575 = vpop.f32.mrb[0].mxu0
      %v2576 = vpop.f32.mrb[0].mxu0
      %v2577 = vadd.f32 0.0, %v2576
      %v2578 = vpop.f32.mrb[0].mxu0
      %2579 = vmatprep.mubr.bf16.mxu0 0
      %2580 = vmatmul.mubr.bf16.gmra.mrb[0].mxu0 %v2332
      %v2581 = vpop.f32.mrb[0].mxu0
      %v2582 = vadd.f32 0.0, %v2581
      %v2583 = vpop.f32.mrb[0].mxu0
      %v2584 = vpop.f32.mrb[0].mxu0
      %v2585 = vadd.f32 0.0, %v2584
      %v2586 = vpop.f32.mrb[0].mxu0
      %2587 = vmatprep.mubr.bf16.mxu0 0
      %2588 = vmatmul.mubr.bf16.gmra.mrb[0].mxu0 %v2333
      %v2589 = vpop.f32.mrb[0].mxu0
      %v2590 = vadd.f32 0.0, %v2589
      %v2591 = vpop.f32.mrb[0].mxu0
      %v2592 = vpop.f32.mrb[0].mxu0
      %v2593 = vadd.f32 0.0, %v2592
      %v2594 = vpop.f32.mrb[0].mxu0
      %2595 = vmatprep.mubr.bf16.mxu0 0
      %2596 = vmatmul.mubr.bf16.gmra.mrb[0].mxu0 %v2334
      %v2597 = vpop.f32.mrb[0].mxu0
      %v2598 = vadd.f32 0.0, %v2597
      %v2599 = vpop.f32.mrb[0].mxu0
      %v2600 = vpop.f32.mrb[0].mxu0
      %v2601 = vadd.f32 0.0, %v2600
      %v2602 = vpop.f32.mrb[0].mxu0
      %2603 = vmatprep.mubr.bf16.mxu0 0
      %2604 = vmatmul.mubr.bf16.gmra.mrb[0].mxu0 %v2335
      %v2605 = vpop.f32.mrb[0].mxu0
      %v2606 = vadd.f32 0.0, %v2605
      %v2607 = vpop.f32.mrb[0].mxu0
      %v2608 = vpop.f32.mrb[0].mxu0
      %v2609 = vadd.f32 0.0, %v2608
      %v2610 = vpop.f32.mrb[0].mxu0
      %2611 = vmatprep.mubr.bf16.mxu0 0
      %2612 = vmatmul.mubr.bf16.gmra.mrb[0].mxu0 %v2336
      %v2613 = vpop.f32.mrb[0].mxu0
      %v2614 = vadd.f32 0.0, %v2613
      %v2615 = vpop.f32.mrb[0].mxu0
      %v2616 = vpop.f32.mrb[0].mxu0
      %v2617 = vadd.f32 0.0, %v2616
      %v2618 = vpop.f32.mrb[0].mxu0
      %2619 = vmatprep.mubr.bf16.mxu0 0
      %2620 = vmatmul.mubr.bf16.gmra.mrb[0].mxu0 %v2337
      %v2621 = vpop.f32.mrb[0].mxu0
      %v2622 = vadd.f32 0.0, %v2621
      %v2623 = vpop.f32.mrb[0].mxu0
      %v2624 = vpop.f32.mrb[0].mxu0
      %v2625 = vadd.f32 0.0, %v2624
      %v2626 = vpop.f32.mrb[0].mxu0
      %2627 = vmatprep.mubr.bf16.mxu0 0
      %2628 = vmatmul.mubr.bf16.gmra.mrb[0].mxu0 %v2338
      %v2629 = vpop.f32.mrb[0].mxu0
      %v2630 = vadd.f32 0.0, %v2629
      %v2631 = vpop.f32.mrb[0].mxu0
      %v2632 = vpop.f32.mrb[0].mxu0
      %v2633 = vadd.f32 0.0, %v2632
      %v2634 = vpop.f32.mrb[0].mxu0
      %2635 = vmatprep.mubr.bf16.mxu0 0
      %2636 = vmatmul.mubr.bf16.gmra.mrb[0].mxu0 %v2339
      %v2637 = vpop.f32.mrb[0].mxu0
      %v2638 = vadd.f32 0.0, %v2637
      %v2639 = vpop.f32.mrb[0].mxu0
      %v2640 = vpop.f32.mrb[0].mxu0
      %v2641 = vadd.f32 0.0, %v2640
      %v2642 = vpop.f32.mrb[0].mxu0
      %2643 = vmatprep.mubr.bf16.mxu0 0
      %2644 = vmatmul.mubr.bf16.gmra.mrb[0].mxu0 %v2340
      %v2645 = vpop.f32.mrb[0].mxu0
      %v2646 = vadd.f32 0.0, %v2645
      %v2647 = vpop.f32.mrb[0].mxu0
      %v2648 = vpop.f32.mrb[0].mxu0
      %v2649 = vadd.f32 0.0, %v2648
      %v2650 = vpop.f32.mrb[0].mxu0
      %2651 = vmatprep.mubr.bf16.mxu0 0
      %2652 = vmatmul.mubr.bf16.gmra.mrb[0].mxu0 %v2341
      %v2653 = vpop.f32.mrb[0].mxu0
      %v2654 = vadd.f32 0.0, %v2653
      %v2655 = vpop.f32.mrb[0].mxu0
      %v2656 = vpop.f32.mrb[0].mxu0
      %v2657 = vadd.f32 0.0, %v2656
      %v2658 = vpop.f32.mrb[0].mxu0
      %2659 = vmatprep.mubr.bf16.mxu0 0
      %2660 = vmatmul.mubr.bf16.gmra.mrb[0].mxu0 %v2342
      %v2661 = vpop.f32.mrb[0].mxu0
      %v2662 = vadd.f32 0.0, %v2661
      %v2663 = vpop.f32.mrb[0].mxu0
      %v2664 = vpop.f32.mrb[0].mxu0
      %v2665 = vadd.f32 0.0, %v2664
      %v2666 = vpop.f32.mrb[0].mxu0
      %2667 = vmatprep.mubr.bf16.mxu0 0
      %2668 = vmatmul.mubr.bf16.gmra.mrb[0].mxu0 %v2343
      %v2669 = vpop.f32.mrb[0].mxu0
      %v2670 = vadd.f32 0.0, %v2669
      %v2671 = vpop.f32.mrb[0].mxu0
      %v2672 = vpop.f32.mrb[0].mxu0
      %v2673 = vadd.f32 0.0, %v2672
      %v2674 = vpop.f32.mrb[0].mxu0
      %2675 = vmatprep.mubr.bf16.mxu0 0
      %2676 = vmatmul.mubr.bf16.gmra.mrb[0].mxu0 %v2344
      %v2677 = vpop.f32.mrb[0].mxu0
      %v2678 = vadd.f32 0.0, %v2677
      %v2679 = vpop.f32.mrb[0].mxu0
      %v2680 = vpop.f32.mrb[0].mxu0
      %v2681 = vadd.f32 0.0, %v2680
      %v2682 = vpop.f32.mrb[0].mxu0
      %2683 = vmatprep.mubr.bf16.mxu0 0
      %2684 = vmatmul.mubr.bf16.gmra.mrb[0].mxu0 %v2345
      %v2685 = vpop.f32.mrb[0].mxu0
      %v2686 = vadd.f32 0.0, %v2685
      %v2687 = vpop.f32.mrb[0].mxu0
      %v2688 = vpop.f32.mrb[0].mxu0
      %v2689 = vadd.f32 0.0, %v2688
      %v2690 = vpop.f32.mrb[0].mxu0
      %2691 = vmatprep.mubr.bf16.mxu0 0
      %2692 = vmatmul.mubr.bf16.gmra.mrb[0].mxu0 %v2346
      %v2693 = vpop.f32.mrb[0].mxu0
      %v2694 = vadd.f32 0.0, %v2693
      %v2695 = vpop.f32.mrb[0].mxu0
      %v2696 = vpop.f32.mrb[0].mxu0
      %v2697 = vadd.f32 0.0, %v2696
      %v2698 = vpop.f32.mrb[0].mxu0
      %2699 = vdwg.mxu0
      %v2700 = vmax.f32 %v2446, 0.0
      %v2701 = vmax.f32 %v2449, 0.0
      %v2702 = vmax.f32 %v2454, 0.0
      %v2703 = vmax.f32 %v2457, 0.0
      %v2704 = vmax.f32 %v2462, 0.0
      %v2705 = vmax.f32 %v2465, 0.0
      %v2706 = vmax.f32 %v2470, 0.0
      %v2707 = vmax.f32 %v2473, 0.0
      %v2708 = vmax.f32 %v2478, 0.0
      %v2709 = vmax.f32 %v2481, 0.0
      %v2710 = vmax.f32 %v2486, 0.0
      %v2711 = vmax.f32 %v2489, 0.0
      %v2712 = vmax.f32 %v2494, 0.0
      %v2713 = vmax.f32 %v2497, 0.0
      %v2714 = vmax.f32 %v2502, 0.0
      %v2715 = vmax.f32 %v2505, 0.0
      %v2716 = vmax.f32 %v2510, 0.0
      %v2717 = vmax.f32 %v2513, 0.0
      %v2718 = vmax.f32 %v2518, 0.0
      %v2719 = vmax.f32 %v2521, 0.0
      %v2720 = vmax.f32 %v2526, 0.0
      %v2721 = vmax.f32 %v2529, 0.0
      %v2722 = vmax.f32 %v2534, 0.0
      %v2723 = vmax.f32 %v2537, 0.0
      %v2724 = vmax.f32 %v2542, 0.0
      %v2725 = vmax.f32 %v2545, 0.0
      %v2726 = vmax.f32 %v2550, 0.0
      %v2727 = vmax.f32 %v2553, 0.0
      %v2728 = vmax.f32 %v2558, 0.0
      %v2729 = vmax.f32 %v2561, 0.0
      %v2730 = vmax.f32 %v2566, 0.0
      %v2731 = vmax.f32 %v2569, 0.0
      %v2732 = vmax.f32 %v2574, 0.0
      %v2733 = vmax.f32 %v2577, 0.0
      %v2734 = vmax.f32 %v2582, 0.0
      %v2735 = vmax.f32 %v2585, 0.0
      %v2736 = vmax.f32 %v2590, 0.0
      %v2737 = vmax.f32 %v2593, 0.0
      %v2738 = vmax.f32 %v2598, 0.0
      %v2739 = vmax.f32 %v2601, 0.0
      %v2740 = vmax.f32 %v2606, 0.0
      %v2741 = vmax.f32 %v2609, 0.0
      %v2742 = vmax.f32 %v2614, 0.0
      %v2743 = vmax.f32 %v2617, 0.0
      %v2744 = vmax.f32 %v2622, 0.0
      %v2745 = vmax.f32 %v2625, 0.0
      %v2746 = vmax.f32 %v2630, 0.0
      %v2747 = vmax.f32 %v2633, 0.0
      %v2748 = vmax.f32 %v2638, 0.0
      %v2749 = vmax.f32 %v2641, 0.0
      %v2750 = vmax.f32 %v2646, 0.0
      %v2751 = vmax.f32 %v2649, 0.0
      %v2752 = vmax.f32 %v2654, 0.0
      %v2753 = vmax.f32 %v2657, 0.0
      %v2754 = vmax.f32 %v2662, 0.0
      %v2755 = vmax.f32 %v2665, 0.0
      %v2756 = vmax.f32 %v2670, 0.0
      %v2757 = vmax.f32 %v2673, 0.0
      %v2758 = vmax.f32 %v2678, 0.0
      %v2759 = vmax.f32 %v2681, 0.0
      %v2760 = vmax.f32 %v2686, 0.0
      %v2761 = vmax.f32 %v2689, 0.0
      %v2762 = vmax.f32 %v2694, 0.0
      %v2763 = vmax.f32 %v2697, 0.0
      %v2764 = vpack.c.bf16 %v2701, %v2700
      %v2765 = vpack.c.bf16 %v2703, %v2702
      %v2766 = vpack.c.bf16 %v2705, %v2704
      %v2767 = vpack.c.bf16 %v2707, %v2706
      %v2768 = vpack.c.bf16 %v2709, %v2708
      %v2769 = vpack.c.bf16 %v2711, %v2710
      %v2770 = vpack.c.bf16 %v2713, %v2712
      %v2771 = vpack.c.bf16 %v2715, %v2714
      %v2772 = vpack.c.bf16 %v2717, %v2716
      %v2773 = vpack.c.bf16 %v2719, %v2718
      %v2774 = vpack.c.bf16 %v2721, %v2720
      %v2775 = vpack.c.bf16 %v2723, %v2722
      %v2776 = vpack.c.bf16 %v2725, %v2724
      %v2777 = vpack.c.bf16 %v2727, %v2726
      %v2778 = vpack.c.bf16 %v2729, %v2728
      %v2779 = vpack.c.bf16 %v2731, %v2730
      %v2780 = vpack.c.bf16 %v2733, %v2732
      %v2781 = vpack.c.bf16 %v2735, %v2734
      %v2782 = vpack.c.bf16 %v2737, %v2736
      %v2783 = vpack.c.bf16 %v2739, %v2738
      %v2784 = vpack.c.bf16 %v2741, %v2740
      %v2785 = vpack.c.bf16 %v2743, %v2742
      %v2786 = vpack.c.bf16 %v2745, %v2744
      %v2787 = vpack.c.bf16 %v2747, %v2746
      %v2788 = vpack.c.bf16 %v2749, %v2748
      %v2789 = vpack.c.bf16 %v2751, %v2750
      %v2790 = vpack.c.bf16 %v2753, %v2752
      %v2791 = vpack.c.bf16 %v2755, %v2754
      %v2792 = vpack.c.bf16 %v2757, %v2756
      %v2793 = vpack.c.bf16 %v2759, %v2758
      %v2794 = vpack.c.bf16 %v2761, %v2760
      %v2795 = vpack.c.bf16 %v2763, %v2762
      %v2796 = vld [vmem:[%s5] sm:$0xf]
      %v2797 = vld [vmem:[%s5 + $0x4] sm:$0xf]
      %v2798 = vld [vmem:[%s5 + $0x8] sm:$0xf]
      %v2799 = vld [vmem:[%s5 + $0xc] sm:$0xf]
      %v2800 = vld [vmem:[%s5 + $0x10] sm:$0xf]
      %v2801 = vld [vmem:[%s5 + $0x14] sm:$0xf]
      %v2802 = vld [vmem:[%s5 + $0x18] sm:$0xf]
      %v2803 = vld [vmem:[%s5 + $0x1c] sm:$0xf]
      %v2804 = vld [vmem:[%s5 + $0x20] sm:$0xf]
      %v2805 = vld [vmem:[%s5 + $0x24] sm:$0xf]
      %v2806 = vld [vmem:[%s5 + $0x28] sm:$0xf]
      %v2807 = vld [vmem:[%s5 + $0x2c] sm:$0xf]
      %v2808 = vld [vmem:[%s5 + $0x30] sm:$0xf]
      %v2809 = vld [vmem:[%s5 + $0x34] sm:$0xf]
      %v2810 = vld [vmem:[%s5 + $0x38] sm:$0xf]
      %v2811 = vld [vmem:[%s5 + $0x3c] sm:$0xf]
      %v2828 = vunpack.c.l.b16 %v2796
      %v2829 = vunpack.c.l.b16 %v2797
      %v2830 = vunpack.c.l.b16 %v2798
      %v2831 = vunpack.c.l.b16 %v2799
      %v2832 = vunpack.c.l.b16 %v2800
      %v2833 = vunpack.c.l.b16 %v2801
      %v2834 = vunpack.c.l.b16 %v2802
      %v2835 = vunpack.c.l.b16 %v2803
      %v2836 = vunpack.c.l.b16 %v2804
      %v2837 = vunpack.c.l.b16 %v2805
      %v2838 = vunpack.c.l.b16 %v2806
      %v2839 = vunpack.c.l.b16 %v2807
      %v2840 = vunpack.c.l.b16 %v2808
      %v2841 = vunpack.c.l.b16 %v2809
      %v2842 = vunpack.c.l.b16 %v2810
      %v2843 = vunpack.c.l.b16 %v2811
      %v2844 = vpack.c.b16 %v2829, %v2828
      %v2845 = vpack.c.b16 %v2831, %v2830
      %v2846 = vpack.c.b16 %v2833, %v2832
      %v2847 = vpack.c.b16 %v2835, %v2834
      %v2848 = vpack.c.b16 %v2837, %v2836
      %v2849 = vpack.c.b16 %v2839, %v2838
      %v2850 = vpack.c.b16 %v2841, %v2840
      %v2851 = vpack.c.b16 %v2843, %v2842
      %2860 = vmatprep.subr.bf16.mxu0 0
      %2861 = vmatpush1.bf16.msra.mxu0 %v2844
      %2862 = vmatprep.subr.bf16.mxu0 0
      %2863 = vmatpush1.bf16.msra.mxu0 %v2845
      %2864 = vmatprep.subr.bf16.mxu0 0
      %2865 = vmatpush1.bf16.msra.mxu0 %v2846
      %2866 = vmatprep.subr.bf16.mxu0 0
      %2867 = vmatpush1.bf16.msra.mxu0 %v2847
      %2868 = vmatprep.subr.bf16.mxu0 0
      %2869 = vmatpush1.bf16.msra.mxu0 %v2848
      %2870 = vmatprep.subr.bf16.mxu0 0
      %2871 = vmatpush1.bf16.msra.mxu0 %v2849
      %2872 = vmatprep.subr.bf16.mxu0 0
      %2873 = vmatpush1.bf16.msra.mxu0 %v2850
      %2874 = vmatprep.subr.bf16.mxu0 0
      %2875 = vmatpush1.bf16.msra.mxu0 %v2851
      %2876 = vmatprep.subr.bf16.mxu0 0
      %2877 = vmatpush1.bf16.msra.mxu0 0
      %2878 = vmatprep.subr.bf16.mxu0 0
      %2879 = vmatpush1.bf16.msra.mxu0 0
      %2880 = vmatprep.subr.bf16.mxu0 0
      %2881 = vmatpush1.bf16.msra.mxu0 0
      %2882 = vmatprep.subr.bf16.mxu0 0
      %2883 = vmatpush1.bf16.msra.mxu0 0
      %2884 = vmatprep.subr.bf16.mxu0 0
      %2885 = vmatpush1.bf16.msra.mxu0 0
      %2886 = vmatprep.subr.bf16.mxu0 0
      %2887 = vmatpush1.bf16.msra.mxu0 0
      %2888 = vmatprep.subr.bf16.mxu0 0
      %2889 = vmatpush1.bf16.msra.mxu0 0
      %2890 = vmatprep.subr.bf16.mxu0 0
      %2891 = vmatpush1.bf16.msra.mxu0 0
      %2892 = vmatprep.mubr.bf16.mxu0 0
      %2893 = vmatmul.mubr.bf16.gmra.mrb[0].mxu0 %v2764
      %v2894 = vpop.f32.mrb[0].mxu0
      %v2895 = vadd.f32 0.0, %v2894
      %v2896 = vpop.f32.mrb[0].mxu0
      %v2897 = vpop.f32.mrb[0].mxu0
      %v2898 = vadd.f32 0.0, %v2897
      %v2899 = vpop.f32.mrb[0].mxu0
      %2900 = vmatprep.mubr.bf16.mxu0 0
      %2901 = vmatmul.mubr.bf16.gmra.mrb[0].mxu0 %v2765
      %v2902 = vpop.f32.mrb[0].mxu0
      %v2903 = vadd.f32 0.0, %v2902
      %v2904 = vpop.f32.mrb[0].mxu0
      %v2905 = vpop.f32.mrb[0].mxu0
      %v2906 = vadd.f32 0.0, %v2905
      %v2907 = vpop.f32.mrb[0].mxu0
      %2908 = vmatprep.mubr.bf16.mxu0 0
      %2909 = vmatmul.mubr.bf16.gmra.mrb[0].mxu0 %v2766
      %v2910 = vpop.f32.mrb[0].mxu0
      %v2911 = vadd.f32 0.0, %v2910
      %v2912 = vpop.f32.mrb[0].mxu0
      %v2913 = vpop.f32.mrb[0].mxu0
      %v2914 = vadd.f32 0.0, %v2913
      %v2915 = vpop.f32.mrb[0].mxu0
      %2916 = vmatprep.mubr.bf16.mxu0 0
      %2917 = vmatmul.mubr.bf16.gmra.mrb[0].mxu0 %v2767
      %v2918 = vpop.f32.mrb[0].mxu0
      %v2919 = vadd.f32 0.0, %v2918
      %v2920 = vpop.f32.mrb[0].mxu0
      %v2921 = vpop.f32.mrb[0].mxu0
      %v2922 = vadd.f32 0.0, %v2921
      %v2923 = vpop.f32.mrb[0].mxu0
      %2924 = vmatprep.mubr.bf16.mxu0 0
      %2925 = vmatmul.mubr.bf16.gmra.mrb[0].mxu0 %v2768
      %v2926 = vpop.f32.mrb[0].mxu0
      %v2927 = vadd.f32 0.0, %v2926
      %v2928 = vpop.f32.mrb[0].mxu0
      %v2929 = vpop.f32.mrb[0].mxu0
      %v2930 = vadd.f32 0.0, %v2929
      %v2931 = vpop.f32.mrb[0].mxu0
      %2932 = vmatprep.mubr.bf16.mxu0 0
      %2933 = vmatmul.mubr.bf16.gmra.mrb[0].mxu0 %v2769
      %v2934 = vpop.f32.mrb[0].mxu0
      %v2935 = vadd.f32 0.0, %v2934
      %v2936 = vpop.f32.mrb[0].mxu0
      %v2937 = vpop.f32.mrb[0].mxu0
      %v2938 = vadd.f32 0.0, %v2937
      %v2939 = vpop.f32.mrb[0].mxu0
      %2940 = vmatprep.mubr.bf16.mxu0 0
      %2941 = vmatmul.mubr.bf16.gmra.mrb[0].mxu0 %v2770
      %v2942 = vpop.f32.mrb[0].mxu0
      %v2943 = vadd.f32 0.0, %v2942
      %v2944 = vpop.f32.mrb[0].mxu0
      %v2945 = vpop.f32.mrb[0].mxu0
      %v2946 = vadd.f32 0.0, %v2945
      %v2947 = vpop.f32.mrb[0].mxu0
      %2948 = vmatprep.mubr.bf16.mxu0 0
      %2949 = vmatmul.mubr.bf16.gmra.mrb[0].mxu0 %v2771
      %v2950 = vpop.f32.mrb[0].mxu0
      %v2951 = vadd.f32 0.0, %v2950
      %v2952 = vpop.f32.mrb[0].mxu0
      %v2953 = vpop.f32.mrb[0].mxu0
      %v2954 = vadd.f32 0.0, %v2953
      %v2955 = vpop.f32.mrb[0].mxu0
      %2956 = vmatprep.mubr.bf16.mxu0 0
      %2957 = vmatmul.mubr.bf16.gmra.mrb[0].mxu0 %v2772
      %v2958 = vpop.f32.mrb[0].mxu0
      %v2959 = vadd.f32 0.0, %v2958
      %v2960 = vpop.f32.mrb[0].mxu0
      %v2961 = vpop.f32.mrb[0].mxu0
      %v2962 = vadd.f32 0.0, %v2961
      %v2963 = vpop.f32.mrb[0].mxu0
      %2964 = vmatprep.mubr.bf16.mxu0 0
      %2965 = vmatmul.mubr.bf16.gmra.mrb[0].mxu0 %v2773
      %v2966 = vpop.f32.mrb[0].mxu0
      %v2967 = vadd.f32 0.0, %v2966
      %v2968 = vpop.f32.mrb[0].mxu0
      %v2969 = vpop.f32.mrb[0].mxu0
      %v2970 = vadd.f32 0.0, %v2969
      %v2971 = vpop.f32.mrb[0].mxu0
      %2972 = vmatprep.mubr.bf16.mxu0 0
      %2973 = vmatmul.mubr.bf16.gmra.mrb[0].mxu0 %v2774
      %v2974 = vpop.f32.mrb[0].mxu0
      %v2975 = vadd.f32 0.0, %v2974
      %v2976 = vpop.f32.mrb[0].mxu0
      %v2977 = vpop.f32.mrb[0].mxu0
      %v2978 = vadd.f32 0.0, %v2977
      %v2979 = vpop.f32.mrb[0].mxu0
      %2980 = vmatprep.mubr.bf16.mxu0 0
      %2981 = vmatmul.mubr.bf16.gmra.mrb[0].mxu0 %v2775
      %v2982 = vpop.f32.mrb[0].mxu0
      %v2983 = vadd.f32 0.0, %v2982
      %v2984 = vpop.f32.mrb[0].mxu0
      %v2985 = vpop.f32.mrb[0].mxu0
      %v2986 = vadd.f32 0.0, %v2985
      %v2987 = vpop.f32.mrb[0].mxu0
      %2988 = vmatprep.mubr.bf16.mxu0 0
      %2989 = vmatmul.mubr.bf16.gmra.mrb[0].mxu0 %v2776
      %v2990 = vpop.f32.mrb[0].mxu0
      %v2991 = vadd.f32 0.0, %v2990
      %v2992 = vpop.f32.mrb[0].mxu0
      %v2993 = vpop.f32.mrb[0].mxu0
      %v2994 = vadd.f32 0.0, %v2993
      %v2995 = vpop.f32.mrb[0].mxu0
      %2996 = vmatprep.mubr.bf16.mxu0 0
      %2997 = vmatmul.mubr.bf16.gmra.mrb[0].mxu0 %v2777
      %v2998 = vpop.f32.mrb[0].mxu0
      %v2999 = vadd.f32 0.0, %v2998
      %v3000 = vpop.f32.mrb[0].mxu0
      %v3001 = vpop.f32.mrb[0].mxu0
      %v3002 = vadd.f32 0.0, %v3001
      %v3003 = vpop.f32.mrb[0].mxu0
      %3004 = vmatprep.mubr.bf16.mxu0 0
      %3005 = vmatmul.mubr.bf16.gmra.mrb[0].mxu0 %v2778
      %v3006 = vpop.f32.mrb[0].mxu0
      %v3007 = vadd.f32 0.0, %v3006
      %v3008 = vpop.f32.mrb[0].mxu0
      %v3009 = vpop.f32.mrb[0].mxu0
      %v3010 = vadd.f32 0.0, %v3009
      %v3011 = vpop.f32.mrb[0].mxu0
      %3012 = vmatprep.mubr.bf16.mxu0 0
      %3013 = vmatmul.mubr.bf16.gmra.mrb[0].mxu0 %v2779
      %v3014 = vpop.f32.mrb[0].mxu0
      %v3015 = vadd.f32 0.0, %v3014
      %v3016 = vpop.f32.mrb[0].mxu0
      %v3017 = vpop.f32.mrb[0].mxu0
      %v3018 = vadd.f32 0.0, %v3017
      %v3019 = vpop.f32.mrb[0].mxu0
      %3020 = vmatprep.mubr.bf16.mxu0 0
      %3021 = vmatmul.mubr.bf16.gmra.mrb[0].mxu0 %v2780
      %v3022 = vpop.f32.mrb[0].mxu0
      %v3023 = vadd.f32 0.0, %v3022
      %v3024 = vpop.f32.mrb[0].mxu0
      %v3025 = vpop.f32.mrb[0].mxu0
      %v3026 = vadd.f32 0.0, %v3025
      %v3027 = vpop.f32.mrb[0].mxu0
      %3028 = vmatprep.mubr.bf16.mxu0 0
      %3029 = vmatmul.mubr.bf16.gmra.mrb[0].mxu0 %v2781
      %v3030 = vpop.f32.mrb[0].mxu0
      %v3031 = vadd.f32 0.0, %v3030
      %v3032 = vpop.f32.mrb[0].mxu0
      %v3033 = vpop.f32.mrb[0].mxu0
      %v3034 = vadd.f32 0.0, %v3033
      %v3035 = vpop.f32.mrb[0].mxu0
      %3036 = vmatprep.mubr.bf16.mxu0 0
      %3037 = vmatmul.mubr.bf16.gmra.mrb[0].mxu0 %v2782
      %v3038 = vpop.f32.mrb[0].mxu0
      %v3039 = vadd.f32 0.0, %v3038
      %v3040 = vpop.f32.mrb[0].mxu0
      %v3041 = vpop.f32.mrb[0].mxu0
      %v3042 = vadd.f32 0.0, %v3041
      %v3043 = vpop.f32.mrb[0].mxu0
      %3044 = vmatprep.mubr.bf16.mxu0 0
      %3045 = vmatmul.mubr.bf16.gmra.mrb[0].mxu0 %v2783
      %v3046 = vpop.f32.mrb[0].mxu0
      %v3047 = vadd.f32 0.0, %v3046
      %v3048 = vpop.f32.mrb[0].mxu0
      %v3049 = vpop.f32.mrb[0].mxu0
      %v3050 = vadd.f32 0.0, %v3049
      %v3051 = vpop.f32.mrb[0].mxu0
      %3052 = vmatprep.mubr.bf16.mxu0 0
      %3053 = vmatmul.mubr.bf16.gmra.mrb[0].mxu0 %v2784
      %v3054 = vpop.f32.mrb[0].mxu0
      %v3055 = vadd.f32 0.0, %v3054
      %v3056 = vpop.f32.mrb[0].mxu0
      %v3057 = vpop.f32.mrb[0].mxu0
      %v3058 = vadd.f32 0.0, %v3057
      %v3059 = vpop.f32.mrb[0].mxu0
      %3060 = vmatprep.mubr.bf16.mxu0 0
      %3061 = vmatmul.mubr.bf16.gmra.mrb[0].mxu0 %v2785
      %v3062 = vpop.f32.mrb[0].mxu0
      %v3063 = vadd.f32 0.0, %v3062
      %v3064 = vpop.f32.mrb[0].mxu0
      %v3065 = vpop.f32.mrb[0].mxu0
      %v3066 = vadd.f32 0.0, %v3065
      %v3067 = vpop.f32.mrb[0].mxu0
      %3068 = vmatprep.mubr.bf16.mxu0 0
      %3069 = vmatmul.mubr.bf16.gmra.mrb[0].mxu0 %v2786
      %v3070 = vpop.f32.mrb[0].mxu0
      %v3071 = vadd.f32 0.0, %v3070
      %v3072 = vpop.f32.mrb[0].mxu0
      %v3073 = vpop.f32.mrb[0].mxu0
      %v3074 = vadd.f32 0.0, %v3073
      %v3075 = vpop.f32.mrb[0].mxu0
      %3076 = vmatprep.mubr.bf16.mxu0 0
      %3077 = vmatmul.mubr.bf16.gmra.mrb[0].mxu0 %v2787
      %v3078 = vpop.f32.mrb[0].mxu0
      %v3079 = vadd.f32 0.0, %v3078
      %v3080 = vpop.f32.mrb[0].mxu0
      %v3081 = vpop.f32.mrb[0].mxu0
      %v3082 = vadd.f32 0.0, %v3081
      %v3083 = vpop.f32.mrb[0].mxu0
      %3084 = vmatprep.mubr.bf16.mxu0 0
      %3085 = vmatmul.mubr.bf16.gmra.mrb[0].mxu0 %v2788
      %v3086 = vpop.f32.mrb[0].mxu0
      %v3087 = vadd.f32 0.0, %v3086
      %v3088 = vpop.f32.mrb[0].mxu0
      %v3089 = vpop.f32.mrb[0].mxu0
      %v3090 = vadd.f32 0.0, %v3089
      %v3091 = vpop.f32.mrb[0].mxu0
      %3092 = vmatprep.mubr.bf16.mxu0 0
      %3093 = vmatmul.mubr.bf16.gmra.mrb[0].mxu0 %v2789
      %v3094 = vpop.f32.mrb[0].mxu0
      %v3095 = vadd.f32 0.0, %v3094
      %v3096 = vpop.f32.mrb[0].mxu0
      %v3097 = vpop.f32.mrb[0].mxu0
      %v3098 = vadd.f32 0.0, %v3097
      %v3099 = vpop.f32.mrb[0].mxu0
      %3100 = vmatprep.mubr.bf16.mxu0 0
      %3101 = vmatmul.mubr.bf16.gmra.mrb[0].mxu0 %v2790
      %v3102 = vpop.f32.mrb[0].mxu0
      %v3103 = vadd.f32 0.0, %v3102
      %v3104 = vpop.f32.mrb[0].mxu0
      %v3105 = vpop.f32.mrb[0].mxu0
      %v3106 = vadd.f32 0.0, %v3105
      %v3107 = vpop.f32.mrb[0].mxu0
      %3108 = vmatprep.mubr.bf16.mxu0 0
      %3109 = vmatmul.mubr.bf16.gmra.mrb[0].mxu0 %v2791
      %v3110 = vpop.f32.mrb[0].mxu0
      %v3111 = vadd.f32 0.0, %v3110
      %v3112 = vpop.f32.mrb[0].mxu0
      %v3113 = vpop.f32.mrb[0].mxu0
      %v3114 = vadd.f32 0.0, %v3113
      %v3115 = vpop.f32.mrb[0].mxu0
      %3116 = vmatprep.mubr.bf16.mxu0 0
      %3117 = vmatmul.mubr.bf16.gmra.mrb[0].mxu0 %v2792
      %v3118 = vpop.f32.mrb[0].mxu0
      %v3119 = vadd.f32 0.0, %v3118
      %v3120 = vpop.f32.mrb[0].mxu0
      %v3121 = vpop.f32.mrb[0].mxu0
      %v3122 = vadd.f32 0.0, %v3121
      %v3123 = vpop.f32.mrb[0].mxu0
      %3124 = vmatprep.mubr.bf16.mxu0 0
      %3125 = vmatmul.mubr.bf16.gmra.mrb[0].mxu0 %v2793
      %v3126 = vpop.f32.mrb[0].mxu0
      %v3127 = vadd.f32 0.0, %v3126
      %v3128 = vpop.f32.mrb[0].mxu0
      %v3129 = vpop.f32.mrb[0].mxu0
      %v3130 = vadd.f32 0.0, %v3129
      %v3131 = vpop.f32.mrb[0].mxu0
      %3132 = vmatprep.mubr.bf16.mxu0 0
      %3133 = vmatmul.mubr.bf16.gmra.mrb[0].mxu0 %v2794
      %v3134 = vpop.f32.mrb[0].mxu0
      %v3135 = vadd.f32 0.0, %v3134
      %v3136 = vpop.f32.mrb[0].mxu0
      %v3137 = vpop.f32.mrb[0].mxu0
      %v3138 = vadd.f32 0.0, %v3137
      %v3139 = vpop.f32.mrb[0].mxu0
      %3140 = vmatprep.mubr.bf16.mxu0 0
      %3141 = vmatmul.mubr.bf16.gmra.mrb[0].mxu0 %v2795
      %v3142 = vpop.f32.mrb[0].mxu0
      %v3143 = vadd.f32 0.0, %v3142
      %v3144 = vpop.f32.mrb[0].mxu0
      %v3145 = vpop.f32.mrb[0].mxu0
      %v3146 = vadd.f32 0.0, %v3145
      %v3147 = vpop.f32.mrb[0].mxu0
      %3148 = vdwg.mxu0
      %v3149 = vadd.f32 %v2251, %v2895
      %v3150 = vadd.f32 %v2252, %v2898
      %v3151 = vadd.f32 %v2253, %v2903
      %v3152 = vadd.f32 %v2254, %v2906
      %v3153 = vadd.f32 %v2255, %v2911
      %v3154 = vadd.f32 %v2256, %v2914
      %v3155 = vadd.f32 %v2257, %v2919
      %v3156 = vadd.f32 %v2258, %v2922
      %v3157 = vadd.f32 %v2259, %v2927
      %v3158 = vadd.f32 %v2260, %v2930
      %v3159 = vadd.f32 %v2261, %v2935
      %v3160 = vadd.f32 %v2262, %v2938
      %v3161 = vadd.f32 %v2263, %v2943
      %v3162 = vadd.f32 %v2264, %v2946
      %v3163 = vadd.f32 %v2265, %v2951
      %v3164 = vadd.f32 %v2266, %v2954
      %v3165 = vadd.f32 %v2267, %v2959
      %v3166 = vadd.f32 %v2268, %v2962
      %v3167 = vadd.f32 %v2269, %v2967
      %v3168 = vadd.f32 %v2270, %v2970
      %v3169 = vadd.f32 %v2271, %v2975
      %v3170 = vadd.f32 %v2272, %v2978
      %v3171 = vadd.f32 %v2273, %v2983
      %v3172 = vadd.f32 %v2274, %v2986
      %v3173 = vadd.f32 %v2275, %v2991
      %v3174 = vadd.f32 %v2276, %v2994
      %v3175 = vadd.f32 %v2277, %v2999
      %v3176 = vadd.f32 %v2278, %v3002
      %v3177 = vadd.f32 %v2279, %v3007
      %v3178 = vadd.f32 %v2280, %v3010
      %v3179 = vadd.f32 %v2281, %v3015
      %v3180 = vadd.f32 %v2282, %v3018
      %v3181 = vadd.f32 %v2283, %v3023
      %v3182 = vadd.f32 %v2284, %v3026
      %v3183 = vadd.f32 %v2285, %v3031
      %v3184 = vadd.f32 %v2286, %v3034
      %v3185 = vadd.f32 %v2287, %v3039
      %v3186 = vadd.f32 %v2288, %v3042
      %v3187 = vadd.f32 %v2289, %v3047
      %v3188 = vadd.f32 %v2290, %v3050
      %v3189 = vadd.f32 %v2291, %v3055
      %v3190 = vadd.f32 %v2292, %v3058
      %v3191 = vadd.f32 %v2293, %v3063
      %v3192 = vadd.f32 %v2294, %v3066
      %v3193 = vadd.f32 %v2295, %v3071
      %v3194 = vadd.f32 %v2296, %v3074
      %v3195 = vadd.f32 %v2297, %v3079
      %v3196 = vadd.f32 %v2298, %v3082
      %v3197 = vadd.f32 %v2299, %v3087
      %v3198 = vadd.f32 %v2300, %v3090
      %v3199 = vadd.f32 %v2301, %v3095
      %v3200 = vadd.f32 %v2302, %v3098
      %v3201 = vadd.f32 %v2303, %v3103
      %v3202 = vadd.f32 %v2304, %v3106
      %v3203 = vadd.f32 %v2305, %v3111
      %v3204 = vadd.f32 %v2306, %v3114
      %v3205 = vadd.f32 %v2307, %v3119
      %v3206 = vadd.f32 %v2308, %v3122
      %v3207 = vadd.f32 %v2309, %v3127
      %v3208 = vadd.f32 %v2310, %v3130
      %v3209 = vadd.f32 %v2311, %v3135
      %v3210 = vadd.f32 %v2312, %v3138
      %v3211 = vadd.f32 %v2313, %v3143
      %v3212 = vadd.f32 %v2314, %v3146
      %v3213 = vmax.f32 %v3149, 0.0
      %v3214 = vmax.f32 %v3150, 0.0
      %v3215 = vmax.f32 %v3151, 0.0
      %v3216 = vmax.f32 %v3152, 0.0
      %v3217 = vmax.f32 %v3153, 0.0
      %v3218 = vmax.f32 %v3154, 0.0
      %v3219 = vmax.f32 %v3155, 0.0
      %v3220 = vmax.f32 %v3156, 0.0
      %v3221 = vmax.f32 %v3157, 0.0
      %v3222 = vmax.f32 %v3158, 0.0
      %v3223 = vmax.f32 %v3159, 0.0
      %v3224 = vmax.f32 %v3160, 0.0
      %v3225 = vmax.f32 %v3161, 0.0
      %v3226 = vmax.f32 %v3162, 0.0
      %v3227 = vmax.f32 %v3163, 0.0
      %v3228 = vmax.f32 %v3164, 0.0
      %v3229 = vmax.f32 %v3165, 0.0
      %v3230 = vmax.f32 %v3166, 0.0
      %v3231 = vmax.f32 %v3167, 0.0
      %v3232 = vmax.f32 %v3168, 0.0
      %v3233 = vmax.f32 %v3169, 0.0
      %v3234 = vmax.f32 %v3170, 0.0
      %v3235 = vmax.f32 %v3171, 0.0
      %v3236 = vmax.f32 %v3172, 0.0
      %v3237 = vmax.f32 %v3173, 0.0
      %v3238 = vmax.f32 %v3174, 0.0
      %v3239 = vmax.f32 %v3175, 0.0
      %v3240 = vmax.f32 %v3176, 0.0
      %v3241 = vmax.f32 %v3177, 0.0
      %v3242 = vmax.f32 %v3178, 0.0
      %v3243 = vmax.f32 %v3179, 0.0
      %v3244 = vmax.f32 %v3180, 0.0
      %v3245 = vmax.f32 %v3181, 0.0
      %v3246 = vmax.f32 %v3182, 0.0
      %v3247 = vmax.f32 %v3183, 0.0
      %v3248 = vmax.f32 %v3184, 0.0
      %v3249 = vmax.f32 %v3185, 0.0
      %v3250 = vmax.f32 %v3186, 0.0
      %v3251 = vmax.f32 %v3187, 0.0
      %v3252 = vmax.f32 %v3188, 0.0
      %v3253 = vmax.f32 %v3189, 0.0
      %v3254 = vmax.f32 %v3190, 0.0
      %v3255 = vmax.f32 %v3191, 0.0
      %v3256 = vmax.f32 %v3192, 0.0
      %v3257 = vmax.f32 %v3193, 0.0
      %v3258 = vmax.f32 %v3194, 0.0
      %v3259 = vmax.f32 %v3195, 0.0
      %v3260 = vmax.f32 %v3196, 0.0
      %v3261 = vmax.f32 %v3197, 0.0
      %v3262 = vmax.f32 %v3198, 0.0
      %v3263 = vmax.f32 %v3199, 0.0
      %v3264 = vmax.f32 %v3200, 0.0
      %v3265 = vmax.f32 %v3201, 0.0
      %v3266 = vmax.f32 %v3202, 0.0
      %v3267 = vmax.f32 %v3203, 0.0
      %v3268 = vmax.f32 %v3204, 0.0
      %v3269 = vmax.f32 %v3205, 0.0
      %v3270 = vmax.f32 %v3206, 0.0
      %v3271 = vmax.f32 %v3207, 0.0
      %v3272 = vmax.f32 %v3208, 0.0
      %v3273 = vmax.f32 %v3209, 0.0
      %v3274 = vmax.f32 %v3210, 0.0
      %v3275 = vmax.f32 %v3211, 0.0
      %v3276 = vmax.f32 %v3212, 0.0
      %v3277 = vpack.c.bf16 %v3214, %v3213
      %v3278 = vpack.c.bf16 %v3216, %v3215
      %v3279 = vpack.c.bf16 %v3218, %v3217
      %v3280 = vpack.c.bf16 %v3220, %v3219
      %v3281 = vpack.c.bf16 %v3222, %v3221
      %v3282 = vpack.c.bf16 %v3224, %v3223
      %v3283 = vpack.c.bf16 %v3226, %v3225
      %v3284 = vpack.c.bf16 %v3228, %v3227
      %v3285 = vpack.c.bf16 %v3230, %v3229
      %v3286 = vpack.c.bf16 %v3232, %v3231
      %v3287 = vpack.c.bf16 %v3234, %v3233
      %v3288 = vpack.c.bf16 %v3236, %v3235
      %v3289 = vpack.c.bf16 %v3238, %v3237
      %v3290 = vpack.c.bf16 %v3240, %v3239
      %v3291 = vpack.c.bf16 %v3242, %v3241
      %v3292 = vpack.c.bf16 %v3244, %v3243
      %v3293 = vpack.c.bf16 %v3246, %v3245
      %v3294 = vpack.c.bf16 %v3248, %v3247
      %v3295 = vpack.c.bf16 %v3250, %v3249
      %v3296 = vpack.c.bf16 %v3252, %v3251
      %v3297 = vpack.c.bf16 %v3254, %v3253
      %v3298 = vpack.c.bf16 %v3256, %v3255
      %v3299 = vpack.c.bf16 %v3258, %v3257
      %v3300 = vpack.c.bf16 %v3260, %v3259
      %v3301 = vpack.c.bf16 %v3262, %v3261
      %v3302 = vpack.c.bf16 %v3264, %v3263
      %v3303 = vpack.c.bf16 %v3266, %v3265
      %v3304 = vpack.c.bf16 %v3268, %v3267
      %v3305 = vpack.c.bf16 %v3270, %v3269
      %v3306 = vpack.c.bf16 %v3272, %v3271
      %v3307 = vpack.c.bf16 %v3274, %v3273
      %v3308 = vpack.c.bf16 %v3276, %v3275
      %v3309 = vld [vmem:[%s6] sm:$0xf]
      %v3310 = vld [vmem:[%s6 + $0x4] sm:$0xf]
      %v3311 = vld [vmem:[%s6 + $0x8] sm:$0xf]
      %v3312 = vld [vmem:[%s6 + $0xc] sm:$0xf]
      %v3313 = vld [vmem:[%s6 + $0x10] sm:$0xf]
      %v3314 = vld [vmem:[%s6 + $0x14] sm:$0xf]
      %v3315 = vld [vmem:[%s6 + $0x18] sm:$0xf]
      %v3316 = vld [vmem:[%s6 + $0x1c] sm:$0xf]
      %v3317 = vld [vmem:[%s6 + $0x20] sm:$0xf]
      %v3318 = vld [vmem:[%s6 + $0x24] sm:$0xf]
      %v3319 = vld [vmem:[%s6 + $0x28] sm:$0xf]
      %v3320 = vld [vmem:[%s6 + $0x2c] sm:$0xf]
      %v3321 = vld [vmem:[%s6 + $0x30] sm:$0xf]
      %v3322 = vld [vmem:[%s6 + $0x34] sm:$0xf]
      %v3323 = vld [vmem:[%s6 + $0x38] sm:$0xf]
      %v3324 = vld [vmem:[%s6 + $0x3c] sm:$0xf]
      %v3341 = vunpack.c.l.b16 %v3309
      %v3342 = vunpack.c.l.b16 %v3310
      %v3343 = vunpack.c.l.b16 %v3311
      %v3344 = vunpack.c.l.b16 %v3312
      %v3345 = vunpack.c.l.b16 %v3313
      %v3346 = vunpack.c.l.b16 %v3314
      %v3347 = vunpack.c.l.b16 %v3315
      %v3348 = vunpack.c.l.b16 %v3316
      %v3349 = vunpack.c.l.b16 %v3317
      %v3350 = vunpack.c.l.b16 %v3318
      %v3351 = vunpack.c.l.b16 %v3319
      %v3352 = vunpack.c.l.b16 %v3320
      %v3353 = vunpack.c.l.b16 %v3321
      %v3354 = vunpack.c.l.b16 %v3322
      %v3355 = vunpack.c.l.b16 %v3323
      %v3356 = vunpack.c.l.b16 %v3324
      %v3357 = vpack.c.b16 %v3342, %v3341
      %v3358 = vpack.c.b16 %v3344, %v3343
      %v3359 = vpack.c.b16 %v3346, %v3345
      %v3360 = vpack.c.b16 %v3348, %v3347
      %v3361 = vpack.c.b16 %v3350, %v3349
      %v3362 = vpack.c.b16 %v3352, %v3351
      %v3363 = vpack.c.b16 %v3354, %v3353
      %v3364 = vpack.c.b16 %v3356, %v3355
      %3373 = vmatprep.subr.bf16.mxu0 0
      %3374 = vmatpush1.bf16.msra.mxu0 %v3357
      %3375 = vmatprep.subr.bf16.mxu0 0
      %3376 = vmatpush1.bf16.msra.mxu0 %v3358
      %3377 = vmatprep.subr.bf16.mxu0 0
      %3378 = vmatpush1.bf16.msra.mxu0 %v3359
      %3379 = vmatprep.subr.bf16.mxu0 0
      %3380 = vmatpush1.bf16.msra.mxu0 %v3360
      %3381 = vmatprep.subr.bf16.mxu0 0
      %3382 = vmatpush1.bf16.msra.mxu0 %v3361
      %3383 = vmatprep.subr.bf16.mxu0 0
      %3384 = vmatpush1.bf16.msra.mxu0 %v3362
      %3385 = vmatprep.subr.bf16.mxu0 0
      %3386 = vmatpush1.bf16.msra.mxu0 %v3363
      %3387 = vmatprep.subr.bf16.mxu0 0
      %3388 = vmatpush1.bf16.msra.mxu0 %v3364
      %3389 = vmatprep.subr.bf16.mxu0 0
      %3390 = vmatpush1.bf16.msra.mxu0 0
      %3391 = vmatprep.subr.bf16.mxu0 0
      %3392 = vmatpush1.bf16.msra.mxu0 0
      %3393 = vmatprep.subr.bf16.mxu0 0
      %3394 = vmatpush1.bf16.msra.mxu0 0
      %3395 = vmatprep.subr.bf16.mxu0 0
      %3396 = vmatpush1.bf16.msra.mxu0 0
      %3397 = vmatprep.subr.bf16.mxu0 0
      %3398 = vmatpush1.bf16.msra.mxu0 0
      %3399 = vmatprep.subr.bf16.mxu0 0
      %3400 = vmatpush1.bf16.msra.mxu0 0
      %3401 = vmatprep.subr.bf16.mxu0 0
      %3402 = vmatpush1.bf16.msra.mxu0 0
      %3403 = vmatprep.subr.bf16.mxu0 0
      %3404 = vmatpush1.bf16.msra.mxu0 0
      %3405 = vmatprep.mubr.bf16.mxu0 0
      %3406 = vmatmul.mubr.bf16.gmra.mrb[0].mxu0 %v3277
      %v3407 = vpop.f32.mrb[0].mxu0
      %v3408 = vadd.f32 0.0, %v3407
      %v3409 = vpop.f32.mrb[0].mxu0
      %v3410 = vpop.f32.mrb[0].mxu0
      %v3411 = vadd.f32 0.0, %v3410
      %v3412 = vpop.f32.mrb[0].mxu0
      %3413 = vmatprep.mubr.bf16.mxu0 0
      %3414 = vmatmul.mubr.bf16.gmra.mrb[0].mxu0 %v3278
      %v3415 = vpop.f32.mrb[0].mxu0
      %v3416 = vadd.f32 0.0, %v3415
      %v3417 = vpop.f32.mrb[0].mxu0
      %v3418 = vpop.f32.mrb[0].mxu0
      %v3419 = vadd.f32 0.0, %v3418
      %v3420 = vpop.f32.mrb[0].mxu0
      %3421 = vmatprep.mubr.bf16.mxu0 0
      %3422 = vmatmul.mubr.bf16.gmra.mrb[0].mxu0 %v3279
      %v3423 = vpop.f32.mrb[0].mxu0
      %v3424 = vadd.f32 0.0, %v3423
      %v3425 = vpop.f32.mrb[0].mxu0
      %v3426 = vpop.f32.mrb[0].mxu0
      %v3427 = vadd.f32 0.0, %v3426
      %v3428 = vpop.f32.mrb[0].mxu0
      %3429 = vmatprep.mubr.bf16.mxu0 0
      %3430 = vmatmul.mubr.bf16.gmra.mrb[0].mxu0 %v3280
      %v3431 = vpop.f32.mrb[0].mxu0
      %v3432 = vadd.f32 0.0, %v3431
      %v3433 = vpop.f32.mrb[0].mxu0
      %v3434 = vpop.f32.mrb[0].mxu0
      %v3435 = vadd.f32 0.0, %v3434
      %v3436 = vpop.f32.mrb[0].mxu0
      %3437 = vmatprep.mubr.bf16.mxu0 0
      %3438 = vmatmul.mubr.bf16.gmra.mrb[0].mxu0 %v3281
      %v3439 = vpop.f32.mrb[0].mxu0
      %v3440 = vadd.f32 0.0, %v3439
      %v3441 = vpop.f32.mrb[0].mxu0
      %v3442 = vpop.f32.mrb[0].mxu0
      %v3443 = vadd.f32 0.0, %v3442
      %v3444 = vpop.f32.mrb[0].mxu0
      %3445 = vmatprep.mubr.bf16.mxu0 0
      %3446 = vmatmul.mubr.bf16.gmra.mrb[0].mxu0 %v3282
      %v3447 = vpop.f32.mrb[0].mxu0
      %v3448 = vadd.f32 0.0, %v3447
      %v3449 = vpop.f32.mrb[0].mxu0
      %v3450 = vpop.f32.mrb[0].mxu0
      %v3451 = vadd.f32 0.0, %v3450
      %v3452 = vpop.f32.mrb[0].mxu0
      %3453 = vmatprep.mubr.bf16.mxu0 0
      %3454 = vmatmul.mubr.bf16.gmra.mrb[0].mxu0 %v3283
      %v3455 = vpop.f32.mrb[0].mxu0
      %v3456 = vadd.f32 0.0, %v3455
      %v3457 = vpop.f32.mrb[0].mxu0
      %v3458 = vpop.f32.mrb[0].mxu0
      %v3459 = vadd.f32 0.0, %v3458
      %v3460 = vpop.f32.mrb[0].mxu0
      %3461 = vmatprep.mubr.bf16.mxu0 0
      %3462 = vmatmul.mubr.bf16.gmra.mrb[0].mxu0 %v3284
      %v3463 = vpop.f32.mrb[0].mxu0
      %v3464 = vadd.f32 0.0, %v3463
      %v3465 = vpop.f32.mrb[0].mxu0
      %v3466 = vpop.f32.mrb[0].mxu0
      %v3467 = vadd.f32 0.0, %v3466
      %v3468 = vpop.f32.mrb[0].mxu0
      %3469 = vmatprep.mubr.bf16.mxu0 0
      %3470 = vmatmul.mubr.bf16.gmra.mrb[0].mxu0 %v3285
      %v3471 = vpop.f32.mrb[0].mxu0
      %v3472 = vadd.f32 0.0, %v3471
      %v3473 = vpop.f32.mrb[0].mxu0
      %v3474 = vpop.f32.mrb[0].mxu0
      %v3475 = vadd.f32 0.0, %v3474
      %v3476 = vpop.f32.mrb[0].mxu0
      %3477 = vmatprep.mubr.bf16.mxu0 0
      %3478 = vmatmul.mubr.bf16.gmra.mrb[0].mxu0 %v3286
      %v3479 = vpop.f32.mrb[0].mxu0
      %v3480 = vadd.f32 0.0, %v3479
      %v3481 = vpop.f32.mrb[0].mxu0
      %v3482 = vpop.f32.mrb[0].mxu0
      %v3483 = vadd.f32 0.0, %v3482
      %v3484 = vpop.f32.mrb[0].mxu0
      %3485 = vmatprep.mubr.bf16.mxu0 0
      %3486 = vmatmul.mubr.bf16.gmra.mrb[0].mxu0 %v3287
      %v3487 = vpop.f32.mrb[0].mxu0
      %v3488 = vadd.f32 0.0, %v3487
      %v3489 = vpop.f32.mrb[0].mxu0
      %v3490 = vpop.f32.mrb[0].mxu0
      %v3491 = vadd.f32 0.0, %v3490
      %v3492 = vpop.f32.mrb[0].mxu0
      %3493 = vmatprep.mubr.bf16.mxu0 0
      %3494 = vmatmul.mubr.bf16.gmra.mrb[0].mxu0 %v3288
      %v3495 = vpop.f32.mrb[0].mxu0
      %v3496 = vadd.f32 0.0, %v3495
      %v3497 = vpop.f32.mrb[0].mxu0
      %v3498 = vpop.f32.mrb[0].mxu0
      %v3499 = vadd.f32 0.0, %v3498
      %v3500 = vpop.f32.mrb[0].mxu0
      %3501 = vmatprep.mubr.bf16.mxu0 0
      %3502 = vmatmul.mubr.bf16.gmra.mrb[0].mxu0 %v3289
      %v3503 = vpop.f32.mrb[0].mxu0
      %v3504 = vadd.f32 0.0, %v3503
      %v3505 = vpop.f32.mrb[0].mxu0
      %v3506 = vpop.f32.mrb[0].mxu0
      %v3507 = vadd.f32 0.0, %v3506
      %v3508 = vpop.f32.mrb[0].mxu0
      %3509 = vmatprep.mubr.bf16.mxu0 0
      %3510 = vmatmul.mubr.bf16.gmra.mrb[0].mxu0 %v3290
      %v3511 = vpop.f32.mrb[0].mxu0
      %v3512 = vadd.f32 0.0, %v3511
      %v3513 = vpop.f32.mrb[0].mxu0
      %v3514 = vpop.f32.mrb[0].mxu0
      %v3515 = vadd.f32 0.0, %v3514
      %v3516 = vpop.f32.mrb[0].mxu0
      %3517 = vmatprep.mubr.bf16.mxu0 0
      %3518 = vmatmul.mubr.bf16.gmra.mrb[0].mxu0 %v3291
      %v3519 = vpop.f32.mrb[0].mxu0
      %v3520 = vadd.f32 0.0, %v3519
      %v3521 = vpop.f32.mrb[0].mxu0
      %v3522 = vpop.f32.mrb[0].mxu0
      %v3523 = vadd.f32 0.0, %v3522
      %v3524 = vpop.f32.mrb[0].mxu0
      %3525 = vmatprep.mubr.bf16.mxu0 0
      %3526 = vmatmul.mubr.bf16.gmra.mrb[0].mxu0 %v3292
      %v3527 = vpop.f32.mrb[0].mxu0
      %v3528 = vadd.f32 0.0, %v3527
      %v3529 = vpop.f32.mrb[0].mxu0
      %v3530 = vpop.f32.mrb[0].mxu0
      %v3531 = vadd.f32 0.0, %v3530
      %v3532 = vpop.f32.mrb[0].mxu0
      %3533 = vmatprep.mubr.bf16.mxu0 0
      %3534 = vmatmul.mubr.bf16.gmra.mrb[0].mxu0 %v3293
      %v3535 = vpop.f32.mrb[0].mxu0
      %v3536 = vadd.f32 0.0, %v3535
      %v3537 = vpop.f32.mrb[0].mxu0
      %v3538 = vpop.f32.mrb[0].mxu0
      %v3539 = vadd.f32 0.0, %v3538
      %v3540 = vpop.f32.mrb[0].mxu0
      %3541 = vmatprep.mubr.bf16.mxu0 0
      %3542 = vmatmul.mubr.bf16.gmra.mrb[0].mxu0 %v3294
      %v3543 = vpop.f32.mrb[0].mxu0
      %v3544 = vadd.f32 0.0, %v3543
      %v3545 = vpop.f32.mrb[0].mxu0
      %v3546 = vpop.f32.mrb[0].mxu0
      %v3547 = vadd.f32 0.0, %v3546
      %v3548 = vpop.f32.mrb[0].mxu0
      %3549 = vmatprep.mubr.bf16.mxu0 0
      %3550 = vmatmul.mubr.bf16.gmra.mrb[0].mxu0 %v3295
      %v3551 = vpop.f32.mrb[0].mxu0
      %v3552 = vadd.f32 0.0, %v3551
      %v3553 = vpop.f32.mrb[0].mxu0
      %v3554 = vpop.f32.mrb[0].mxu0
      %v3555 = vadd.f32 0.0, %v3554
      %v3556 = vpop.f32.mrb[0].mxu0
      %3557 = vmatprep.mubr.bf16.mxu0 0
      %3558 = vmatmul.mubr.bf16.gmra.mrb[0].mxu0 %v3296
      %v3559 = vpop.f32.mrb[0].mxu0
      %v3560 = vadd.f32 0.0, %v3559
      %v3561 = vpop.f32.mrb[0].mxu0
      %v3562 = vpop.f32.mrb[0].mxu0
      %v3563 = vadd.f32 0.0, %v3562
      %v3564 = vpop.f32.mrb[0].mxu0
      %3565 = vmatprep.mubr.bf16.mxu0 0
      %3566 = vmatmul.mubr.bf16.gmra.mrb[0].mxu0 %v3297
      %v3567 = vpop.f32.mrb[0].mxu0
      %v3568 = vadd.f32 0.0, %v3567
      %v3569 = vpop.f32.mrb[0].mxu0
      %v3570 = vpop.f32.mrb[0].mxu0
      %v3571 = vadd.f32 0.0, %v3570
      %v3572 = vpop.f32.mrb[0].mxu0
      %3573 = vmatprep.mubr.bf16.mxu0 0
      %3574 = vmatmul.mubr.bf16.gmra.mrb[0].mxu0 %v3298
      %v3575 = vpop.f32.mrb[0].mxu0
      %v3576 = vadd.f32 0.0, %v3575
      %v3577 = vpop.f32.mrb[0].mxu0
      %v3578 = vpop.f32.mrb[0].mxu0
      %v3579 = vadd.f32 0.0, %v3578
      %v3580 = vpop.f32.mrb[0].mxu0
      %3581 = vmatprep.mubr.bf16.mxu0 0
      %3582 = vmatmul.mubr.bf16.gmra.mrb[0].mxu0 %v3299
      %v3583 = vpop.f32.mrb[0].mxu0
      %v3584 = vadd.f32 0.0, %v3583
      %v3585 = vpop.f32.mrb[0].mxu0
      %v3586 = vpop.f32.mrb[0].mxu0
      %v3587 = vadd.f32 0.0, %v3586
      %v3588 = vpop.f32.mrb[0].mxu0
      %3589 = vmatprep.mubr.bf16.mxu0 0
      %3590 = vmatmul.mubr.bf16.gmra.mrb[0].mxu0 %v3300
      %v3591 = vpop.f32.mrb[0].mxu0
      %v3592 = vadd.f32 0.0, %v3591
      %v3593 = vpop.f32.mrb[0].mxu0
      %v3594 = vpop.f32.mrb[0].mxu0
      %v3595 = vadd.f32 0.0, %v3594
      %v3596 = vpop.f32.mrb[0].mxu0
      %3597 = vmatprep.mubr.bf16.mxu0 0
      %3598 = vmatmul.mubr.bf16.gmra.mrb[0].mxu0 %v3301
      %v3599 = vpop.f32.mrb[0].mxu0
      %v3600 = vadd.f32 0.0, %v3599
      %v3601 = vpop.f32.mrb[0].mxu0
      %v3602 = vpop.f32.mrb[0].mxu0
      %v3603 = vadd.f32 0.0, %v3602
      %v3604 = vpop.f32.mrb[0].mxu0
      %3605 = vmatprep.mubr.bf16.mxu0 0
      %3606 = vmatmul.mubr.bf16.gmra.mrb[0].mxu0 %v3302
      %v3607 = vpop.f32.mrb[0].mxu0
      %v3608 = vadd.f32 0.0, %v3607
      %v3609 = vpop.f32.mrb[0].mxu0
      %v3610 = vpop.f32.mrb[0].mxu0
      %v3611 = vadd.f32 0.0, %v3610
      %v3612 = vpop.f32.mrb[0].mxu0
      %3613 = vmatprep.mubr.bf16.mxu0 0
      %3614 = vmatmul.mubr.bf16.gmra.mrb[0].mxu0 %v3303
      %v3615 = vpop.f32.mrb[0].mxu0
      %v3616 = vadd.f32 0.0, %v3615
      %v3617 = vpop.f32.mrb[0].mxu0
      %v3618 = vpop.f32.mrb[0].mxu0
      %v3619 = vadd.f32 0.0, %v3618
      %v3620 = vpop.f32.mrb[0].mxu0
      %3621 = vmatprep.mubr.bf16.mxu0 0
      %3622 = vmatmul.mubr.bf16.gmra.mrb[0].mxu0 %v3304
      %v3623 = vpop.f32.mrb[0].mxu0
      %v3624 = vadd.f32 0.0, %v3623
      %v3625 = vpop.f32.mrb[0].mxu0
      %v3626 = vpop.f32.mrb[0].mxu0
      %v3627 = vadd.f32 0.0, %v3626
      %v3628 = vpop.f32.mrb[0].mxu0
      %3629 = vmatprep.mubr.bf16.mxu0 0
      %3630 = vmatmul.mubr.bf16.gmra.mrb[0].mxu0 %v3305
      %v3631 = vpop.f32.mrb[0].mxu0
      %v3632 = vadd.f32 0.0, %v3631
      %v3633 = vpop.f32.mrb[0].mxu0
      %v3634 = vpop.f32.mrb[0].mxu0
      %v3635 = vadd.f32 0.0, %v3634
      %v3636 = vpop.f32.mrb[0].mxu0
      %3637 = vmatprep.mubr.bf16.mxu0 0
      %3638 = vmatmul.mubr.bf16.gmra.mrb[0].mxu0 %v3306
      %v3639 = vpop.f32.mrb[0].mxu0
      %v3640 = vadd.f32 0.0, %v3639
      %v3641 = vpop.f32.mrb[0].mxu0
      %v3642 = vpop.f32.mrb[0].mxu0
      %v3643 = vadd.f32 0.0, %v3642
      %v3644 = vpop.f32.mrb[0].mxu0
      %3645 = vmatprep.mubr.bf16.mxu0 0
      %3646 = vmatmul.mubr.bf16.gmra.mrb[0].mxu0 %v3307
      %v3647 = vpop.f32.mrb[0].mxu0
      %v3648 = vadd.f32 0.0, %v3647
      %v3649 = vpop.f32.mrb[0].mxu0
      %v3650 = vpop.f32.mrb[0].mxu0
      %v3651 = vadd.f32 0.0, %v3650
      %v3652 = vpop.f32.mrb[0].mxu0
      %3653 = vmatprep.mubr.bf16.mxu0 0
      %3654 = vmatmul.mubr.bf16.gmra.mrb[0].mxu0 %v3308
      %v3655 = vpop.f32.mrb[0].mxu0
      %v3656 = vadd.f32 0.0, %v3655
      %v3657 = vpop.f32.mrb[0].mxu0
      %v3658 = vpop.f32.mrb[0].mxu0
      %v3659 = vadd.f32 0.0, %v3658
      %v3660 = vpop.f32.mrb[0].mxu0
      %3661 = vdwg.mxu0
      %vm3662 = vcmask 15360
      %3663 = vst.msk [vmem:[%s280] sm:$0xff] %vm3662, %v3408
      %3664 = vst.msk [vmem:[%s280 + $0x8] sm:$0xff] %vm3662, %v3411
      %3665 = vst.msk [vmem:[%s280 + $0x10] sm:$0xff] %vm3662, %v3416
      %3666 = vst.msk [vmem:[%s280 + $0x18] sm:$0xff] %vm3662, %v3419
      %3667 = vst.msk [vmem:[%s280 + $0x20] sm:$0xff] %vm3662, %v3424
      %3668 = vst.msk [vmem:[%s280 + $0x28] sm:$0xff] %vm3662, %v3427
      %3669 = vst.msk [vmem:[%s280 + $0x30] sm:$0xff] %vm3662, %v3432
      %3670 = vst.msk [vmem:[%s280 + $0x38] sm:$0xff] %vm3662, %v3435
      %3671 = vst.msk [vmem:[%s280 + $0x40] sm:$0xff] %vm3662, %v3440
      %3672 = vst.msk [vmem:[%s280 + $0x48] sm:$0xff] %vm3662, %v3443
      %3673 = vst.msk [vmem:[%s280 + $0x50] sm:$0xff] %vm3662, %v3448
      %3674 = vst.msk [vmem:[%s280 + $0x58] sm:$0xff] %vm3662, %v3451
      %3675 = vst.msk [vmem:[%s280 + $0x60] sm:$0xff] %vm3662, %v3456
      %3676 = vst.msk [vmem:[%s280 + $0x68] sm:$0xff] %vm3662, %v3459
      %3677 = vst.msk [vmem:[%s280 + $0x70] sm:$0xff] %vm3662, %v3464
      %3678 = vst.msk [vmem:[%s280 + $0x78] sm:$0xff] %vm3662, %v3467
      %3679 = vst.msk [vmem:[%s280 + $0x80] sm:$0xff] %vm3662, %v3472
      %3680 = vst.msk [vmem:[%s280 + $0x88] sm:$0xff] %vm3662, %v3475
      %3681 = vst.msk [vmem:[%s280 + $0x90] sm:$0xff] %vm3662, %v3480
      %3682 = vst.msk [vmem:[%s280 + $0x98] sm:$0xff] %vm3662, %v3483
      %3683 = vst.msk [vmem:[%s280 + $0xa0] sm:$0xff] %vm3662, %v3488
      %3684 = vst.msk [vmem:[%s280 + $0xa8] sm:$0xff] %vm3662, %v3491
      %3685 = vst.msk [vmem:[%s280 + $0xb0] sm:$0xff] %vm3662, %v3496
      %3686 = vst.msk [vmem:[%s280 + $0xb8] sm:$0xff] %vm3662, %v3499
      %3687 = vst.msk [vmem:[%s280 + $0xc0] sm:$0xff] %vm3662, %v3504
      %3688 = vst.msk [vmem:[%s280 + $0xc8] sm:$0xff] %vm3662, %v3507
      %3689 = vst.msk [vmem:[%s280 + $0xd0] sm:$0xff] %vm3662, %v3512
      %3690 = vst.msk [vmem:[%s280 + $0xd8] sm:$0xff] %vm3662, %v3515
      %3691 = vst.msk [vmem:[%s280 + $0xe0] sm:$0xff] %vm3662, %v3520
      %3692 = vst.msk [vmem:[%s280 + $0xe8] sm:$0xff] %vm3662, %v3523
      %3693 = vst.msk [vmem:[%s280 + $0xf0] sm:$0xff] %vm3662, %v3528
      %3694 = vst.msk [vmem:[%s280 + $0xf8] sm:$0xff] %vm3662, %v3531
      %3695 = vst.msk [vmem:[%s280 + $0x100] sm:$0xff] %vm3662, %v3536
      %3696 = vst.msk [vmem:[%s280 + $0x108] sm:$0xff] %vm3662, %v3539
      %3697 = vst.msk [vmem:[%s280 + $0x110] sm:$0xff] %vm3662, %v3544
      %3698 = vst.msk [vmem:[%s280 + $0x118] sm:$0xff] %vm3662, %v3547
      %3699 = vst.msk [vmem:[%s280 + $0x120] sm:$0xff] %vm3662, %v3552
      %3700 = vst.msk [vmem:[%s280 + $0x128] sm:$0xff] %vm3662, %v3555
      %3701 = vst.msk [vmem:[%s280 + $0x130] sm:$0xff] %vm3662, %v3560
      %3702 = vst.msk [vmem:[%s280 + $0x138] sm:$0xff] %vm3662, %v3563
      %3703 = vst.msk [vmem:[%s280 + $0x140] sm:$0xff] %vm3662, %v3568
      %3704 = vst.msk [vmem:[%s280 + $0x148] sm:$0xff] %vm3662, %v3571
      %3705 = vst.msk [vmem:[%s280 + $0x150] sm:$0xff] %vm3662, %v3576
      %3706 = vst.msk [vmem:[%s280 + $0x158] sm:$0xff] %vm3662, %v3579
      %3707 = vst.msk [vmem:[%s280 + $0x160] sm:$0xff] %vm3662, %v3584
      %3708 = vst.msk [vmem:[%s280 + $0x168] sm:$0xff] %vm3662, %v3587
      %3709 = vst.msk [vmem:[%s280 + $0x170] sm:$0xff] %vm3662, %v3592
      %3710 = vst.msk [vmem:[%s280 + $0x178] sm:$0xff] %vm3662, %v3595
      %3711 = vst.msk [vmem:[%s280 + $0x180] sm:$0xff] %vm3662, %v3600
      %3712 = vst.msk [vmem:[%s280 + $0x188] sm:$0xff] %vm3662, %v3603
      %3713 = vst.msk [vmem:[%s280 + $0x190] sm:$0xff] %vm3662, %v3608
      %3714 = vst.msk [vmem:[%s280 + $0x198] sm:$0xff] %vm3662, %v3611
      %3715 = vst.msk [vmem:[%s280 + $0x1a0] sm:$0xff] %vm3662, %v3616
      %3716 = vst.msk [vmem:[%s280 + $0x1a8] sm:$0xff] %vm3662, %v3619
      %3717 = vst.msk [vmem:[%s280 + $0x1b0] sm:$0xff] %vm3662, %v3624
      %3718 = vst.msk [vmem:[%s280 + $0x1b8] sm:$0xff] %vm3662, %v3627
      %3719 = vst.msk [vmem:[%s280 + $0x1c0] sm:$0xff] %vm3662, %v3632
      %3720 = vst.msk [vmem:[%s280 + $0x1c8] sm:$0xff] %vm3662, %v3635
      %3721 = vst.msk [vmem:[%s280 + $0x1d0] sm:$0xff] %vm3662, %v3640
      %3722 = vst.msk [vmem:[%s280 + $0x1d8] sm:$0xff] %vm3662, %v3643
      %3723 = vst.msk [vmem:[%s280 + $0x1e0] sm:$0xff] %vm3662, %v3648
      %3724 = vst.msk [vmem:[%s280 + $0x1e8] sm:$0xff] %vm3662, %v3651
      %3725 = vst.msk [vmem:[%s280 + $0x1f0] sm:$0xff] %vm3662, %v3656
      %3726 = vst.msk [vmem:[%s280 + $0x1f8] sm:$0xff] %vm3662, %v3659
      %s3727 = smul.u32 64, %s18
      %p3728 = scmp.lt.s32.totalorder %s3727, 127
      %s3729 = scalar_select %p3728, %s3727, 127
      %s3730 = smul.addr %s3729, 8
      %s3731 = scalar_lea.vmem %s7, %s3730
      // Predicated region
      $region49: #{tpu_custom_call.1} parent=47 // pred_check
        %p3732 = pneg %p188
      $region50: #{tpu_custom_call.1} parent=47 // pred_check_branch
        %3734 = sbr.rel (%p3732) target = $region52
      $region51: #{tpu_custom_call.1} parent=47 // pred_region
        %s3735 = smul.u32 64, %s18
      $region52: #{tpu_custom_call.1} parent=47 // pred_fallthru
        _
    $region48: #{tpu_custom_call.1} parent=5 // pred_fallthru
      _
    %p3736 = scmp.le.s32.totalorder 2, %s13
    // Predicated region
    $region53: #{tpu_custom_call.1} parent=5 // pred_check
      %p3737 = pneg %p3736
    $region54: #{tpu_custom_call.1} parent=5 // pred_check_branch
      %3739 = sbr.rel (%p3737) target = $region56
    $region55: #{tpu_custom_call.1} parent=5 // pred_region
      %s3740 = ssub.s32 %s13, 2
      // Predicated region
      $region57: #{tpu_custom_call.1} parent=55 // pred_check
        %p3741 = pneg %p194
      $region58: #{tpu_custom_call.1} parent=55 // pred_check_branch
        %3743 = sbr.rel (%p3741) target = $region60
      $region59: #{tpu_custom_call.1} parent=55 // pred_region
        %s3744 = smul.u32 64, %s19
        %p3745 = scmp.lt.s32.totalorder %s3744, 127
        %s3746 = scalar_select %p3745, %s3744, 127
        %s3747 = smul.addr %s3746, 8
        %s3748 = scalar_lea.vmem %s7, %s3747
      $region60: #{tpu_custom_call.1} parent=55 // pred_fallthru
        _
    $region56: #{tpu_custom_call.1} parent=5 // pred_fallthru
      _
  $region6: #{tpu_custom_call.1} parent=0 // loop_footer
    %s17 = sadd.s32 1, %s13
  $region7: #{tpu_custom_call.1} parent=0 // loop_footer_branch
    %12 = sbr.rel target = $region3
  $region8: #{tpu_custom_call.1} parent=0 // loop_exit
    _

</llo_original>
